<compile_context>
chip_gen: v7x
topology: tpu7x:2x2x1
jax: 0.10.0
libtpu: 0.0.40
codegen_flags: <defaults>
</compile_context>

<pallas_src>
import jax
import jax.numpy as jnp
import numpy as np
from jax.experimental import pallas as pl
from jax.experimental.pallas import tpu as pltpu

# ---- hyperparameters (module defaults; small batch/seq for the demo) ----
VOCAB = 152
EMBED = 32
FILTER_SIZES = (2, 3, 4, 5)
NUM_FILTERS = (128, 128, 128, 128)
HIDDEN = 128
NUM_CLASSES = 2
B = 8            # batch
L = 16           # sequence length

BL = B * L                                   # 128 rows (flattened "NLC")
KMAX = max(FILTER_SIZES)                     # 5 taps (smaller convs zero-padded)
F_TOTAL = int(np.sum(NUM_FILTERS))           # 512
VOCAB_PAD = ((VOCAB + 127) // 128) * 128     # 256 -> lane-tile aligned one-hot
OUT_PAD = 128                                # lane-dense head (>= NUM_CLASSES)
NEG_BIG = -1e30


def core_convnet_kernel(tok_ref, table_ref, wtaps_ref, cb_ref,
                        w1_ref, b1_ref, wo_ref, bo_ref, out_ref):
    """Whole forward pass on one VMEM-resident problem (no grid)."""
    # ---- Stage 1: embedding lookup as one-hot @ table (bf16 MXU, f32 acc). ----
    tok = tok_ref[...]                                                 # (BL, 1) int32
    vocab_iota = jax.lax.broadcasted_iota(jnp.int32, (BL, VOCAB_PAD), 1)
    onehot = (vocab_iota == tok).astype(jnp.bfloat16)                  # exact 0/1
    emb = jnp.dot(onehot, table_ref[...],
                  preferred_element_type=jnp.float32)                  # (BL, EMBED), exact

    # ---- Stage 2: per-tap conv accumulation (roll-based im2col, f32 acc). ----
    acc = jnp.zeros((BL, F_TOTAL), jnp.float32)
    for j in range(KMAX):
        emb_j = emb if j == 0 else pltpu.roll(emb, shift=BL - j, axis=0)
        # emb values are exact bf16 table rows held in f32 -> cast is lossless.
        acc = acc + jnp.dot(emb_j.astype(jnp.bfloat16), wtaps_ref[j],
                            preferred_element_type=jnp.float32)        # (BL, F_TOTAL)

    # ---- Global max pool over time, validity mask built in-kernel. ----
    lane = jax.lax.broadcasted_iota(jnp.int32, (L, F_TOTAL), 1)
    t_idx = jax.lax.broadcasted_iota(jnp.int32, (L, F_TOTAL), 0)
    thresh = jnp.zeros((L, F_TOTAL), jnp.int32)
    f_off = 0
    for k, f in zip(FILTER_SIZES, NUM_FILTERS):
        in_blk = (lane >= f_off) & (lane < f_off + f)
        thresh = jnp.where(in_blk, L - k + 1, thresh)                  # t_out per branch
        f_off += f
    mask = jnp.where(t_idx < thresh, 0.0, NEG_BIG)                     # (L, F_TOTAL) f32
    conv3 = acc.reshape(B, L, F_TOTAL) + mask                          # broadcast add
    pooled = jnp.max(conv3, axis=1)                                    # (B, F_TOTAL)

    # Conv bias (time-constant, commutes with max) + ReLU; f32 elementwise.
    h = jnp.maximum(pooled + cb_ref[...], 0.0)

    # ---- FFNN block: Linear -> ReLU (bf16 MXU operands, f32 accumulate). ----
    # TODO(synk): nn.Dropout is stochastic in train mode; eval-mode (identity) here.
    h1 = jnp.maximum(
        jnp.dot(h.astype(jnp.bfloat16), w1_ref[...],
                preferred_element_type=jnp.float32) + b1_ref[...], 0.0)

    # ---- Lane-dense output head (kept f32; single-MXU-pass latency op). ----
    out_ref[...] = (jnp.dot(h1, wo_ref[...], preferred_element_type=jnp.float32)
                    + bo_ref[...])                                     # (B, OUT_PAD)


def pack_params(p):
    """One-time host-side weight preprocessing (padding + bf16 cast of MXU weights)."""
    # Embedding table rows padded to VOCAB_PAD (extra rows zero; padding_idx=0 row zero).
    table = jnp.zeros((VOCAB_PAD, EMBED), jnp.float32).at[:VOCAB].set(p["embedding"])

    # Zero-pad every conv to KMAX taps and concat along the filter axis.
    # Invariant: wtaps[j, :, branch-k block] == 0 for j >= k (see kernel comment).
    wtaps = jnp.zeros((KMAX, EMBED, F_TOTAL), jnp.float32)
    cb = jnp.zeros((1, F_TOTAL), jnp.float32)
    f_off = 0
    for i, k in enumerate(FILTER_SIZES):
        f = NUM_FILTERS[i]
        wtaps = wtaps.at[:k, :, f_off:f_off + f].set(p[f"conv{k}_w"])
        cb = cb.at[:, f_off:f_off + f].set(p[f"conv{k}_b"])
        f_off += f

    # Lane-dense head: zero-pad wo/bo to 128 output lanes (kept f32).
    wo_pad = jnp.zeros((HIDDEN, OUT_PAD), jnp.float32).at[:, :NUM_CLASSES].set(p["wo"])
    bo_pad = jnp.zeros((1, OUT_PAD), jnp.float32).at[:, :NUM_CLASSES].set(p["bo"])

    return dict(table=table.astype(jnp.bfloat16),
                wtaps=wtaps.astype(jnp.bfloat16),
                cb=cb,
                w1=p["w1"].astype(jnp.bfloat16),
                b1=p["b1"],
                wo=wo_pad, bo=bo_pad)


def core_convnet_forward(tokens, packed):
    tok2d = tokens.reshape(BL, 1).astype(jnp.int32)
    ins = [tok2d, packed["table"], packed["wtaps"], packed["cb"],
           packed["w1"], packed["b1"], packed["wo"], packed["bo"]]
    in_specs = [pl.BlockSpec(memory_space=pltpu.MemorySpace.VMEM) for _ in ins]
    out = pl.pallas_call(
        core_convnet_kernel,
        out_shape=jax.ShapeDtypeStruct((B, OUT_PAD), jnp.float32),
        in_specs=in_specs,
        out_specs=pl.BlockSpec(memory_space=pltpu.MemorySpace.VMEM),
    )(*ins)
    return out[:, :NUM_CLASSES]


def init_params(key):
    keys = jax.random.split(key, 16)
    p = {}
    emb = 0.1 * jax.random.normal(keys[0], (VOCAB, EMBED), jnp.float32)
    p["embedding"] = emb.at[0].set(0.0)                    # padding_idx=0 row is zeros
    for i, k in enumerate(FILTER_SIZES):
        f = NUM_FILTERS[i]
        p[f"conv{k}_w"] = 0.1 * jax.random.normal(keys[1 + i], (k, EMBED, f), jnp.float32)
        p[f"conv{k}_b"] = 0.1 * jax.random.normal(keys[5 + i], (1, f), jnp.float32)
    p["w1"] = 0.05 * jax.random.normal(keys[9], (F_TOTAL, HIDDEN), jnp.float32)
    p["b1"] = 0.05 * jax.random.normal(keys[10], (1, HIDDEN), jnp.float32)
    p["wo"] = 0.05 * jax.random.normal(keys[11], (HIDDEN, NUM_CLASSES), jnp.float32)
    p["bo"] = 0.05 * jax.random.normal(keys[12], (1, NUM_CLASSES), jnp.float32)
    return p


def reference_forward(tokens, params):
    """Pure-JAX f32 reference mirroring the PyTorch forward (eval mode)."""
    x = params["embedding"][tokens]                        # (B, L, E)
    feats = []
    for i, k in enumerate(FILTER_SIZES):
        w = params[f"conv{k}_w"]                           # (k, E, F)
        b = params[f"conv{k}_b"]                           # (1, F)
        t_out = L - k + 1
        acc = sum(jnp.einsum("bte,ef->btf", x[:, j:j + t_out, :], w[j])
                  for j in range(k)) + b[None, :, :]
        feats.append(jnp.maximum(jnp.max(acc, axis=1), 0.0))
    h = jnp.concatenate(feats, axis=1)
    h = jnp.maximum(h @ params["w1"] + params["b1"], 0.0)
    return h @ params["wo"] + params["bo"]


if __name__ == "__main__":
    key = jax.random.PRNGKey(0)
    pkey, tkey = jax.random.split(key)
    params = init_params(pkey)
    packed = pack_params(params)                           # one-time weight preprocessing
    tokens = jax.random.randint(tkey, (B, L), 0, VOCAB, dtype=jnp.int32)

    out = core_convnet_forward(tokens, packed)
    out = jax.block_until_ready(out)

    ref = reference_forward(tokens, params)
    # Kernel uses bf16 MXU weights (wtaps / w1) -> comparison vs f32 reference is
    # approximate; errors are ~1e-3, well inside the tolerance below.
    np.testing.assert_allclose(np.asarray(out), np.asarray(ref), rtol=1e-2, atol=1e-2)
    print("KERNEL_OK")
</pallas_src>

<mosaic_0001>
module attributes {stable_mosaic.version = 11 : i64} {
  func.func @core_convnet_kernel(%arg0: memref<128x1xi32, #tpu.memory_space<vmem>>, %arg1: memref<256x32xbf16, #tpu.memory_space<vmem>>, %arg2: memref<5x32x512xbf16, #tpu.memory_space<vmem>>, %arg3: memref<1x512xf32, #tpu.memory_space<vmem>>, %arg4: memref<512x128xbf16, #tpu.memory_space<vmem>>, %arg5: memref<1x128xf32, #tpu.memory_space<vmem>>, %arg6: memref<128x128xf32, #tpu.memory_space<vmem>>, %arg7: memref<1x128xf32, #tpu.memory_space<vmem>>, %arg8: memref<8x128xf32, #tpu.memory_space<vmem>>) attributes {dimension_semantics = [], scalar_prefetch = 0 : i64, scratch_operands = 0 : i64, tpu.core_type = #tpu.core_type<tc>} {
    %c0 = arith.constant 0 : index
    %c0_0 = arith.constant 0 : index
    %0 = vector.load %arg0[%c0, %c0_0] : memref<128x1xi32, #tpu.memory_space<vmem>>, vector<128x1xi32>
    %1 = tpu.iota {dimensions = array<i32: 1>} : vector<128x256xi32>
    %2 = vector.broadcast %0 : vector<128x1xi32> to vector<128x256xi32>
    %3 = arith.cmpi eq, %1, %2 : vector<128x256xi32>
    %4 = arith.extui %3 : vector<128x256xi1> to vector<128x256xi32>
    %5 = arith.sitofp %4 : vector<128x256xi32> to vector<128x256xf32>
    %6 = arith.truncf %5 : vector<128x256xf32> to vector<128x256xbf16>
    %c0_1 = arith.constant 0 : index
    %c0_2 = arith.constant 0 : index
    %7 = vector.load %arg1[%c0_1, %c0_2] : memref<256x32xbf16, #tpu.memory_space<vmem>>, vector<256x32xbf16>
    %cst = arith.constant dense<0.000000e+00> : vector<128x32xf32>
    %8 = tpu.matmul %6, %7, %cst {dimension_numbers = #tpu.dot_dimension_numbers<[1], [0], [0], [1], [0, 0, 1, 1], [], []>} : vector<128x256xbf16>, vector<256x32xbf16>, vector<128x32xf32> -> vector<128x32xf32>
    %cst_3 = arith.constant 0.000000e+00 : f32
    %9 = vector.broadcast %cst_3 : f32 to vector<128x512xf32>
    %10 = arith.truncf %8 : vector<128x32xf32> to vector<128x32xbf16>
    %c0_4 = arith.constant 0 : index
    %c0_5 = arith.constant 0 : index
    %c0_6 = arith.constant 0 : index
    %11 = vector.load %arg2[%c0_4, %c0_5, %c0_6] : memref<5x32x512xbf16, #tpu.memory_space<vmem>>, vector<1x32x512xbf16>
    %12 = vector.shape_cast %11 : vector<1x32x512xbf16> to vector<32x512xbf16>
    %cst_7 = arith.constant dense<0.000000e+00> : vector<128x512xf32>
    %13 = tpu.matmul %10, %12, %cst_7 {dimension_numbers = #tpu.dot_dimension_numbers<[1], [0], [0], [1], [0, 0, 1, 1], [], []>} : vector<128x32xbf16>, vector<32x512xbf16>, vector<128x512xf32> -> vector<128x512xf32>
    %14 = arith.addf %9, %13 : vector<128x512xf32>
    %c127_i32 = arith.constant 127 : i32
    %15 = tpu.dynamic_rotate %8 by %c127_i32 dim 0 : vector<128x32xf32>, i32 -> vector<128x32xf32>
    %16 = arith.truncf %15 : vector<128x32xf32> to vector<128x32xbf16>
    %c1 = arith.constant 1 : index
    %c0_8 = arith.constant 0 : index
    %c0_9 = arith.constant 0 : index
    %17 = vector.load %arg2[%c1, %c0_8, %c0_9] : memref<5x32x512xbf16, #tpu.memory_space<vmem>>, vector<1x32x512xbf16>
    %18 = vector.shape_cast %17 : vector<1x32x512xbf16> to vector<32x512xbf16>
    %cst_10 = arith.constant dense<0.000000e+00> : vector<128x512xf32>
    %19 = tpu.matmul %16, %18, %cst_10 {dimension_numbers = #tpu.dot_dimension_numbers<[1], [0], [0], [1], [0, 0, 1, 1], [], []>} : vector<128x32xbf16>, vector<32x512xbf16>, vector<128x512xf32> -> vector<128x512xf32>
    %20 = arith.addf %14, %19 : vector<128x512xf32>
    %c126_i32 = arith.constant 126 : i32
    %21 = tpu.dynamic_rotate %8 by %c126_i32 dim 0 : vector<128x32xf32>, i32 -> vector<128x32xf32>
    %22 = arith.truncf %21 : vector<128x32xf32> to vector<128x32xbf16>
    %c2 = arith.constant 2 : index
    %c0_11 = arith.constant 0 : index
    %c0_12 = arith.constant 0 : index
    %23 = vector.load %arg2[%c2, %c0_11, %c0_12] : memref<5x32x512xbf16, #tpu.memory_space<vmem>>, vector<1x32x512xbf16>
    %24 = vector.shape_cast %23 : vector<1x32x512xbf16> to vector<32x512xbf16>
    %cst_13 = arith.constant dense<0.000000e+00> : vector<128x512xf32>
    %25 = tpu.matmul %22, %24, %cst_13 {dimension_numbers = #tpu.dot_dimension_numbers<[1], [0], [0], [1], [0, 0, 1, 1], [], []>} : vector<128x32xbf16>, vector<32x512xbf16>, vector<128x512xf32> -> vector<128x512xf32>
    %26 = arith.addf %20, %25 : vector<128x512xf32>
    %c125_i32 = arith.constant 125 : i32
    %27 = tpu.dynamic_rotate %8 by %c125_i32 dim 0 : vector<128x32xf32>, i32 -> vector<128x32xf32>
    %28 = arith.truncf %27 : vector<128x32xf32> to vector<128x32xbf16>
    %c3 = arith.constant 3 : index
    %c0_14 = arith.constant 0 : index
    %c0_15 = arith.constant 0 : index
    %29 = vector.load %arg2[%c3, %c0_14, %c0_15] : memref<5x32x512xbf16, #tpu.memory_space<vmem>>, vector<1x32x512xbf16>
    %30 = vector.shape_cast %29 : vector<1x32x512xbf16> to vector<32x512xbf16>
    %cst_16 = arith.constant dense<0.000000e+00> : vector<128x512xf32>
    %31 = tpu.matmul %28, %30, %cst_16 {dimension_numbers = #tpu.dot_dimension_numbers<[1], [0], [0], [1], [0, 0, 1, 1], [], []>} : vector<128x32xbf16>, vector<32x512xbf16>, vector<128x512xf32> -> vector<128x512xf32>
    %32 = arith.addf %26, %31 : vector<128x512xf32>
    %c124_i32 = arith.constant 124 : i32
    %33 = tpu.dynamic_rotate %8 by %c124_i32 dim 0 : vector<128x32xf32>, i32 -> vector<128x32xf32>
    %34 = arith.truncf %33 : vector<128x32xf32> to vector<128x32xbf16>
    %c4 = arith.constant 4 : index
    %c0_17 = arith.constant 0 : index
    %c0_18 = arith.constant 0 : index
    %35 = vector.load %arg2[%c4, %c0_17, %c0_18] : memref<5x32x512xbf16, #tpu.memory_space<vmem>>, vector<1x32x512xbf16>
    %36 = vector.shape_cast %35 : vector<1x32x512xbf16> to vector<32x512xbf16>
    %cst_19 = arith.constant dense<0.000000e+00> : vector<128x512xf32>
    %37 = tpu.matmul %34, %36, %cst_19 {dimension_numbers = #tpu.dot_dimension_numbers<[1], [0], [0], [1], [0, 0, 1, 1], [], []>} : vector<128x32xbf16>, vector<32x512xbf16>, vector<128x512xf32> -> vector<128x512xf32>
    %38 = arith.addf %32, %37 : vector<128x512xf32>
    %39 = tpu.iota {dimensions = array<i32: 1>} : vector<16x512xi32>
    %40 = tpu.iota {dimensions = array<i32: 0>} : vector<16x512xi32>
    %c0_i32 = arith.constant 0 : i32
    %41 = vector.broadcast %c0_i32 : i32 to vector<16x512xi32>
    %c0_i32_20 = arith.constant 0 : i32
    %42 = vector.broadcast %c0_i32_20 : i32 to vector<16x512xi32>
    %43 = arith.cmpi sge, %39, %42 : vector<16x512xi32>
    %c128_i32 = arith.constant 128 : i32
    %44 = vector.broadcast %c128_i32 : i32 to vector<16x512xi32>
    %45 = arith.cmpi slt, %39, %44 : vector<16x512xi32>
    %46 = arith.andi %43, %45 : vector<16x512xi1>
    %c15_i32 = arith.constant 15 : i32
    %47 = vector.broadcast %c15_i32 : i32 to vector<16x512xi32>
    %48 = arith.select %46, %47, %41 : vector<16x512xi1>, vector<16x512xi32>
    %c128_i32_21 = arith.constant 128 : i32
    %49 = vector.broadcast %c128_i32_21 : i32 to vector<16x512xi32>
    %50 = arith.cmpi sge, %39, %49 : vector<16x512xi32>
    %c256_i32 = arith.constant 256 : i32
    %51 = vector.broadcast %c256_i32 : i32 to vector<16x512xi32>
    %52 = arith.cmpi slt, %39, %51 : vector<16x512xi32>
    %53 = arith.andi %50, %52 : vector<16x512xi1>
    %c14_i32 = arith.constant 14 : i32
    %54 = vector.broadcast %c14_i32 : i32 to vector<16x512xi32>
    %55 = arith.select %53, %54, %48 : vector<16x512xi1>, vector<16x512xi32>
    %c256_i32_22 = arith.constant 256 : i32
    %56 = vector.broadcast %c256_i32_22 : i32 to vector<16x512xi32>
    %57 = arith.cmpi sge, %39, %56 : vector<16x512xi32>
    %c384_i32 = arith.constant 384 : i32
    %58 = vector.broadcast %c384_i32 : i32 to vector<16x512xi32>
    %59 = arith.cmpi slt, %39, %58 : vector<16x512xi32>
    %60 = arith.andi %57, %59 : vector<16x512xi1>
    %c13_i32 = arith.constant 13 : i32
    %61 = vector.broadcast %c13_i32 : i32 to vector<16x512xi32>
    %62 = arith.select %60, %61, %55 : vector<16x512xi1>, vector<16x512xi32>
    %c384_i32_23 = arith.constant 384 : i32
    %63 = vector.broadcast %c384_i32_23 : i32 to vector<16x512xi32>
    %64 = arith.cmpi sge, %39, %63 : vector<16x512xi32>
    %c512_i32 = arith.constant 512 : i32
    %65 = vector.broadcast %c512_i32 : i32 to vector<16x512xi32>
    %66 = arith.cmpi slt, %39, %65 : vector<16x512xi32>
    %67 = arith.andi %64, %66 : vector<16x512xi1>
    %c12_i32 = arith.constant 12 : i32
    %68 = vector.broadcast %c12_i32 : i32 to vector<16x512xi32>
    %69 = arith.select %67, %68, %62 : vector<16x512xi1>, vector<16x512xi32>
    %70 = arith.cmpi slt, %40, %69 : vector<16x512xi32>
    %cst_24 = arith.constant 0.000000e+00 : f32
    %cst_25 = arith.constant -1.000000e+30 : f32
    %71 = vector.broadcast %cst_24 : f32 to vector<16x512xf32>
    %72 = vector.broadcast %cst_25 : f32 to vector<16x512xf32>
    %73 = arith.select %70, %71, %72 : vector<16x512xi1>, vector<16x512xf32>
    %74 = vector.shape_cast %38 : vector<128x512xf32> to vector<8x16x512xf32>
    %75 = vector.shape_cast %73 : vector<16x512xf32> to vector<1x16x512xf32>
    %76 = vector.broadcast %75 : vector<1x16x512xf32> to vector<8x16x512xf32>
    %77 = arith.addf %74, %76 : vector<8x16x512xf32>
    %cst_26 = arith.constant dense<0xFF800000> : vector<8x512xf32>
    %78 = vector.multi_reduction <maximumf>, %77, %cst_26 [1] : vector<8x16x512xf32> to vector<8x512xf32>
    %c0_27 = arith.constant 0 : index
    %c0_28 = arith.constant 0 : index
    %79 = vector.load %arg3[%c0_27, %c0_28] : memref<1x512xf32, #tpu.memory_space<vmem>>, vector<1x512xf32>
    %80 = vector.broadcast %79 : vector<1x512xf32> to vector<8x512xf32>
    %81 = arith.addf %78, %80 : vector<8x512xf32>
    %cst_29 = arith.constant 0.000000e+00 : f32
    %82 = vector.broadcast %cst_29 : f32 to vector<8x512xf32>
    %83 = arith.maximumf %81, %82 : vector<8x512xf32>
    %84 = arith.truncf %83 : vector<8x512xf32> to vector<8x512xbf16>
    %c0_30 = arith.constant 0 : index
    %c0_31 = arith.constant 0 : index
    %85 = vector.load %arg4[%c0_30, %c0_31] : memref<512x128xbf16, #tpu.memory_space<vmem>>, vector<512x128xbf16>
    %cst_32 = arith.constant dense<0.000000e+00> : vector<8x128xf32>
    %86 = tpu.matmul %84, %85, %cst_32 {dimension_numbers = #tpu.dot_dimension_numbers<[1], [0], [0], [1], [0, 0, 1, 1], [], []>} : vector<8x512xbf16>, vector<512x128xbf16>, vector<8x128xf32> -> vector<8x128xf32>
    %c0_33 = arith.constant 0 : index
    %c0_34 = arith.constant 0 : index
    %87 = vector.load %arg5[%c0_33, %c0_34] : memref<1x128xf32, #tpu.memory_space<vmem>>, vector<1x128xf32>
    %88 = vector.broadcast %87 : vector<1x128xf32> to vector<8x128xf32>
    %89 = arith.addf %86, %88 : vector<8x128xf32>
    %cst_35 = arith.constant 0.000000e+00 : f32
    %90 = vector.broadcast %cst_35 : f32 to vector<8x128xf32>
    %91 = arith.maximumf %89, %90 : vector<8x128xf32>
    %c0_36 = arith.constant 0 : index
    %c0_37 = arith.constant 0 : index
    %92 = vector.load %arg6[%c0_36, %c0_37] : memref<128x128xf32, #tpu.memory_space<vmem>>, vector<128x128xf32>
    %cst_38 = arith.constant dense<0.000000e+00> : vector<8x128xf32>
    %93 = tpu.matmul %91, %92, %cst_38 {dimension_numbers = #tpu.dot_dimension_numbers<[1], [0], [0], [1], [0, 0, 1, 1], [], []>} : vector<8x128xf32>, vector<128x128xf32>, vector<8x128xf32> -> vector<8x128xf32>
    %c0_39 = arith.constant 0 : index
    %c0_40 = arith.constant 0 : index
    %94 = vector.load %arg7[%c0_39, %c0_40] : memref<1x128xf32, #tpu.memory_space<vmem>>, vector<1x128xf32>
    %95 = vector.broadcast %94 : vector<1x128xf32> to vector<8x128xf32>
    %96 = arith.addf %93, %95 : vector<8x128xf32>
    %c0_41 = arith.constant 0 : index
    %c0_42 = arith.constant 0 : index
    %97 = vector.load %arg8[%c0_41, %c0_42] : memref<8x128xf32, #tpu.memory_space<vmem>>, vector<8x128xf32>
    tpu.vector_store %arg8[%c0_41, %c0_42], %96 {strides = array<i32>} : memref<8x128xf32, #tpu.memory_space<vmem>>, vector<8x128xf32>,
    return
  }
}

</mosaic_0001>

<llo_original>
// kernel: tpu_custom_call.1
$region0: #{tpu_custom_call.1}
  #allocation0 [shape = 'u32[]', space=smem, size = 0x4, offset = 0x4, fixed_abs, tag = 'smem constant byte address 0x4 - core index']
  #allocation1 [shape = 'u32[144,128]{1,0:T(1,128)}', space=vmem, size = 0x12000, scoped, tag = 'internal scratch']
  %s0 = inlined_call_operand.vmem [shape: s32[128,1], index: 0, kind: input, shape index: {}]
  %s1 = inlined_call_operand.vmem [shape: bf16[256,32], index: 1, kind: input, shape index: {}]
  %s2 = inlined_call_operand.hbm [shape: bf16[5,32,512], index: 2, kind: input, shape index: {}]
  %s3 = inlined_call_operand.vmem [shape: f32[1,512], index: 3, kind: input, shape index: {}]
  %s4 = inlined_call_operand.vmem [shape: bf16[512,128], index: 4, kind: input, shape index: {}]
  %s5 = inlined_call_operand.vmem [shape: f32[1,128], index: 5, kind: input, shape index: {}]
  %s6 = inlined_call_operand.hbm [shape: f32[128,128], index: 6, kind: input, shape index: {}]
  %s7 = inlined_call_operand.vmem [shape: f32[1,128], index: 7, kind: input, shape index: {}]
  %s8 = inlined_call_operand.hbm [shape: f32[8,128], index: 8, kind: output, shape index: {}]
  %s9 = sld [smem:[#allocation0]]
  $region50: #{tpu_custom_call.1} parent=0
    _
  %s11 = ssub.s32 1, %s9
  %s12 = scalar_select 0, %s11, %s9
  $region1: #{tpu_custom_call.1} parent=0
    #allocation2 [shape = 'u8[163840]{0}', space=vmem, size = 0x28000, scoped, tag = 'input window, operand 2, single buffered']
    #allocation3 [shape = 's32[1]{0}', space=sflag, size = 0x4, scoped, tag = 'scoped memory for tpu_custom_call.1']
    #allocation4 [shape = 's32[1]{0}', space=sflag, size = 0x4, scoped, tag = 'scoped memory for tpu_custom_call.1']
    #allocation5 [shape = 'u8[65536]{0}', space=vmem, size = 0x10000, scoped, tag = 'input window, operand 6, single buffered']
    #allocation6 [shape = 's32[1]{0}', space=sflag, size = 0x4, scoped, tag = 'scoped memory for tpu_custom_call.1']
    #allocation7 [shape = 'u8[4096]{0}', space=vmem, size = 0x1000, scoped, tag = 'output window, operand 0, single buffered']
    %13 = vsyncpa [#allocation3], 0
    %14 = vsyncpa [#allocation6], 0
    %15 = vsyncpa [#allocation4], 0
    // Predicated region
    $region2: #{tpu_custom_call.1} parent=1 // pred_check
      _
    $region3: #{tpu_custom_call.1} parent=1 // pred_check_branch
      %17 = sbr.rel (0) target = $region5
    $region4: #{tpu_custom_call.1} parent=1 // pred_region
      _
    $region5: #{tpu_custom_call.1} parent=1 // pred_fallthru
      _
    // Predicated region
    $region6: #{tpu_custom_call.1} parent=1 // pred_check
      _
    $region7: #{tpu_custom_call.1} parent=1 // pred_check_branch
      %19 = sbr.rel (0) target = $region9
    $region8: #{tpu_custom_call.1} parent=1 // pred_region
      _
    $region9: #{tpu_custom_call.1} parent=1 // pred_fallthru
      _
    // Predicated region
    $region10: #{tpu_custom_call.1} parent=1 // pred_check
      _
    $region11: #{tpu_custom_call.1} parent=1 // pred_check_branch
      %21 = sbr.rel (0) target = $region13
    $region12: #{tpu_custom_call.1} parent=1 // pred_region
      %s23 = ssub.s32 5120, 5120
      %24 = vsyncadd [#allocation3], %s23
      %s25 = sshll.u32 [#allocation2], 4
      %s26 = int_to_ptr.vmem [resolvable:$true] %s25
      %31 = dma.hbm_to_vmem [thread:$0]  %s2, 5120, %s26, [#allocation3], 256, 256, 16
    $region13: #{tpu_custom_call.1} parent=1 // pred_fallthru
      _
    // Predicated region
    $region14: #{tpu_custom_call.1} parent=1 // pred_check
      _
    $region15: #{tpu_custom_call.1} parent=1 // pred_check_branch
      %33 = sbr.rel (0) target = $region17
    $region16: #{tpu_custom_call.1} parent=1 // pred_region
      _
    $region17: #{tpu_custom_call.1} parent=1 // pred_fallthru
      _
    // Predicated region
    $region18: #{tpu_custom_call.1} parent=1 // pred_check
      _
    $region19: #{tpu_custom_call.1} parent=1 // pred_check_branch
      %35 = sbr.rel (0) target = $region21
    $region20: #{tpu_custom_call.1} parent=1 // pred_region
      _
    $region21: #{tpu_custom_call.1} parent=1 // pred_fallthru
      _
    // Predicated region
    $region22: #{tpu_custom_call.1} parent=1 // pred_check
      _
    $region23: #{tpu_custom_call.1} parent=1 // pred_check_branch
      %37 = sbr.rel (0) target = $region25
    $region24: #{tpu_custom_call.1} parent=1 // pred_region
      _
    $region25: #{tpu_custom_call.1} parent=1 // pred_fallthru
      _
    // Predicated region
    $region26: #{tpu_custom_call.1} parent=1 // pred_check
      _
    $region27: #{tpu_custom_call.1} parent=1 // pred_check_branch
      %39 = sbr.rel (0) target = $region29
    $region28: #{tpu_custom_call.1} parent=1 // pred_region
      %s41 = ssub.s32 2048, 2048
      %42 = vsyncadd [#allocation6], %s41
      %s43 = sshll.u32 [#allocation5], 4
      %s44 = int_to_ptr.vmem [resolvable:$true] %s43
      %49 = dma.hbm_to_vmem [thread:$0]  %s6, 2048, %s44, [#allocation6], 128, 128, 8
    $region29: #{tpu_custom_call.1} parent=1 // pred_fallthru
      _
    // Predicated region
    $region30: #{tpu_custom_call.1} parent=1 // pred_check
      _
    $region31: #{tpu_custom_call.1} parent=1 // pred_check_branch
      %51 = sbr.rel (0) target = $region33
    $region32: #{tpu_custom_call.1} parent=1 // pred_region
      _
    $region33: #{tpu_custom_call.1} parent=1 // pred_fallthru
      _
    // Predicated region
    $region34: #{tpu_custom_call.1} parent=1 // pred_check
      _
    $region35: #{tpu_custom_call.1} parent=1 // pred_check_branch
      %53 = sbr.rel (0) target = $region37
    $region36: #{tpu_custom_call.1} parent=1 // pred_region
      %54 = dma.done [#allocation3], 5120
    $region37: #{tpu_custom_call.1} parent=1 // pred_fallthru
      _
    // Predicated region
    $region38: #{tpu_custom_call.1} parent=1 // pred_check
      _
    $region39: #{tpu_custom_call.1} parent=1 // pred_check_branch
      %56 = sbr.rel (0) target = $region41
    $region40: #{tpu_custom_call.1} parent=1 // pred_region
      %57 = dma.done [#allocation6], 2048
    $region41: #{tpu_custom_call.1} parent=1 // pred_fallthru
      _
    %v59 = vld [vmem:[%s0] sm:$0xff]
    %v60 = vld [vmem:[%s0 + $0x8] sm:$0xff]
    %v61 = vld [vmem:[%s0 + $0x10] sm:$0xff]
    %v62 = vld [vmem:[%s0 + $0x18] sm:$0xff]
    %v63 = vld [vmem:[%s0 + $0x20] sm:$0xff]
    %v64 = vld [vmem:[%s0 + $0x28] sm:$0xff]
    %v65 = vld [vmem:[%s0 + $0x30] sm:$0xff]
    %v66 = vld [vmem:[%s0 + $0x38] sm:$0xff]
    %v67 = vld [vmem:[%s0 + $0x40] sm:$0xff]
    %v68 = vld [vmem:[%s0 + $0x48] sm:$0xff]
    %v69 = vld [vmem:[%s0 + $0x50] sm:$0xff]
    %v70 = vld [vmem:[%s0 + $0x58] sm:$0xff]
    %v71 = vld [vmem:[%s0 + $0x60] sm:$0xff]
    %v72 = vld [vmem:[%s0 + $0x68] sm:$0xff]
    %v73 = vld [vmem:[%s0 + $0x70] sm:$0xff]
    %v74 = vld [vmem:[%s0 + $0x78] sm:$0xff]
    %v75 = vlaneseq
    %v76 = vand.u32 %v75, 127
    %v77 = vadd.s32 %v76, 128
    %78 = vset.pattern.permute.xlu0 0
    %79 = vperm.xlu0 %78, %v59
    %v80 = vpop.permute.xlu0 %79
    %81 = vset.pattern.permute.xlu0 0
    %82 = vperm.xlu0 %81, %v60
    %v83 = vpop.permute.xlu0 %82
    %84 = vset.pattern.permute.xlu0 0
    %85 = vperm.xlu0 %84, %v61
    %v86 = vpop.permute.xlu0 %85
    %87 = vset.pattern.permute.xlu0 0
    %88 = vperm.xlu0 %87, %v62
    %v89 = vpop.permute.xlu0 %88
    %90 = vset.pattern.permute.xlu0 0
    %91 = vperm.xlu0 %90, %v63
    %v92 = vpop.permute.xlu0 %91
    %93 = vset.pattern.permute.xlu0 0
    %94 = vperm.xlu0 %93, %v64
    %v95 = vpop.permute.xlu0 %94
    %96 = vset.pattern.permute.xlu0 0
    %97 = vperm.xlu0 %96, %v65
    %v98 = vpop.permute.xlu0 %97
    %99 = vset.pattern.permute.xlu0 0
    %100 = vperm.xlu0 %99, %v66
    %v101 = vpop.permute.xlu0 %100
    %102 = vset.pattern.permute.xlu0 0
    %103 = vperm.xlu0 %102, %v67
    %v104 = vpop.permute.xlu0 %103
    %105 = vset.pattern.permute.xlu0 0
    %106 = vperm.xlu0 %105, %v68
    %v107 = vpop.permute.xlu0 %106
    %108 = vset.pattern.permute.xlu0 0
    %109 = vperm.xlu0 %108, %v69
    %v110 = vpop.permute.xlu0 %109
    %111 = vset.pattern.permute.xlu0 0
    %112 = vperm.xlu0 %111, %v70
    %v113 = vpop.permute.xlu0 %112
    %114 = vset.pattern.permute.xlu0 0
    %115 = vperm.xlu0 %114, %v71
    %v116 = vpop.permute.xlu0 %115
    %117 = vset.pattern.permute.xlu0 0
    %118 = vperm.xlu0 %117, %v72
    %v119 = vpop.permute.xlu0 %118
    %120 = vset.pattern.permute.xlu0 0
    %121 = vperm.xlu0 %120, %v73
    %v122 = vpop.permute.xlu0 %121
    %123 = vset.pattern.permute.xlu0 0
    %124 = vperm.xlu0 %123, %v74
    %v125 = vpop.permute.xlu0 %124
    %vm126 = vcmp.eq.s32.totalorder %v76, %v80
    %vm127 = vcmp.eq.s32.totalorder %v77, %v80
    %vm128 = vcmp.eq.s32.totalorder %v76, %v83
    %vm129 = vcmp.eq.s32.totalorder %v77, %v83
    %vm130 = vcmp.eq.s32.totalorder %v76, %v86
    %vm131 = vcmp.eq.s32.totalorder %v77, %v86
    %vm132 = vcmp.eq.s32.totalorder %v76, %v89
    %vm133 = vcmp.eq.s32.totalorder %v77, %v89
    %vm134 = vcmp.eq.s32.totalorder %v76, %v92
    %vm135 = vcmp.eq.s32.totalorder %v77, %v92
    %vm136 = vcmp.eq.s32.totalorder %v76, %v95
    %vm137 = vcmp.eq.s32.totalorder %v77, %v95
    %vm138 = vcmp.eq.s32.totalorder %v76, %v98
    %vm139 = vcmp.eq.s32.totalorder %v77, %v98
    %vm140 = vcmp.eq.s32.totalorder %v76, %v101
    %vm141 = vcmp.eq.s32.totalorder %v77, %v101
    %vm142 = vcmp.eq.s32.totalorder %v76, %v104
    %vm143 = vcmp.eq.s32.totalorder %v77, %v104
    %vm144 = vcmp.eq.s32.totalorder %v76, %v107
    %vm145 = vcmp.eq.s32.totalorder %v77, %v107
    %vm146 = vcmp.eq.s32.totalorder %v76, %v110
    %vm147 = vcmp.eq.s32.totalorder %v77, %v110
    %vm148 = vcmp.eq.s32.totalorder %v76, %v113
    %vm149 = vcmp.eq.s32.totalorder %v77, %v113
    %vm150 = vcmp.eq.s32.totalorder %v76, %v116
    %vm151 = vcmp.eq.s32.totalorder %v77, %v116
    %vm152 = vcmp.eq.s32.totalorder %v76, %v119
    %vm153 = vcmp.eq.s32.totalorder %v77, %v119
    %vm154 = vcmp.eq.s32.totalorder %v76, %v122
    %vm155 = vcmp.eq.s32.totalorder %v77, %v122
    %vm156 = vcmp.eq.s32.totalorder %v76, %v125
    %vm157 = vcmp.eq.s32.totalorder %v77, %v125
    %v158 = vsel %vm126, 1, 0
    %v159 = vsel %vm127, 1, 0
    %v160 = vsel %vm128, 1, 0
    %v161 = vsel %vm129, 1, 0
    %v162 = vsel %vm130, 1, 0
    %v163 = vsel %vm131, 1, 0
    %v164 = vsel %vm132, 1, 0
    %v165 = vsel %vm133, 1, 0
    %v166 = vsel %vm134, 1, 0
    %v167 = vsel %vm135, 1, 0
    %v168 = vsel %vm136, 1, 0
    %v169 = vsel %vm137, 1, 0
    %v170 = vsel %vm138, 1, 0
    %v171 = vsel %vm139, 1, 0
    %v172 = vsel %vm140, 1, 0
    %v173 = vsel %vm141, 1, 0
    %v174 = vsel %vm142, 1, 0
    %v175 = vsel %vm143, 1, 0
    %v176 = vsel %vm144, 1, 0
    %v177 = vsel %vm145, 1, 0
    %v178 = vsel %vm146, 1, 0
    %v179 = vsel %vm147, 1, 0
    %v180 = vsel %vm148, 1, 0
    %v181 = vsel %vm149, 1, 0
    %v182 = vsel %vm150, 1, 0
    %v183 = vsel %vm151, 1, 0
    %v184 = vsel %vm152, 1, 0
    %v185 = vsel %vm153, 1, 0
    %v186 = vsel %vm154, 1, 0
    %v187 = vsel %vm155, 1, 0
    %v188 = vsel %vm156, 1, 0
    %v189 = vsel %vm157, 1, 0
    %v190 = vcvt.s32.f32 %v158
    %v191 = vcvt.s32.f32 %v159
    %v192 = vcvt.s32.f32 %v160
    %v193 = vcvt.s32.f32 %v161
    %v194 = vcvt.s32.f32 %v162
    %v195 = vcvt.s32.f32 %v163
    %v196 = vcvt.s32.f32 %v164
    %v197 = vcvt.s32.f32 %v165
    %v198 = vcvt.s32.f32 %v166
    %v199 = vcvt.s32.f32 %v167
    %v200 = vcvt.s32.f32 %v168
    %v201 = vcvt.s32.f32 %v169
    %v202 = vcvt.s32.f32 %v170
    %v203 = vcvt.s32.f32 %v171
    %v204 = vcvt.s32.f32 %v172
    %v205 = vcvt.s32.f32 %v173
    %v206 = vcvt.s32.f32 %v174
    %v207 = vcvt.s32.f32 %v175
    %v208 = vcvt.s32.f32 %v176
    %v209 = vcvt.s32.f32 %v177
    %v210 = vcvt.s32.f32 %v178
    %v211 = vcvt.s32.f32 %v179
    %v212 = vcvt.s32.f32 %v180
    %v213 = vcvt.s32.f32 %v181
    %v214 = vcvt.s32.f32 %v182
    %v215 = vcvt.s32.f32 %v183
    %v216 = vcvt.s32.f32 %v184
    %v217 = vcvt.s32.f32 %v185
    %v218 = vcvt.s32.f32 %v186
    %v219 = vcvt.s32.f32 %v187
    %v220 = vcvt.s32.f32 %v188
    %v221 = vcvt.s32.f32 %v189
    %v222 = vpack.c.bf16 %v192, %v190
    %v223 = vpack.c.bf16 %v193, %v191
    %v224 = vpack.c.bf16 %v196, %v194
    %v225 = vpack.c.bf16 %v197, %v195
    %v226 = vpack.c.bf16 %v200, %v198
    %v227 = vpack.c.bf16 %v201, %v199
    %v228 = vpack.c.bf16 %v204, %v202
    %v229 = vpack.c.bf16 %v205, %v203
    %v230 = vpack.c.bf16 %v208, %v206
    %v231 = vpack.c.bf16 %v209, %v207
    %v232 = vpack.c.bf16 %v212, %v210
    %v233 = vpack.c.bf16 %v213, %v211
    %v234 = vpack.c.bf16 %v216, %v214
    %v235 = vpack.c.bf16 %v217, %v215
    %v236 = vpack.c.bf16 %v220, %v218
    %v237 = vpack.c.bf16 %v221, %v219
    %v238 = vld [vmem:[%s1] sm:$0xf]
    %v239 = vld [vmem:[%s1 + $0x4] sm:$0xf]
    %v240 = vld [vmem:[%s1 + $0x8] sm:$0xf]
    %v241 = vld [vmem:[%s1 + $0xc] sm:$0xf]
    %v242 = vld [vmem:[%s1 + $0x10] sm:$0xf]
    %v243 = vld [vmem:[%s1 + $0x14] sm:$0xf]
    %v244 = vld [vmem:[%s1 + $0x18] sm:$0xf]
    %v245 = vld [vmem:[%s1 + $0x1c] sm:$0xf]
    %v246 = vld [vmem:[%s1 + $0x20] sm:$0xf]
    %v247 = vld [vmem:[%s1 + $0x24] sm:$0xf]
    %v248 = vld [vmem:[%s1 + $0x28] sm:$0xf]
    %v249 = vld [vmem:[%s1 + $0x2c] sm:$0xf]
    %v250 = vld [vmem:[%s1 + $0x30] sm:$0xf]
    %v251 = vld [vmem:[%s1 + $0x34] sm:$0xf]
    %v252 = vld [vmem:[%s1 + $0x38] sm:$0xf]
    %v253 = vld [vmem:[%s1 + $0x3c] sm:$0xf]
    %v254 = vld [vmem:[%s1 + $0x40] sm:$0xf]
    %v255 = vld [vmem:[%s1 + $0x44] sm:$0xf]
    %v256 = vld [vmem:[%s1 + $0x48] sm:$0xf]
    %v257 = vld [vmem:[%s1 + $0x4c] sm:$0xf]
    %v258 = vld [vmem:[%s1 + $0x50] sm:$0xf]
    %v259 = vld [vmem:[%s1 + $0x54] sm:$0xf]
    %v260 = vld [vmem:[%s1 + $0x58] sm:$0xf]
    %v261 = vld [vmem:[%s1 + $0x5c] sm:$0xf]
    %v262 = vld [vmem:[%s1 + $0x60] sm:$0xf]
    %v263 = vld [vmem:[%s1 + $0x64] sm:$0xf]
    %v264 = vld [vmem:[%s1 + $0x68] sm:$0xf]
    %v265 = vld [vmem:[%s1 + $0x6c] sm:$0xf]
    %v266 = vld [vmem:[%s1 + $0x70] sm:$0xf]
    %v267 = vld [vmem:[%s1 + $0x74] sm:$0xf]
    %v268 = vld [vmem:[%s1 + $0x78] sm:$0xf]
    %v269 = vld [vmem:[%s1 + $0x7c] sm:$0xf]
    %v302 = vunpack.c.l.b16 %v238
    %v303 = vunpack.c.l.b16 %v239
    %v304 = vunpack.c.l.b16 %v240
    %v305 = vunpack.c.l.b16 %v241
    %v306 = vunpack.c.l.b16 %v242
    %v307 = vunpack.c.l.b16 %v243
    %v308 = vunpack.c.l.b16 %v244
    %v309 = vunpack.c.l.b16 %v245
    %v310 = vunpack.c.l.b16 %v246
    %v311 = vunpack.c.l.b16 %v247
    %v312 = vunpack.c.l.b16 %v248
    %v313 = vunpack.c.l.b16 %v249
    %v314 = vunpack.c.l.b16 %v250
    %v315 = vunpack.c.l.b16 %v251
    %v316 = vunpack.c.l.b16 %v252
    %v317 = vunpack.c.l.b16 %v253
    %v318 = vunpack.c.l.b16 %v254
    %v319 = vunpack.c.l.b16 %v255
    %v320 = vunpack.c.l.b16 %v256
    %v321 = vunpack.c.l.b16 %v257
    %v322 = vunpack.c.l.b16 %v258
    %v323 = vunpack.c.l.b16 %v259
    %v324 = vunpack.c.l.b16 %v260
    %v325 = vunpack.c.l.b16 %v261
    %v326 = vunpack.c.l.b16 %v262
    %v327 = vunpack.c.l.b16 %v263
    %v328 = vunpack.c.l.b16 %v264
    %v329 = vunpack.c.l.b16 %v265
    %v330 = vunpack.c.l.b16 %v266
    %v331 = vunpack.c.l.b16 %v267
    %v332 = vunpack.c.l.b16 %v268
    %v333 = vunpack.c.l.b16 %v269
    %v334 = vpack.c.b16 %v303, %v302
    %v335 = vpack.c.b16 %v305, %v304
    %v336 = vpack.c.b16 %v307, %v306
    %v337 = vpack.c.b16 %v309, %v308
    %v338 = vpack.c.b16 %v311, %v310
    %v339 = vpack.c.b16 %v313, %v312
    %v340 = vpack.c.b16 %v315, %v314
    %v341 = vpack.c.b16 %v317, %v316
    %v342 = vpack.c.b16 %v319, %v318
    %v343 = vpack.c.b16 %v321, %v320
    %v344 = vpack.c.b16 %v323, %v322
    %v345 = vpack.c.b16 %v325, %v324
    %v346 = vpack.c.b16 %v327, %v326
    %v347 = vpack.c.b16 %v329, %v328
    %v348 = vpack.c.b16 %v331, %v330
    %v349 = vpack.c.b16 %v333, %v332
    %366 = vmatprep.subr.bf16.mxu0 0
    %367 = vmatpush1.bf16.msra.mxu0 %v334
    %368 = vmatprep.subr.bf16.mxu0 0
    %369 = vmatpush1.bf16.msra.mxu0 %v335
    %370 = vmatprep.subr.bf16.mxu0 0
    %371 = vmatpush1.bf16.msra.mxu0 %v336
    %372 = vmatprep.subr.bf16.mxu0 0
    %373 = vmatpush1.bf16.msra.mxu0 %v337
    %374 = vmatprep.subr.bf16.mxu0 0
    %375 = vmatpush1.bf16.msra.mxu0 %v338
    %376 = vmatprep.subr.bf16.mxu0 0
    %377 = vmatpush1.bf16.msra.mxu0 %v339
    %378 = vmatprep.subr.bf16.mxu0 0
    %379 = vmatpush1.bf16.msra.mxu0 %v340
    %380 = vmatprep.subr.bf16.mxu0 0
    %381 = vmatpush1.bf16.msra.mxu0 %v341
    %382 = vmatprep.subr.bf16.mxu0 0
    %383 = vmatpush1.bf16.msra.mxu0 %v342
    %384 = vmatprep.subr.bf16.mxu0 0
    %385 = vmatpush1.bf16.msra.mxu0 %v343
    %386 = vmatprep.subr.bf16.mxu0 0
    %387 = vmatpush1.bf16.msra.mxu0 %v344
    %388 = vmatprep.subr.bf16.mxu0 0
    %389 = vmatpush1.bf16.msra.mxu0 %v345
    %390 = vmatprep.subr.bf16.mxu0 0
    %391 = vmatpush1.bf16.msra.mxu0 %v346
    %392 = vmatprep.subr.bf16.mxu0 0
    %393 = vmatpush1.bf16.msra.mxu0 %v347
    %394 = vmatprep.subr.bf16.mxu0 0
    %395 = vmatpush1.bf16.msra.mxu0 %v348
    %396 = vmatprep.subr.bf16.mxu0 0
    %397 = vmatpush1.bf16.msra.mxu0 %v349
    %398 = vmatprep.mubr.bf16.mxu0 %v223
    %399 = vmatmul.mubr.bf16.gmra.mrb[0].mxu0 %v222
    %v400 = vpop.f32.mrb[0].mxu0
    %v401 = vadd.f32 0.0, %v400
    %v402 = vpop.f32.mrb[0].mxu0
    %v403 = vpop.f32.mrb[0].mxu0
    %v404 = vadd.f32 0.0, %v403
    %v405 = vpop.f32.mrb[0].mxu0
    %406 = vmatprep.mubr.bf16.mxu0 %v225
    %407 = vmatmul.mubr.bf16.gmra.mrb[0].mxu0 %v224
    %v408 = vpop.f32.mrb[0].mxu0
    %v409 = vadd.f32 0.0, %v408
    %v410 = vpop.f32.mrb[0].mxu0
    %v411 = vpop.f32.mrb[0].mxu0
    %v412 = vadd.f32 0.0, %v411
    %v413 = vpop.f32.mrb[0].mxu0
    %414 = vmatprep.mubr.bf16.mxu0 %v227
    %415 = vmatmul.mubr.bf16.gmra.mrb[0].mxu0 %v226
    %v416 = vpop.f32.mrb[0].mxu0
    %v417 = vadd.f32 0.0, %v416
    %v418 = vpop.f32.mrb[0].mxu0
    %v419 = vpop.f32.mrb[0].mxu0
    %v420 = vadd.f32 0.0, %v419
    %v421 = vpop.f32.mrb[0].mxu0
    %422 = vmatprep.mubr.bf16.mxu0 %v229
    %423 = vmatmul.mubr.bf16.gmra.mrb[0].mxu0 %v228
    %v424 = vpop.f32.mrb[0].mxu0
    %v425 = vadd.f32 0.0, %v424
    %v426 = vpop.f32.mrb[0].mxu0
    %v427 = vpop.f32.mrb[0].mxu0
    %v428 = vadd.f32 0.0, %v427
    %v429 = vpop.f32.mrb[0].mxu0
    %430 = vmatprep.mubr.bf16.mxu0 %v231
    %431 = vmatmul.mubr.bf16.gmra.mrb[0].mxu0 %v230
    %v432 = vpop.f32.mrb[0].mxu0
    %v433 = vadd.f32 0.0, %v432
    %v434 = vpop.f32.mrb[0].mxu0
    %v435 = vpop.f32.mrb[0].mxu0
    %v436 = vadd.f32 0.0, %v435
    %v437 = vpop.f32.mrb[0].mxu0
    %438 = vmatprep.mubr.bf16.mxu0 %v233
    %439 = vmatmul.mubr.bf16.gmra.mrb[0].mxu0 %v232
    %v440 = vpop.f32.mrb[0].mxu0
    %v441 = vadd.f32 0.0, %v440
    %v442 = vpop.f32.mrb[0].mxu0
    %v443 = vpop.f32.mrb[0].mxu0
    %v444 = vadd.f32 0.0, %v443
    %v445 = vpop.f32.mrb[0].mxu0
    %446 = vmatprep.mubr.bf16.mxu0 %v235
    %447 = vmatmul.mubr.bf16.gmra.mrb[0].mxu0 %v234
    %v448 = vpop.f32.mrb[0].mxu0
    %v449 = vadd.f32 0.0, %v448
    %v450 = vpop.f32.mrb[0].mxu0
    %v451 = vpop.f32.mrb[0].mxu0
    %v452 = vadd.f32 0.0, %v451
    %v453 = vpop.f32.mrb[0].mxu0
    %454 = vmatprep.mubr.bf16.mxu0 %v237
    %455 = vmatmul.mubr.bf16.gmra.mrb[0].mxu0 %v236
    %v456 = vpop.f32.mrb[0].mxu0
    %v457 = vadd.f32 0.0, %v456
    %v458 = vpop.f32.mrb[0].mxu0
    %v459 = vpop.f32.mrb[0].mxu0
    %v460 = vadd.f32 0.0, %v459
    %v461 = vpop.f32.mrb[0].mxu0
    %462 = vdwg.mxu0
    %v463 = vpack.c.bf16 %v404, %v401
    %v464 = vpack.c.bf16 %v412, %v409
    %v465 = vpack.c.bf16 %v420, %v417
    %v466 = vpack.c.bf16 %v428, %v425
    %v467 = vpack.c.bf16 %v436, %v433
    %v468 = vpack.c.bf16 %v444, %v441
    %v469 = vpack.c.bf16 %v452, %v449
    %v470 = vpack.c.bf16 %v460, %v457
    %v471 = vld [vmem:[#allocation2] sm:$0xff]
    %v472 = vld [vmem:[#allocation2 + $0x8] sm:$0xff]
    %v473 = vld [vmem:[#allocation2 + $0x10] sm:$0xff]
    %v474 = vld [vmem:[#allocation2 + $0x18] sm:$0xff]
    %v475 = vld [vmem:[#allocation2 + $0x20] sm:$0xff]
    %v476 = vld [vmem:[#allocation2 + $0x28] sm:$0xff]
    %v477 = vld [vmem:[#allocation2 + $0x30] sm:$0xff]
    %v478 = vld [vmem:[#allocation2 + $0x38] sm:$0xff]
    %v479 = vrot.slane %v401, 1
    %v480 = vrot.slane %v404, 1
    %v481 = vrot.slane %v409, 1
    %v482 = vrot.slane %v412, 1
    %v483 = vrot.slane %v417, 1
    %v484 = vrot.slane %v420, 1
    %v485 = vrot.slane %v425, 1
    %v486 = vrot.slane %v428, 1
    %v487 = vrot.slane %v433, 1
    %v488 = vrot.slane %v436, 1
    %v489 = vrot.slane %v441, 1
    %v490 = vrot.slane %v444, 1
    %v491 = vrot.slane %v449, 1
    %v492 = vrot.slane %v452, 1
    %v493 = vrot.slane %v457, 1
    %v494 = vrot.slane %v460, 1
    %v495 = vlaneseq
    %v496 = vshrl.u32 %v495, 7
    %vm497 = vcmp.lt.s32.totalorder %v496, 7
    %v498 = vsel %vm497, %v493, %v494
    %v499 = vsel %vm497, %v492, %v493
    %v500 = vsel %vm497, %v491, %v492
    %v501 = vsel %vm497, %v490, %v491
    %v502 = vsel %vm497, %v489, %v490
    %v503 = vsel %vm497, %v488, %v489
    %v504 = vsel %vm497, %v487, %v488
    %v505 = vsel %vm497, %v486, %v487
    %v506 = vsel %vm497, %v485, %v486
    %v507 = vsel %vm497, %v484, %v485
    %v508 = vsel %vm497, %v483, %v484
    %v509 = vsel %vm497, %v482, %v483
    %v510 = vsel %vm497, %v481, %v482
    %v511 = vsel %vm497, %v480, %v481
    %v512 = vsel %vm497, %v479, %v480
    %v513 = vsel %vm497, %v494, %v479
    %v514 = vpack.c.bf16 %v511, %v512
    %v515 = vpack.c.bf16 %v509, %v510
    %v516 = vpack.c.bf16 %v507, %v508
    %v517 = vpack.c.bf16 %v505, %v506
    %v518 = vpack.c.bf16 %v503, %v504
    %v519 = vpack.c.bf16 %v501, %v502
    %v520 = vpack.c.bf16 %v499, %v500
    %v521 = vpack.c.bf16 %v513, %v498
    %s522 = scalar_lea.vmem [#allocation2], 64
    %v523 = vld [vmem:[%s522] sm:$0xff]
    %v524 = vld [vmem:[%s522 + $0x8] sm:$0xff]
    %v525 = vld [vmem:[%s522 + $0x10] sm:$0xff]
    %v526 = vld [vmem:[%s522 + $0x18] sm:$0xff]
    %v527 = vld [vmem:[%s522 + $0x20] sm:$0xff]
    %v528 = vld [vmem:[%s522 + $0x28] sm:$0xff]
    %v529 = vld [vmem:[%s522 + $0x30] sm:$0xff]
    %v530 = vld [vmem:[%s522 + $0x38] sm:$0xff]
    %v539 = vunpack.c.l.b16 %v523
    %v540 = vunpack.c.h.b16 %v523
    %v541 = vunpack.c.l.b16 %v524
    %v542 = vunpack.c.h.b16 %v524
    %v543 = vunpack.c.l.b16 %v525
    %v544 = vunpack.c.h.b16 %v525
    %v545 = vunpack.c.l.b16 %v526
    %v546 = vunpack.c.h.b16 %v526
    %v547 = vunpack.c.l.b16 %v527
    %v548 = vunpack.c.h.b16 %v527
    %v549 = vunpack.c.l.b16 %v528
    %v550 = vunpack.c.h.b16 %v528
    %v551 = vunpack.c.l.b16 %v529
    %v552 = vunpack.c.h.b16 %v529
    %v553 = vunpack.c.l.b16 %v530
    %v554 = vunpack.c.h.b16 %v530
    %v555 = vpack.c.b16 %v543, %v539
    %v556 = vpack.c.b16 %v544, %v540
    %v557 = vpack.c.b16 %v545, %v541
    %v558 = vpack.c.b16 %v546, %v542
    %v559 = vpack.c.b16 %v551, %v547
    %v560 = vpack.c.b16 %v552, %v548
    %v561 = vpack.c.b16 %v553, %v549
    %v562 = vpack.c.b16 %v554, %v550
    %vm571 = vcmask 261120
    %v573 = vsel %vm571, %v514, 0
    %v576 = vsel %vm571, %v515, 0
    %v579 = vsel %vm571, %v516, 0
    %v582 = vsel %vm571, %v517, 0
    %v585 = vsel %vm571, %v518, 0
    %v588 = vsel %vm571, %v519, 0
    %v591 = vsel %vm571, %v520, 0
    %v594 = vsel %vm571, %v521, 0
    %596 = vmatprep.subr.bf16.mxu0 %v556
    %597 = vmatpush1.bf16.msra.mxu0 %v555
    %598 = vmatprep.subr.bf16.mxu0 %v560
    %599 = vmatpush1.bf16.msra.mxu0 %v559
    %600 = vmatprep.subr.bf16.mxu0 0
    %601 = vmatpush1.bf16.msra.mxu0 0
    %602 = vmatprep.subr.bf16.mxu0 0
    %603 = vmatpush1.bf16.msra.mxu0 0
    %604 = vmatprep.subr.bf16.mxu0 0
    %605 = vmatpush1.bf16.msra.mxu0 0
    %606 = vmatprep.subr.bf16.mxu0 0
    %607 = vmatpush1.bf16.msra.mxu0 0
    %608 = vmatprep.subr.bf16.mxu0 0
    %609 = vmatpush1.bf16.msra.mxu0 0
    %610 = vmatprep.subr.bf16.mxu0 0
    %611 = vmatpush1.bf16.msra.mxu0 0
    %612 = vmatprep.subr.bf16.mxu0 0
    %613 = vmatpush1.bf16.msra.mxu0 0
    %614 = vmatprep.subr.bf16.mxu0 0
    %615 = vmatpush1.bf16.msra.mxu0 0
    %616 = vmatprep.subr.bf16.mxu0 0
    %617 = vmatpush1.bf16.msra.mxu0 0
    %618 = vmatprep.subr.bf16.mxu0 0
    %619 = vmatpush1.bf16.msra.mxu0 0
    %620 = vmatprep.subr.bf16.mxu0 0
    %621 = vmatpush1.bf16.msra.mxu0 0
    %622 = vmatprep.subr.bf16.mxu0 0
    %623 = vmatpush1.bf16.msra.mxu0 0
    %624 = vmatprep.subr.bf16.mxu0 0
    %625 = vmatpush1.bf16.msra.mxu0 0
    %626 = vmatprep.subr.bf16.mxu0 0
    %627 = vmatpush1.bf16.msra.mxu0 0
    %628 = vmatprep.mubr.bf16.mxu0 0
    %629 = vmatmul.mubr.bf16.gmra.mrb[0].mxu0 %v573
    %v630 = vpop.f32.mrb[0].mxu0
    %v631 = vadd.f32 0.0, %v630
    %v632 = vpop.f32.mrb[0].mxu0
    %v633 = vadd.f32 0.0, %v632
    %v634 = vpop.f32.mrb[0].mxu0
    %v635 = vadd.f32 0.0, %v634
    %v636 = vpop.f32.mrb[0].mxu0
    %v637 = vadd.f32 0.0, %v636
    %638 = vmatprep.mubr.bf16.mxu0 0
    %639 = vmatmul.mubr.bf16.gmra.mrb[0].mxu0 %v576
    %v640 = vpop.f32.mrb[0].mxu0
    %v641 = vadd.f32 0.0, %v640
    %v642 = vpop.f32.mrb[0].mxu0
    %v643 = vadd.f32 0.0, %v642
    %v644 = vpop.f32.mrb[0].mxu0
    %v645 = vadd.f32 0.0, %v644
    %v646 = vpop.f32.mrb[0].mxu0
    %v647 = vadd.f32 0.0, %v646
    %648 = vmatprep.mubr.bf16.mxu0 0
    %649 = vmatmul.mubr.bf16.gmra.mrb[0].mxu0 %v579
    %v650 = vpop.f32.mrb[0].mxu0
    %v651 = vadd.f32 0.0, %v650
    %v652 = vpop.f32.mrb[0].mxu0
    %v653 = vadd.f32 0.0, %v652
    %v654 = vpop.f32.mrb[0].mxu0
    %v655 = vadd.f32 0.0, %v654
    %v656 = vpop.f32.mrb[0].mxu0
    %v657 = vadd.f32 0.0, %v656
    %658 = vmatprep.mubr.bf16.mxu0 0
    %659 = vmatmul.mubr.bf16.gmra.mrb[0].mxu0 %v582
    %v660 = vpop.f32.mrb[0].mxu0
    %v661 = vadd.f32 0.0, %v660
    %v662 = vpop.f32.mrb[0].mxu0
    %v663 = vadd.f32 0.0, %v662
    %v664 = vpop.f32.mrb[0].mxu0
    %v665 = vadd.f32 0.0, %v664
    %v666 = vpop.f32.mrb[0].mxu0
    %v667 = vadd.f32 0.0, %v666
    %668 = vmatprep.mubr.bf16.mxu0 0
    %669 = vmatmul.mubr.bf16.gmra.mrb[0].mxu0 %v585
    %v670 = vpop.f32.mrb[0].mxu0
    %v671 = vadd.f32 0.0, %v670
    %v672 = vpop.f32.mrb[0].mxu0
    %v673 = vadd.f32 0.0, %v672
    %v674 = vpop.f32.mrb[0].mxu0
    %v675 = vadd.f32 0.0, %v674
    %v676 = vpop.f32.mrb[0].mxu0
    %v677 = vadd.f32 0.0, %v676
    %678 = vmatprep.mubr.bf16.mxu0 0
    %679 = vmatmul.mubr.bf16.gmra.mrb[0].mxu0 %v588
    %v680 = vpop.f32.mrb[0].mxu0
    %v681 = vadd.f32 0.0, %v680
    %v682 = vpop.f32.mrb[0].mxu0
    %v683 = vadd.f32 0.0, %v682
    %v684 = vpop.f32.mrb[0].mxu0
    %v685 = vadd.f32 0.0, %v684
    %v686 = vpop.f32.mrb[0].mxu0
    %v687 = vadd.f32 0.0, %v686
    %688 = vmatprep.mubr.bf16.mxu0 0
    %689 = vmatmul.mubr.bf16.gmra.mrb[0].mxu0 %v591
    %v690 = vpop.f32.mrb[0].mxu0
    %v691 = vadd.f32 0.0, %v690
    %v692 = vpop.f32.mrb[0].mxu0
    %v693 = vadd.f32 0.0, %v692
    %v694 = vpop.f32.mrb[0].mxu0
    %v695 = vadd.f32 0.0, %v694
    %v696 = vpop.f32.mrb[0].mxu0
    %v697 = vadd.f32 0.0, %v696
    %698 = vmatprep.mubr.bf16.mxu0 0
    %699 = vmatmul.mubr.bf16.gmra.mrb[0].mxu0 %v594
    %v700 = vpop.f32.mrb[0].mxu0
    %v701 = vadd.f32 0.0, %v700
    %v702 = vpop.f32.mrb[0].mxu0
    %v703 = vadd.f32 0.0, %v702
    %v704 = vpop.f32.mrb[0].mxu0
    %v705 = vadd.f32 0.0, %v704
    %v706 = vpop.f32.mrb[0].mxu0
    %v707 = vadd.f32 0.0, %v706
    %708 = vdwg.mxu0
    %709 = vmatprep.subr.bf16.mxu0 %v558
    %710 = vmatpush1.bf16.msra.mxu0 %v557
    %711 = vmatprep.subr.bf16.mxu0 %v562
    %712 = vmatpush1.bf16.msra.mxu0 %v561
    %713 = vmatprep.subr.bf16.mxu0 0
    %714 = vmatpush1.bf16.msra.mxu0 0
    %715 = vmatprep.subr.bf16.mxu0 0
    %716 = vmatpush1.bf16.msra.mxu0 0
    %717 = vmatprep.subr.bf16.mxu0 0
    %718 = vmatpush1.bf16.msra.mxu0 0
    %719 = vmatprep.subr.bf16.mxu0 0
    %720 = vmatpush1.bf16.msra.mxu0 0
    %721 = vmatprep.subr.bf16.mxu0 0
    %722 = vmatpush1.bf16.msra.mxu0 0
    %723 = vmatprep.subr.bf16.mxu0 0
    %724 = vmatpush1.bf16.msra.mxu0 0
    %725 = vmatprep.subr.bf16.mxu0 0
    %726 = vmatpush1.bf16.msra.mxu0 0
    %727 = vmatprep.subr.bf16.mxu0 0
    %728 = vmatpush1.bf16.msra.mxu0 0
    %729 = vmatprep.subr.bf16.mxu0 0
    %730 = vmatpush1.bf16.msra.mxu0 0
    %731 = vmatprep.subr.bf16.mxu0 0
    %732 = vmatpush1.bf16.msra.mxu0 0
    %733 = vmatprep.subr.bf16.mxu0 0
    %734 = vmatpush1.bf16.msra.mxu0 0
    %735 = vmatprep.subr.bf16.mxu0 0
    %736 = vmatpush1.bf16.msra.mxu0 0
    %737 = vmatprep.subr.bf16.mxu0 0
    %738 = vmatpush1.bf16.msra.mxu0 0
    %739 = vmatprep.subr.bf16.mxu0 0
    %740 = vmatpush1.bf16.msra.mxu0 0
    %741 = vmatprep.mubr.bf16.mxu0 0
    %742 = vmatmul.mubr.bf16.gmra.mrb[0].mxu0 %v573
    %v743 = vpop.f32.mrb[0].mxu0
    %v744 = vadd.f32 0.0, %v743
    %v745 = vpop.f32.mrb[0].mxu0
    %v746 = vadd.f32 0.0, %v745
    %v747 = vpop.f32.mrb[0].mxu0
    %v748 = vadd.f32 0.0, %v747
    %v749 = vpop.f32.mrb[0].mxu0
    %v750 = vadd.f32 0.0, %v749
    %751 = vmatprep.mubr.bf16.mxu0 0
    %752 = vmatmul.mubr.bf16.gmra.mrb[0].mxu0 %v576
    %v753 = vpop.f32.mrb[0].mxu0
    %v754 = vadd.f32 0.0, %v753
    %v755 = vpop.f32.mrb[0].mxu0
    %v756 = vadd.f32 0.0, %v755
    %v757 = vpop.f32.mrb[0].mxu0
    %v758 = vadd.f32 0.0, %v757
    %v759 = vpop.f32.mrb[0].mxu0
    %v760 = vadd.f32 0.0, %v759
    %761 = vmatprep.mubr.bf16.mxu0 0
    %762 = vmatmul.mubr.bf16.gmra.mrb[0].mxu0 %v579
    %v763 = vpop.f32.mrb[0].mxu0
    %v764 = vadd.f32 0.0, %v763
    %v765 = vpop.f32.mrb[0].mxu0
    %v766 = vadd.f32 0.0, %v765
    %v767 = vpop.f32.mrb[0].mxu0
    %v768 = vadd.f32 0.0, %v767
    %v769 = vpop.f32.mrb[0].mxu0
    %v770 = vadd.f32 0.0, %v769
    %771 = vmatprep.mubr.bf16.mxu0 0
    %772 = vmatmul.mubr.bf16.gmra.mrb[0].mxu0 %v582
    %v773 = vpop.f32.mrb[0].mxu0
    %v774 = vadd.f32 0.0, %v773
    %v775 = vpop.f32.mrb[0].mxu0
    %v776 = vadd.f32 0.0, %v775
    %v777 = vpop.f32.mrb[0].mxu0
    %v778 = vadd.f32 0.0, %v777
    %v779 = vpop.f32.mrb[0].mxu0
    %v780 = vadd.f32 0.0, %v779
    %781 = vmatprep.mubr.bf16.mxu0 0
    %782 = vmatmul.mubr.bf16.gmra.mrb[0].mxu0 %v585
    %v783 = vpop.f32.mrb[0].mxu0
    %v784 = vadd.f32 0.0, %v783
    %v785 = vpop.f32.mrb[0].mxu0
    %v786 = vadd.f32 0.0, %v785
    %v787 = vpop.f32.mrb[0].mxu0
    %v788 = vadd.f32 0.0, %v787
    %v789 = vpop.f32.mrb[0].mxu0
    %v790 = vadd.f32 0.0, %v789
    %791 = vmatprep.mubr.bf16.mxu0 0
    %792 = vmatmul.mubr.bf16.gmra.mrb[0].mxu0 %v588
    %v793 = vpop.f32.mrb[0].mxu0
    %v794 = vadd.f32 0.0, %v793
    %v795 = vpop.f32.mrb[0].mxu0
    %v796 = vadd.f32 0.0, %v795
    %v797 = vpop.f32.mrb[0].mxu0
    %v798 = vadd.f32 0.0, %v797
    %v799 = vpop.f32.mrb[0].mxu0
    %v800 = vadd.f32 0.0, %v799
    %801 = vmatprep.mubr.bf16.mxu0 0
    %802 = vmatmul.mubr.bf16.gmra.mrb[0].mxu0 %v591
    %v803 = vpop.f32.mrb[0].mxu0
    %v804 = vadd.f32 0.0, %v803
    %v805 = vpop.f32.mrb[0].mxu0
    %v806 = vadd.f32 0.0, %v805
    %v807 = vpop.f32.mrb[0].mxu0
    %v808 = vadd.f32 0.0, %v807
    %v809 = vpop.f32.mrb[0].mxu0
    %v810 = vadd.f32 0.0, %v809
    %811 = vmatprep.mubr.bf16.mxu0 0
    %812 = vmatmul.mubr.bf16.gmra.mrb[0].mxu0 %v594
    %v813 = vpop.f32.mrb[0].mxu0
    %v814 = vadd.f32 0.0, %v813
    %v815 = vpop.f32.mrb[0].mxu0
    %v816 = vadd.f32 0.0, %v815
    %v817 = vpop.f32.mrb[0].mxu0
    %v818 = vadd.f32 0.0, %v817
    %v819 = vpop.f32.mrb[0].mxu0
    %v820 = vadd.f32 0.0, %v819
    %821 = vdwg.mxu0
    %v830 = vunpack.c.l.b16 %v471
    %v831 = vunpack.c.h.b16 %v471
    %v832 = vunpack.c.l.b16 %v472
    %v833 = vunpack.c.h.b16 %v472
    %v834 = vunpack.c.l.b16 %v473
    %v835 = vunpack.c.h.b16 %v473
    %v836 = vunpack.c.l.b16 %v474
    %v837 = vunpack.c.h.b16 %v474
    %v838 = vunpack.c.l.b16 %v475
    %v839 = vunpack.c.h.b16 %v475
    %v840 = vunpack.c.l.b16 %v476
    %v841 = vunpack.c.h.b16 %v476
    %v842 = vunpack.c.l.b16 %v477
    %v843 = vunpack.c.h.b16 %v477
    %v844 = vunpack.c.l.b16 %v478
    %v845 = vunpack.c.h.b16 %v478
    %v846 = vpack.c.b16 %v834, %v830
    %v847 = vpack.c.b16 %v835, %v831
    %v848 = vpack.c.b16 %v836, %v832
    %v849 = vpack.c.b16 %v837, %v833
    %v850 = vpack.c.b16 %v842, %v838
    %v851 = vpack.c.b16 %v843, %v839
    %v852 = vpack.c.b16 %v844, %v840
    %v853 = vpack.c.b16 %v845, %v841
    %v863 = vsel %vm571, %v463, 0
    %v866 = vsel %vm571, %v464, 0
    %v869 = vsel %vm571, %v465, 0
    %v872 = vsel %vm571, %v466, 0
    %v875 = vsel %vm571, %v467, 0
    %v878 = vsel %vm571, %v468, 0
    %v881 = vsel %vm571, %v469, 0
    %v884 = vsel %vm571, %v470, 0
    %886 = vmatprep.subr.bf16.mxu0 %v847
    %887 = vmatpush1.bf16.msra.mxu0 %v846
    %888 = vmatprep.subr.bf16.mxu0 %v851
    %889 = vmatpush1.bf16.msra.mxu0 %v850
    %890 = vmatprep.subr.bf16.mxu0 0
    %891 = vmatpush1.bf16.msra.mxu0 0
    %892 = vmatprep.subr.bf16.mxu0 0
    %893 = vmatpush1.bf16.msra.mxu0 0
    %894 = vmatprep.subr.bf16.mxu0 0
    %895 = vmatpush1.bf16.msra.mxu0 0
    %896 = vmatprep.subr.bf16.mxu0 0
    %897 = vmatpush1.bf16.msra.mxu0 0
    %898 = vmatprep.subr.bf16.mxu0 0
    %899 = vmatpush1.bf16.msra.mxu0 0
    %900 = vmatprep.subr.bf16.mxu0 0
    %901 = vmatpush1.bf16.msra.mxu0 0
    %902 = vmatprep.subr.bf16.mxu0 0
    %903 = vmatpush1.bf16.msra.mxu0 0
    %904 = vmatprep.subr.bf16.mxu0 0
    %905 = vmatpush1.bf16.msra.mxu0 0
    %906 = vmatprep.subr.bf16.mxu0 0
    %907 = vmatpush1.bf16.msra.mxu0 0
    %908 = vmatprep.subr.bf16.mxu0 0
    %909 = vmatpush1.bf16.msra.mxu0 0
    %910 = vmatprep.subr.bf16.mxu0 0
    %911 = vmatpush1.bf16.msra.mxu0 0
    %912 = vmatprep.subr.bf16.mxu0 0
    %913 = vmatpush1.bf16.msra.mxu0 0
    %914 = vmatprep.subr.bf16.mxu0 0
    %915 = vmatpush1.bf16.msra.mxu0 0
    %916 = vmatprep.subr.bf16.mxu0 0
    %917 = vmatpush1.bf16.msra.mxu0 0
    %918 = vmatprep.mubr.bf16.mxu0 0
    %919 = vmatmul.mubr.bf16.gmra.mrb[0].mxu0 %v863
    %v920 = vpop.f32.mrb[0].mxu0
    %v921 = vadd.f32 %v631, %v920
    %v922 = vpop.f32.mrb[0].mxu0
    %v923 = vadd.f32 %v633, %v922
    %v924 = vpop.f32.mrb[0].mxu0
    %v925 = vadd.f32 %v635, %v924
    %v926 = vpop.f32.mrb[0].mxu0
    %v927 = vadd.f32 %v637, %v926
    %928 = vmatprep.mubr.bf16.mxu0 0
    %929 = vmatmul.mubr.bf16.gmra.mrb[0].mxu0 %v866
    %v930 = vpop.f32.mrb[0].mxu0
    %v931 = vadd.f32 %v641, %v930
    %v932 = vpop.f32.mrb[0].mxu0
    %v933 = vadd.f32 %v643, %v932
    %v934 = vpop.f32.mrb[0].mxu0
    %v935 = vadd.f32 %v645, %v934
    %v936 = vpop.f32.mrb[0].mxu0
    %v937 = vadd.f32 %v647, %v936
    %938 = vmatprep.mubr.bf16.mxu0 0
    %939 = vmatmul.mubr.bf16.gmra.mrb[0].mxu0 %v869
    %v940 = vpop.f32.mrb[0].mxu0
    %v941 = vadd.f32 %v651, %v940
    %v942 = vpop.f32.mrb[0].mxu0
    %v943 = vadd.f32 %v653, %v942
    %v944 = vpop.f32.mrb[0].mxu0
    %v945 = vadd.f32 %v655, %v944
    %v946 = vpop.f32.mrb[0].mxu0
    %v947 = vadd.f32 %v657, %v946
    %948 = vmatprep.mubr.bf16.mxu0 0
    %949 = vmatmul.mubr.bf16.gmra.mrb[0].mxu0 %v872
    %v950 = vpop.f32.mrb[0].mxu0
    %v951 = vadd.f32 %v661, %v950
    %v952 = vpop.f32.mrb[0].mxu0
    %v953 = vadd.f32 %v663, %v952
    %v954 = vpop.f32.mrb[0].mxu0
    %v955 = vadd.f32 %v665, %v954
    %v956 = vpop.f32.mrb[0].mxu0
    %v957 = vadd.f32 %v667, %v956
    %958 = vmatprep.mubr.bf16.mxu0 0
    %959 = vmatmul.mubr.bf16.gmra.mrb[0].mxu0 %v875
    %v960 = vpop.f32.mrb[0].mxu0
    %v961 = vadd.f32 %v671, %v960
    %v962 = vpop.f32.mrb[0].mxu0
    %v963 = vadd.f32 %v673, %v962
    %v964 = vpop.f32.mrb[0].mxu0
    %v965 = vadd.f32 %v675, %v964
    %v966 = vpop.f32.mrb[0].mxu0
    %v967 = vadd.f32 %v677, %v966
    %968 = vmatprep.mubr.bf16.mxu0 0
    %969 = vmatmul.mubr.bf16.gmra.mrb[0].mxu0 %v878
    %v970 = vpop.f32.mrb[0].mxu0
    %v971 = vadd.f32 %v681, %v970
    %v972 = vpop.f32.mrb[0].mxu0
    %v973 = vadd.f32 %v683, %v972
    %v974 = vpop.f32.mrb[0].mxu0
    %v975 = vadd.f32 %v685, %v974
    %v976 = vpop.f32.mrb[0].mxu0
    %v977 = vadd.f32 %v687, %v976
    %978 = vmatprep.mubr.bf16.mxu0 0
    %979 = vmatmul.mubr.bf16.gmra.mrb[0].mxu0 %v881
    %v980 = vpop.f32.mrb[0].mxu0
    %v981 = vadd.f32 %v691, %v980
    %v982 = vpop.f32.mrb[0].mxu0
    %v983 = vadd.f32 %v693, %v982
    %v984 = vpop.f32.mrb[0].mxu0
    %v985 = vadd.f32 %v695, %v984
    %v986 = vpop.f32.mrb[0].mxu0
    %v987 = vadd.f32 %v697, %v986
    %988 = vmatprep.mubr.bf16.mxu0 0
    %989 = vmatmul.mubr.bf16.gmra.mrb[0].mxu0 %v884
    %v990 = vpop.f32.mrb[0].mxu0
    %v991 = vadd.f32 %v701, %v990
    %v992 = vpop.f32.mrb[0].mxu0
    %v993 = vadd.f32 %v703, %v992
    %v994 = vpop.f32.mrb[0].mxu0
    %v995 = vadd.f32 %v705, %v994
    %v996 = vpop.f32.mrb[0].mxu0
    %v997 = vadd.f32 %v707, %v996
    %998 = vdwg.mxu0
    %999 = vmatprep.subr.bf16.mxu0 %v849
    %1000 = vmatpush1.bf16.msra.mxu0 %v848
    %1001 = vmatprep.subr.bf16.mxu0 %v853
    %1002 = vmatpush1.bf16.msra.mxu0 %v852
    %1003 = vmatprep.subr.bf16.mxu0 0
    %1004 = vmatpush1.bf16.msra.mxu0 0
    %1005 = vmatprep.subr.bf16.mxu0 0
    %1006 = vmatpush1.bf16.msra.mxu0 0
    %1007 = vmatprep.subr.bf16.mxu0 0
    %1008 = vmatpush1.bf16.msra.mxu0 0
    %1009 = vmatprep.subr.bf16.mxu0 0
    %1010 = vmatpush1.bf16.msra.mxu0 0
    %1011 = vmatprep.subr.bf16.mxu0 0
    %1012 = vmatpush1.bf16.msra.mxu0 0
    %1013 = vmatprep.subr.bf16.mxu0 0
    %1014 = vmatpush1.bf16.msra.mxu0 0
    %1015 = vmatprep.subr.bf16.mxu0 0
    %1016 = vmatpush1.bf16.msra.mxu0 0
    %1017 = vmatprep.subr.bf16.mxu0 0
    %1018 = vmatpush1.bf16.msra.mxu0 0
    %1019 = vmatprep.subr.bf16.mxu0 0
    %1020 = vmatpush1.bf16.msra.mxu0 0
    %1021 = vmatprep.subr.bf16.mxu0 0
    %1022 = vmatpush1.bf16.msra.mxu0 0
    %1023 = vmatprep.subr.bf16.mxu0 0
    %1024 = vmatpush1.bf16.msra.mxu0 0
    %1025 = vmatprep.subr.bf16.mxu0 0
    %1026 = vmatpush1.bf16.msra.mxu0 0
    %1027 = vmatprep.subr.bf16.mxu0 0
    %1028 = vmatpush1.bf16.msra.mxu0 0
    %1029 = vmatprep.subr.bf16.mxu0 0
    %1030 = vmatpush1.bf16.msra.mxu0 0
    %1031 = vmatprep.mubr.bf16.mxu0 0
    %1032 = vmatmul.mubr.bf16.gmra.mrb[0].mxu0 %v863
    %v1033 = vpop.f32.mrb[0].mxu0
    %v1034 = vadd.f32 %v744, %v1033
    %v1035 = vpop.f32.mrb[0].mxu0
    %v1036 = vadd.f32 %v746, %v1035
    %v1037 = vpop.f32.mrb[0].mxu0
    %v1038 = vadd.f32 %v748, %v1037
    %v1039 = vpop.f32.mrb[0].mxu0
    %v1040 = vadd.f32 %v750, %v1039
    %1041 = vmatprep.mubr.bf16.mxu0 0
    %1042 = vmatmul.mubr.bf16.gmra.mrb[0].mxu0 %v866
    %v1043 = vpop.f32.mrb[0].mxu0
    %v1044 = vadd.f32 %v754, %v1043
    %v1045 = vpop.f32.mrb[0].mxu0
    %v1046 = vadd.f32 %v756, %v1045
    %v1047 = vpop.f32.mrb[0].mxu0
    %v1048 = vadd.f32 %v758, %v1047
    %v1049 = vpop.f32.mrb[0].mxu0
    %v1050 = vadd.f32 %v760, %v1049
    %1051 = vmatprep.mubr.bf16.mxu0 0
    %1052 = vmatmul.mubr.bf16.gmra.mrb[0].mxu0 %v869
    %v1053 = vpop.f32.mrb[0].mxu0
    %v1054 = vadd.f32 %v764, %v1053
    %v1055 = vpop.f32.mrb[0].mxu0
    %v1056 = vadd.f32 %v766, %v1055
    %v1057 = vpop.f32.mrb[0].mxu0
    %v1058 = vadd.f32 %v768, %v1057
    %v1059 = vpop.f32.mrb[0].mxu0
    %v1060 = vadd.f32 %v770, %v1059
    %1061 = vmatprep.mubr.bf16.mxu0 0
    %1062 = vmatmul.mubr.bf16.gmra.mrb[0].mxu0 %v872
    %v1063 = vpop.f32.mrb[0].mxu0
    %v1064 = vadd.f32 %v774, %v1063
    %v1065 = vpop.f32.mrb[0].mxu0
    %v1066 = vadd.f32 %v776, %v1065
    %v1067 = vpop.f32.mrb[0].mxu0
    %v1068 = vadd.f32 %v778, %v1067
    %v1069 = vpop.f32.mrb[0].mxu0
    %v1070 = vadd.f32 %v780, %v1069
    %1071 = vmatprep.mubr.bf16.mxu0 0
    %1072 = vmatmul.mubr.bf16.gmra.mrb[0].mxu0 %v875
    %v1073 = vpop.f32.mrb[0].mxu0
    %v1074 = vadd.f32 %v784, %v1073
    %v1075 = vpop.f32.mrb[0].mxu0
    %v1076 = vadd.f32 %v786, %v1075
    %v1077 = vpop.f32.mrb[0].mxu0
    %v1078 = vadd.f32 %v788, %v1077
    %v1079 = vpop.f32.mrb[0].mxu0
    %v1080 = vadd.f32 %v790, %v1079
    %1081 = vmatprep.mubr.bf16.mxu0 0
    %1082 = vmatmul.mubr.bf16.gmra.mrb[0].mxu0 %v878
    %v1083 = vpop.f32.mrb[0].mxu0
    %v1084 = vadd.f32 %v794, %v1083
    %v1085 = vpop.f32.mrb[0].mxu0
    %v1086 = vadd.f32 %v796, %v1085
    %v1087 = vpop.f32.mrb[0].mxu0
    %v1088 = vadd.f32 %v798, %v1087
    %v1089 = vpop.f32.mrb[0].mxu0
    %v1090 = vadd.f32 %v800, %v1089
    %1091 = vmatprep.mubr.bf16.mxu0 0
    %1092 = vmatmul.mubr.bf16.gmra.mrb[0].mxu0 %v881
    %v1093 = vpop.f32.mrb[0].mxu0
    %v1094 = vadd.f32 %v804, %v1093
    %v1095 = vpop.f32.mrb[0].mxu0
    %v1096 = vadd.f32 %v806, %v1095
    %v1097 = vpop.f32.mrb[0].mxu0
    %v1098 = vadd.f32 %v808, %v1097
    %v1099 = vpop.f32.mrb[0].mxu0
    %v1100 = vadd.f32 %v810, %v1099
    %1101 = vmatprep.mubr.bf16.mxu0 0
    %1102 = vmatmul.mubr.bf16.gmra.mrb[0].mxu0 %v884
    %v1103 = vpop.f32.mrb[0].mxu0
    %v1104 = vadd.f32 %v814, %v1103
    %v1105 = vpop.f32.mrb[0].mxu0
    %v1106 = vadd.f32 %v816, %v1105
    %v1107 = vpop.f32.mrb[0].mxu0
    %v1108 = vadd.f32 %v818, %v1107
    %v1109 = vpop.f32.mrb[0].mxu0
    %v1110 = vadd.f32 %v820, %v1109
    %1111 = vdwg.mxu0
    %v1112 = vrot.slane %v401, 2
    %v1113 = vrot.slane %v404, 2
    %v1114 = vrot.slane %v409, 2
    %v1115 = vrot.slane %v412, 2
    %v1116 = vrot.slane %v417, 2
    %v1117 = vrot.slane %v420, 2
    %v1118 = vrot.slane %v425, 2
    %v1119 = vrot.slane %v428, 2
    %v1120 = vrot.slane %v433, 2
    %v1121 = vrot.slane %v436, 2
    %v1122 = vrot.slane %v441, 2
    %v1123 = vrot.slane %v444, 2
    %v1124 = vrot.slane %v449, 2
    %v1125 = vrot.slane %v452, 2
    %v1126 = vrot.slane %v457, 2
    %v1127 = vrot.slane %v460, 2
    %vm1128 = vcmp.lt.s32.totalorder %v496, 6
    %v1129 = vsel %vm1128, %v1126, %v1127
    %v1130 = vsel %vm1128, %v1125, %v1126
    %v1131 = vsel %vm1128, %v1124, %v1125
    %v1132 = vsel %vm1128, %v1123, %v1124
    %v1133 = vsel %vm1128, %v1122, %v1123
    %v1134 = vsel %vm1128, %v1121, %v1122
    %v1135 = vsel %vm1128, %v1120, %v1121
    %v1136 = vsel %vm1128, %v1119, %v1120
    %v1137 = vsel %vm1128, %v1118, %v1119
    %v1138 = vsel %vm1128, %v1117, %v1118
    %v1139 = vsel %vm1128, %v1116, %v1117
    %v1140 = vsel %vm1128, %v1115, %v1116
    %v1141 = vsel %vm1128, %v1114, %v1115
    %v1142 = vsel %vm1128, %v1113, %v1114
    %v1143 = vsel %vm1128, %v1112, %v1113
    %v1144 = vsel %vm1128, %v1127, %v1112
    %v1145 = vpack.c.bf16 %v1142, %v1143
    %v1146 = vpack.c.bf16 %v1140, %v1141
    %v1147 = vpack.c.bf16 %v1138, %v1139
    %v1148 = vpack.c.bf16 %v1136, %v1137
    %v1149 = vpack.c.bf16 %v1134, %v1135
    %v1150 = vpack.c.bf16 %v1132, %v1133
    %v1151 = vpack.c.bf16 %v1130, %v1131
    %v1152 = vpack.c.bf16 %v1144, %v1129
    %s1153 = scalar_lea.vmem [#allocation2], 128
    %v1154 = vld [vmem:[%s1153] sm:$0xff]
    %v1155 = vld [vmem:[%s1153 + $0x8] sm:$0xff]
    %v1156 = vld [vmem:[%s1153 + $0x10] sm:$0xff]
    %v1157 = vld [vmem:[%s1153 + $0x18] sm:$0xff]
    %v1158 = vld [vmem:[%s1153 + $0x20] sm:$0xff]
    %v1159 = vld [vmem:[%s1153 + $0x28] sm:$0xff]
    %v1160 = vld [vmem:[%s1153 + $0x30] sm:$0xff]
    %v1161 = vld [vmem:[%s1153 + $0x38] sm:$0xff]
    %v1170 = vunpack.c.l.b16 %v1154
    %v1171 = vunpack.c.h.b16 %v1154
    %v1172 = vunpack.c.l.b16 %v1155
    %v1173 = vunpack.c.h.b16 %v1155
    %v1174 = vunpack.c.l.b16 %v1156
    %v1175 = vunpack.c.h.b16 %v1156
    %v1176 = vunpack.c.l.b16 %v1157
    %v1177 = vunpack.c.h.b16 %v1157
    %v1178 = vunpack.c.l.b16 %v1158
    %v1179 = vunpack.c.h.b16 %v1158
    %v1180 = vunpack.c.l.b16 %v1159
    %v1181 = vunpack.c.h.b16 %v1159
    %v1182 = vunpack.c.l.b16 %v1160
    %v1183 = vunpack.c.h.b16 %v1160
    %v1184 = vunpack.c.l.b16 %v1161
    %v1185 = vunpack.c.h.b16 %v1161
    %v1186 = vpack.c.b16 %v1174, %v1170
    %v1187 = vpack.c.b16 %v1175, %v1171
    %v1188 = vpack.c.b16 %v1176, %v1172
    %v1189 = vpack.c.b16 %v1177, %v1173
    %v1190 = vpack.c.b16 %v1182, %v1178
    %v1191 = vpack.c.b16 %v1183, %v1179
    %v1192 = vpack.c.b16 %v1184, %v1180
    %v1193 = vpack.c.b16 %v1185, %v1181
    %v1203 = vsel %vm571, %v1145, 0
    %v1206 = vsel %vm571, %v1146, 0
    %v1209 = vsel %vm571, %v1147, 0
    %v1212 = vsel %vm571, %v1148, 0
    %v1215 = vsel %vm571, %v1149, 0
    %v1218 = vsel %vm571, %v1150, 0
    %v1221 = vsel %vm571, %v1151, 0
    %v1224 = vsel %vm571, %v1152, 0
    %1226 = vmatprep.subr.bf16.mxu0 %v1187
    %1227 = vmatpush1.bf16.msra.mxu0 %v1186
    %1228 = vmatprep.subr.bf16.mxu0 %v1191
    %1229 = vmatpush1.bf16.msra.mxu0 %v1190
    %1230 = vmatprep.subr.bf16.mxu0 0
    %1231 = vmatpush1.bf16.msra.mxu0 0
    %1232 = vmatprep.subr.bf16.mxu0 0
    %1233 = vmatpush1.bf16.msra.mxu0 0
    %1234 = vmatprep.subr.bf16.mxu0 0
    %1235 = vmatpush1.bf16.msra.mxu0 0
    %1236 = vmatprep.subr.bf16.mxu0 0
    %1237 = vmatpush1.bf16.msra.mxu0 0
    %1238 = vmatprep.subr.bf16.mxu0 0
    %1239 = vmatpush1.bf16.msra.mxu0 0
    %1240 = vmatprep.subr.bf16.mxu0 0
    %1241 = vmatpush1.bf16.msra.mxu0 0
    %1242 = vmatprep.subr.bf16.mxu0 0
    %1243 = vmatpush1.bf16.msra.mxu0 0
    %1244 = vmatprep.subr.bf16.mxu0 0
    %1245 = vmatpush1.bf16.msra.mxu0 0
    %1246 = vmatprep.subr.bf16.mxu0 0
    %1247 = vmatpush1.bf16.msra.mxu0 0
    %1248 = vmatprep.subr.bf16.mxu0 0
    %1249 = vmatpush1.bf16.msra.mxu0 0
    %1250 = vmatprep.subr.bf16.mxu0 0
    %1251 = vmatpush1.bf16.msra.mxu0 0
    %1252 = vmatprep.subr.bf16.mxu0 0
    %1253 = vmatpush1.bf16.msra.mxu0 0
    %1254 = vmatprep.subr.bf16.mxu0 0
    %1255 = vmatpush1.bf16.msra.mxu0 0
    %1256 = vmatprep.subr.bf16.mxu0 0
    %1257 = vmatpush1.bf16.msra.mxu0 0
    %1258 = vmatprep.mubr.bf16.mxu0 0
    %1259 = vmatmul.mubr.bf16.gmra.mrb[0].mxu0 %v1203
    %v1260 = vpop.f32.mrb[0].mxu0
    %v1261 = vadd.f32 0.0, %v1260
    %v1262 = vpop.f32.mrb[0].mxu0
    %v1263 = vadd.f32 0.0, %v1262
    %v1264 = vpop.f32.mrb[0].mxu0
    %v1265 = vadd.f32 0.0, %v1264
    %v1266 = vpop.f32.mrb[0].mxu0
    %v1267 = vadd.f32 0.0, %v1266
    %1268 = vmatprep.mubr.bf16.mxu0 0
    %1269 = vmatmul.mubr.bf16.gmra.mrb[0].mxu0 %v1206
    %v1270 = vpop.f32.mrb[0].mxu0
    %v1271 = vadd.f32 0.0, %v1270
    %v1272 = vpop.f32.mrb[0].mxu0
    %v1273 = vadd.f32 0.0, %v1272
    %v1274 = vpop.f32.mrb[0].mxu0
    %v1275 = vadd.f32 0.0, %v1274
    %v1276 = vpop.f32.mrb[0].mxu0
    %v1277 = vadd.f32 0.0, %v1276
    %1278 = vmatprep.mubr.bf16.mxu0 0
    %1279 = vmatmul.mubr.bf16.gmra.mrb[0].mxu0 %v1209
    %v1280 = vpop.f32.mrb[0].mxu0
    %v1281 = vadd.f32 0.0, %v1280
    %v1282 = vpop.f32.mrb[0].mxu0
    %v1283 = vadd.f32 0.0, %v1282
    %v1284 = vpop.f32.mrb[0].mxu0
    %v1285 = vadd.f32 0.0, %v1284
    %v1286 = vpop.f32.mrb[0].mxu0
    %v1287 = vadd.f32 0.0, %v1286
    %1288 = vmatprep.mubr.bf16.mxu0 0
    %1289 = vmatmul.mubr.bf16.gmra.mrb[0].mxu0 %v1212
    %v1290 = vpop.f32.mrb[0].mxu0
    %v1291 = vadd.f32 0.0, %v1290
    %v1292 = vpop.f32.mrb[0].mxu0
    %v1293 = vadd.f32 0.0, %v1292
    %v1294 = vpop.f32.mrb[0].mxu0
    %v1295 = vadd.f32 0.0, %v1294
    %v1296 = vpop.f32.mrb[0].mxu0
    %v1297 = vadd.f32 0.0, %v1296
    %1298 = vmatprep.mubr.bf16.mxu0 0
    %1299 = vmatmul.mubr.bf16.gmra.mrb[0].mxu0 %v1215
    %v1300 = vpop.f32.mrb[0].mxu0
    %v1301 = vadd.f32 0.0, %v1300
    %v1302 = vpop.f32.mrb[0].mxu0
    %v1303 = vadd.f32 0.0, %v1302
    %v1304 = vpop.f32.mrb[0].mxu0
    %v1305 = vadd.f32 0.0, %v1304
    %v1306 = vpop.f32.mrb[0].mxu0
    %v1307 = vadd.f32 0.0, %v1306
    %1308 = vmatprep.mubr.bf16.mxu0 0
    %1309 = vmatmul.mubr.bf16.gmra.mrb[0].mxu0 %v1218
    %v1310 = vpop.f32.mrb[0].mxu0
    %v1311 = vadd.f32 0.0, %v1310
    %v1312 = vpop.f32.mrb[0].mxu0
    %v1313 = vadd.f32 0.0, %v1312
    %v1314 = vpop.f32.mrb[0].mxu0
    %v1315 = vadd.f32 0.0, %v1314
    %v1316 = vpop.f32.mrb[0].mxu0
    %v1317 = vadd.f32 0.0, %v1316
    %1318 = vmatprep.mubr.bf16.mxu0 0
    %1319 = vmatmul.mubr.bf16.gmra.mrb[0].mxu0 %v1221
    %v1320 = vpop.f32.mrb[0].mxu0
    %v1321 = vadd.f32 0.0, %v1320
    %v1322 = vpop.f32.mrb[0].mxu0
    %v1323 = vadd.f32 0.0, %v1322
    %v1324 = vpop.f32.mrb[0].mxu0
    %v1325 = vadd.f32 0.0, %v1324
    %v1326 = vpop.f32.mrb[0].mxu0
    %v1327 = vadd.f32 0.0, %v1326
    %1328 = vmatprep.mubr.bf16.mxu0 0
    %1329 = vmatmul.mubr.bf16.gmra.mrb[0].mxu0 %v1224
    %v1330 = vpop.f32.mrb[0].mxu0
    %v1331 = vadd.f32 0.0, %v1330
    %v1332 = vpop.f32.mrb[0].mxu0
    %v1333 = vadd.f32 0.0, %v1332
    %v1334 = vpop.f32.mrb[0].mxu0
    %v1335 = vadd.f32 0.0, %v1334
    %v1336 = vpop.f32.mrb[0].mxu0
    %v1337 = vadd.f32 0.0, %v1336
    %1338 = vdwg.mxu0
    %1339 = vmatprep.subr.bf16.mxu0 %v1189
    %1340 = vmatpush1.bf16.msra.mxu0 %v1188
    %1341 = vmatprep.subr.bf16.mxu0 %v1193
    %1342 = vmatpush1.bf16.msra.mxu0 %v1192
    %1343 = vmatprep.subr.bf16.mxu0 0
    %1344 = vmatpush1.bf16.msra.mxu0 0
    %1345 = vmatprep.subr.bf16.mxu0 0
    %1346 = vmatpush1.bf16.msra.mxu0 0
    %1347 = vmatprep.subr.bf16.mxu0 0
    %1348 = vmatpush1.bf16.msra.mxu0 0
    %1349 = vmatprep.subr.bf16.mxu0 0
    %1350 = vmatpush1.bf16.msra.mxu0 0
    %1351 = vmatprep.subr.bf16.mxu0 0
    %1352 = vmatpush1.bf16.msra.mxu0 0
    %1353 = vmatprep.subr.bf16.mxu0 0
    %1354 = vmatpush1.bf16.msra.mxu0 0
    %1355 = vmatprep.subr.bf16.mxu0 0
    %1356 = vmatpush1.bf16.msra.mxu0 0
    %1357 = vmatprep.subr.bf16.mxu0 0
    %1358 = vmatpush1.bf16.msra.mxu0 0
    %1359 = vmatprep.subr.bf16.mxu0 0
    %1360 = vmatpush1.bf16.msra.mxu0 0
    %1361 = vmatprep.subr.bf16.mxu0 0
    %1362 = vmatpush1.bf16.msra.mxu0 0
    %1363 = vmatprep.subr.bf16.mxu0 0
    %1364 = vmatpush1.bf16.msra.mxu0 0
    %1365 = vmatprep.subr.bf16.mxu0 0
    %1366 = vmatpush1.bf16.msra.mxu0 0
    %1367 = vmatprep.subr.bf16.mxu0 0
    %1368 = vmatpush1.bf16.msra.mxu0 0
    %1369 = vmatprep.subr.bf16.mxu0 0
    %1370 = vmatpush1.bf16.msra.mxu0 0
    %1371 = vmatprep.mubr.bf16.mxu0 0
    %1372 = vmatmul.mubr.bf16.gmra.mrb[0].mxu0 %v1203
    %v1373 = vpop.f32.mrb[0].mxu0
    %v1374 = vadd.f32 0.0, %v1373
    %v1375 = vpop.f32.mrb[0].mxu0
    %v1376 = vadd.f32 0.0, %v1375
    %v1377 = vpop.f32.mrb[0].mxu0
    %v1378 = vadd.f32 0.0, %v1377
    %v1379 = vpop.f32.mrb[0].mxu0
    %v1380 = vadd.f32 0.0, %v1379
    %1381 = vmatprep.mubr.bf16.mxu0 0
    %1382 = vmatmul.mubr.bf16.gmra.mrb[0].mxu0 %v1206
    %v1383 = vpop.f32.mrb[0].mxu0
    %v1384 = vadd.f32 0.0, %v1383
    %v1385 = vpop.f32.mrb[0].mxu0
    %v1386 = vadd.f32 0.0, %v1385
    %v1387 = vpop.f32.mrb[0].mxu0
    %v1388 = vadd.f32 0.0, %v1387
    %v1389 = vpop.f32.mrb[0].mxu0
    %v1390 = vadd.f32 0.0, %v1389
    %1391 = vmatprep.mubr.bf16.mxu0 0
    %1392 = vmatmul.mubr.bf16.gmra.mrb[0].mxu0 %v1209
    %v1393 = vpop.f32.mrb[0].mxu0
    %v1394 = vadd.f32 0.0, %v1393
    %v1395 = vpop.f32.mrb[0].mxu0
    %v1396 = vadd.f32 0.0, %v1395
    %v1397 = vpop.f32.mrb[0].mxu0
    %v1398 = vadd.f32 0.0, %v1397
    %v1399 = vpop.f32.mrb[0].mxu0
    %v1400 = vadd.f32 0.0, %v1399
    %1401 = vmatprep.mubr.bf16.mxu0 0
    %1402 = vmatmul.mubr.bf16.gmra.mrb[0].mxu0 %v1212
    %v1403 = vpop.f32.mrb[0].mxu0
    %v1404 = vadd.f32 0.0, %v1403
    %v1405 = vpop.f32.mrb[0].mxu0
    %v1406 = vadd.f32 0.0, %v1405
    %v1407 = vpop.f32.mrb[0].mxu0
    %v1408 = vadd.f32 0.0, %v1407
    %v1409 = vpop.f32.mrb[0].mxu0
    %v1410 = vadd.f32 0.0, %v1409
    %1411 = vmatprep.mubr.bf16.mxu0 0
    %1412 = vmatmul.mubr.bf16.gmra.mrb[0].mxu0 %v1215
    %v1413 = vpop.f32.mrb[0].mxu0
    %v1414 = vadd.f32 0.0, %v1413
    %v1415 = vpop.f32.mrb[0].mxu0
    %v1416 = vadd.f32 0.0, %v1415
    %v1417 = vpop.f32.mrb[0].mxu0
    %v1418 = vadd.f32 0.0, %v1417
    %v1419 = vpop.f32.mrb[0].mxu0
    %v1420 = vadd.f32 0.0, %v1419
    %1421 = vmatprep.mubr.bf16.mxu0 0
    %1422 = vmatmul.mubr.bf16.gmra.mrb[0].mxu0 %v1218
    %v1423 = vpop.f32.mrb[0].mxu0
    %v1424 = vadd.f32 0.0, %v1423
    %v1425 = vpop.f32.mrb[0].mxu0
    %v1426 = vadd.f32 0.0, %v1425
    %v1427 = vpop.f32.mrb[0].mxu0
    %v1428 = vadd.f32 0.0, %v1427
    %v1429 = vpop.f32.mrb[0].mxu0
    %v1430 = vadd.f32 0.0, %v1429
    %1431 = vmatprep.mubr.bf16.mxu0 0
    %1432 = vmatmul.mubr.bf16.gmra.mrb[0].mxu0 %v1221
    %v1433 = vpop.f32.mrb[0].mxu0
    %v1434 = vadd.f32 0.0, %v1433
    %v1435 = vpop.f32.mrb[0].mxu0
    %v1436 = vadd.f32 0.0, %v1435
    %v1437 = vpop.f32.mrb[0].mxu0
    %v1438 = vadd.f32 0.0, %v1437
    %v1439 = vpop.f32.mrb[0].mxu0
    %v1440 = vadd.f32 0.0, %v1439
    %1441 = vmatprep.mubr.bf16.mxu0 0
    %1442 = vmatmul.mubr.bf16.gmra.mrb[0].mxu0 %v1224
    %v1443 = vpop.f32.mrb[0].mxu0
    %v1444 = vadd.f32 0.0, %v1443
    %v1445 = vpop.f32.mrb[0].mxu0
    %v1446 = vadd.f32 0.0, %v1445
    %v1447 = vpop.f32.mrb[0].mxu0
    %v1448 = vadd.f32 0.0, %v1447
    %v1449 = vpop.f32.mrb[0].mxu0
    %v1450 = vadd.f32 0.0, %v1449
    %1451 = vdwg.mxu0
    %v1452 = vadd.f32 %v921, %v1261
    %v1453 = vadd.f32 %v923, %v1263
    %v1454 = vadd.f32 %v1034, %v1374
    %v1455 = vadd.f32 %v1036, %v1376
    %v1456 = vadd.f32 %v925, %v1265
    %v1457 = vadd.f32 %v927, %v1267
    %v1458 = vadd.f32 %v1038, %v1378
    %v1459 = vadd.f32 %v1040, %v1380
    %v1460 = vadd.f32 %v931, %v1271
    %v1461 = vadd.f32 %v933, %v1273
    %v1462 = vadd.f32 %v1044, %v1384
    %v1463 = vadd.f32 %v1046, %v1386
    %v1464 = vadd.f32 %v935, %v1275
    %v1465 = vadd.f32 %v937, %v1277
    %v1466 = vadd.f32 %v1048, %v1388
    %v1467 = vadd.f32 %v1050, %v1390
    %v1468 = vadd.f32 %v941, %v1281
    %v1469 = vadd.f32 %v943, %v1283
    %v1470 = vadd.f32 %v1054, %v1394
    %v1471 = vadd.f32 %v1056, %v1396
    %v1472 = vadd.f32 %v945, %v1285
    %v1473 = vadd.f32 %v947, %v1287
    %v1474 = vadd.f32 %v1058, %v1398
    %v1475 = vadd.f32 %v1060, %v1400
    %v1476 = vadd.f32 %v951, %v1291
    %v1477 = vadd.f32 %v953, %v1293
    %v1478 = vadd.f32 %v1064, %v1404
    %v1479 = vadd.f32 %v1066, %v1406
    %v1480 = vadd.f32 %v955, %v1295
    %v1481 = vadd.f32 %v957, %v1297
    %v1482 = vadd.f32 %v1068, %v1408
    %v1483 = vadd.f32 %v1070, %v1410
    %v1484 = vadd.f32 %v961, %v1301
    %v1485 = vadd.f32 %v963, %v1303
    %v1486 = vadd.f32 %v1074, %v1414
    %v1487 = vadd.f32 %v1076, %v1416
    %v1488 = vadd.f32 %v965, %v1305
    %v1489 = vadd.f32 %v967, %v1307
    %v1490 = vadd.f32 %v1078, %v1418
    %v1491 = vadd.f32 %v1080, %v1420
    %v1492 = vadd.f32 %v971, %v1311
    %v1493 = vadd.f32 %v973, %v1313
    %v1494 = vadd.f32 %v1084, %v1424
    %v1495 = vadd.f32 %v1086, %v1426
    %v1496 = vadd.f32 %v975, %v1315
    %v1497 = vadd.f32 %v977, %v1317
    %v1498 = vadd.f32 %v1088, %v1428
    %v1499 = vadd.f32 %v1090, %v1430
    %v1500 = vadd.f32 %v981, %v1321
    %v1501 = vadd.f32 %v983, %v1323
    %v1502 = vadd.f32 %v1094, %v1434
    %v1503 = vadd.f32 %v1096, %v1436
    %v1504 = vadd.f32 %v985, %v1325
    %v1505 = vadd.f32 %v987, %v1327
    %v1506 = vadd.f32 %v1098, %v1438
    %v1507 = vadd.f32 %v1100, %v1440
    %v1508 = vadd.f32 %v991, %v1331
    %v1509 = vadd.f32 %v993, %v1333
    %v1510 = vadd.f32 %v1104, %v1444
    %v1511 = vadd.f32 %v1106, %v1446
    %v1512 = vadd.f32 %v995, %v1335
    %v1513 = vadd.f32 %v997, %v1337
    %v1514 = vadd.f32 %v1108, %v1448
    %v1515 = vadd.f32 %v1110, %v1450
    %v1516 = vrot.slane %v401, 3
    %v1517 = vrot.slane %v404, 3
    %v1518 = vrot.slane %v409, 3
    %v1519 = vrot.slane %v412, 3
    %v1520 = vrot.slane %v417, 3
    %v1521 = vrot.slane %v420, 3
    %v1522 = vrot.slane %v425, 3
    %v1523 = vrot.slane %v428, 3
    %v1524 = vrot.slane %v433, 3
    %v1525 = vrot.slane %v436, 3
    %v1526 = vrot.slane %v441, 3
    %v1527 = vrot.slane %v444, 3
    %v1528 = vrot.slane %v449, 3
    %v1529 = vrot.slane %v452, 3
    %v1530 = vrot.slane %v457, 3
    %v1531 = vrot.slane %v460, 3
    %vm1532 = vcmp.lt.s32.totalorder %v496, 5
    %v1533 = vsel %vm1532, %v1530, %v1531
    %v1534 = vsel %vm1532, %v1529, %v1530
    %v1535 = vsel %vm1532, %v1528, %v1529
    %v1536 = vsel %vm1532, %v1527, %v1528
    %v1537 = vsel %vm1532, %v1526, %v1527
    %v1538 = vsel %vm1532, %v1525, %v1526
    %v1539 = vsel %vm1532, %v1524, %v1525
    %v1540 = vsel %vm1532, %v1523, %v1524
    %v1541 = vsel %vm1532, %v1522, %v1523
    %v1542 = vsel %vm1532, %v1521, %v1522
    %v1543 = vsel %vm1532, %v1520, %v1521
    %v1544 = vsel %vm1532, %v1519, %v1520
    %v1545 = vsel %vm1532, %v1518, %v1519
    %v1546 = vsel %vm1532, %v1517, %v1518
    %v1547 = vsel %vm1532, %v1516, %v1517
    %v1548 = vsel %vm1532, %v1531, %v1516
    %v1549 = vpack.c.bf16 %v1546, %v1547
    %v1550 = vpack.c.bf16 %v1544, %v1545
    %v1551 = vpack.c.bf16 %v1542, %v1543
    %v1552 = vpack.c.bf16 %v1540, %v1541
    %v1553 = vpack.c.bf16 %v1538, %v1539
    %v1554 = vpack.c.bf16 %v1536, %v1537
    %v1555 = vpack.c.bf16 %v1534, %v1535
    %v1556 = vpack.c.bf16 %v1548, %v1533
    %s1557 = scalar_lea.vmem [#allocation2], 192
    %v1558 = vld [vmem:[%s1557] sm:$0xff]
    %v1559 = vld [vmem:[%s1557 + $0x8] sm:$0xff]
    %v1560 = vld [vmem:[%s1557 + $0x10] sm:$0xff]
    %v1561 = vld [vmem:[%s1557 + $0x18] sm:$0xff]
    %v1562 = vld [vmem:[%s1557 + $0x20] sm:$0xff]
    %v1563 = vld [vmem:[%s1557 + $0x28] sm:$0xff]
    %v1564 = vld [vmem:[%s1557 + $0x30] sm:$0xff]
    %v1565 = vld [vmem:[%s1557 + $0x38] sm:$0xff]
    %v1574 = vunpack.c.l.b16 %v1558
    %v1575 = vunpack.c.h.b16 %v1558
    %v1576 = vunpack.c.l.b16 %v1559
    %v1577 = vunpack.c.h.b16 %v1559
    %v1578 = vunpack.c.l.b16 %v1560
    %v1579 = vunpack.c.h.b16 %v1560
    %v1580 = vunpack.c.l.b16 %v1561
    %v1581 = vunpack.c.h.b16 %v1561
    %v1582 = vunpack.c.l.b16 %v1562
    %v1583 = vunpack.c.h.b16 %v1562
    %v1584 = vunpack.c.l.b16 %v1563
    %v1585 = vunpack.c.h.b16 %v1563
    %v1586 = vunpack.c.l.b16 %v1564
    %v1587 = vunpack.c.h.b16 %v1564
    %v1588 = vunpack.c.l.b16 %v1565
    %v1589 = vunpack.c.h.b16 %v1565
    %v1590 = vpack.c.b16 %v1578, %v1574
    %v1591 = vpack.c.b16 %v1579, %v1575
    %v1592 = vpack.c.b16 %v1580, %v1576
    %v1593 = vpack.c.b16 %v1581, %v1577
    %v1594 = vpack.c.b16 %v1586, %v1582
    %v1595 = vpack.c.b16 %v1587, %v1583
    %v1596 = vpack.c.b16 %v1588, %v1584
    %v1597 = vpack.c.b16 %v1589, %v1585
    %v1607 = vsel %vm571, %v1549, 0
    %v1610 = vsel %vm571, %v1550, 0
    %v1613 = vsel %vm571, %v1551, 0
    %v1616 = vsel %vm571, %v1552, 0
    %v1619 = vsel %vm571, %v1553, 0
    %v1622 = vsel %vm571, %v1554, 0
    %v1625 = vsel %vm571, %v1555, 0
    %v1628 = vsel %vm571, %v1556, 0
    %1630 = vmatprep.subr.bf16.mxu0 %v1591
    %1631 = vmatpush1.bf16.msra.mxu0 %v1590
    %1632 = vmatprep.subr.bf16.mxu0 %v1595
    %1633 = vmatpush1.bf16.msra.mxu0 %v1594
    %1634 = vmatprep.subr.bf16.mxu0 0
    %1635 = vmatpush1.bf16.msra.mxu0 0
    %1636 = vmatprep.subr.bf16.mxu0 0
    %1637 = vmatpush1.bf16.msra.mxu0 0
    %1638 = vmatprep.subr.bf16.mxu0 0
    %1639 = vmatpush1.bf16.msra.mxu0 0
    %1640 = vmatprep.subr.bf16.mxu0 0
    %1641 = vmatpush1.bf16.msra.mxu0 0
    %1642 = vmatprep.subr.bf16.mxu0 0
    %1643 = vmatpush1.bf16.msra.mxu0 0
    %1644 = vmatprep.subr.bf16.mxu0 0
    %1645 = vmatpush1.bf16.msra.mxu0 0
    %1646 = vmatprep.subr.bf16.mxu0 0
    %1647 = vmatpush1.bf16.msra.mxu0 0
    %1648 = vmatprep.subr.bf16.mxu0 0
    %1649 = vmatpush1.bf16.msra.mxu0 0
    %1650 = vmatprep.subr.bf16.mxu0 0
    %1651 = vmatpush1.bf16.msra.mxu0 0
    %1652 = vmatprep.subr.bf16.mxu0 0
    %1653 = vmatpush1.bf16.msra.mxu0 0
    %1654 = vmatprep.subr.bf16.mxu0 0
    %1655 = vmatpush1.bf16.msra.mxu0 0
    %1656 = vmatprep.subr.bf16.mxu0 0
    %1657 = vmatpush1.bf16.msra.mxu0 0
    %1658 = vmatprep.subr.bf16.mxu0 0
    %1659 = vmatpush1.bf16.msra.mxu0 0
    %1660 = vmatprep.subr.bf16.mxu0 0
    %1661 = vmatpush1.bf16.msra.mxu0 0
    %1662 = vmatprep.mubr.bf16.mxu0 0
    %1663 = vmatmul.mubr.bf16.gmra.mrb[0].mxu0 %v1607
    %v1664 = vpop.f32.mrb[0].mxu0
    %v1665 = vadd.f32 0.0, %v1664
    %v1666 = vpop.f32.mrb[0].mxu0
    %v1667 = vadd.f32 0.0, %v1666
    %v1668 = vpop.f32.mrb[0].mxu0
    %v1669 = vadd.f32 0.0, %v1668
    %v1670 = vpop.f32.mrb[0].mxu0
    %v1671 = vadd.f32 0.0, %v1670
    %1672 = vmatprep.mubr.bf16.mxu0 0
    %1673 = vmatmul.mubr.bf16.gmra.mrb[0].mxu0 %v1610
    %v1674 = vpop.f32.mrb[0].mxu0
    %v1675 = vadd.f32 0.0, %v1674
    %v1676 = vpop.f32.mrb[0].mxu0
    %v1677 = vadd.f32 0.0, %v1676
    %v1678 = vpop.f32.mrb[0].mxu0
    %v1679 = vadd.f32 0.0, %v1678
    %v1680 = vpop.f32.mrb[0].mxu0
    %v1681 = vadd.f32 0.0, %v1680
    %1682 = vmatprep.mubr.bf16.mxu0 0
    %1683 = vmatmul.mubr.bf16.gmra.mrb[0].mxu0 %v1613
    %v1684 = vpop.f32.mrb[0].mxu0
    %v1685 = vadd.f32 0.0, %v1684
    %v1686 = vpop.f32.mrb[0].mxu0
    %v1687 = vadd.f32 0.0, %v1686
    %v1688 = vpop.f32.mrb[0].mxu0
    %v1689 = vadd.f32 0.0, %v1688
    %v1690 = vpop.f32.mrb[0].mxu0
    %v1691 = vadd.f32 0.0, %v1690
    %1692 = vmatprep.mubr.bf16.mxu0 0
    %1693 = vmatmul.mubr.bf16.gmra.mrb[0].mxu0 %v1616
    %v1694 = vpop.f32.mrb[0].mxu0
    %v1695 = vadd.f32 0.0, %v1694
    %v1696 = vpop.f32.mrb[0].mxu0
    %v1697 = vadd.f32 0.0, %v1696
    %v1698 = vpop.f32.mrb[0].mxu0
    %v1699 = vadd.f32 0.0, %v1698
    %v1700 = vpop.f32.mrb[0].mxu0
    %v1701 = vadd.f32 0.0, %v1700
    %1702 = vmatprep.mubr.bf16.mxu0 0
    %1703 = vmatmul.mubr.bf16.gmra.mrb[0].mxu0 %v1619
    %v1704 = vpop.f32.mrb[0].mxu0
    %v1705 = vadd.f32 0.0, %v1704
    %v1706 = vpop.f32.mrb[0].mxu0
    %v1707 = vadd.f32 0.0, %v1706
    %v1708 = vpop.f32.mrb[0].mxu0
    %v1709 = vadd.f32 0.0, %v1708
    %v1710 = vpop.f32.mrb[0].mxu0
    %v1711 = vadd.f32 0.0, %v1710
    %1712 = vmatprep.mubr.bf16.mxu0 0
    %1713 = vmatmul.mubr.bf16.gmra.mrb[0].mxu0 %v1622
    %v1714 = vpop.f32.mrb[0].mxu0
    %v1715 = vadd.f32 0.0, %v1714
    %v1716 = vpop.f32.mrb[0].mxu0
    %v1717 = vadd.f32 0.0, %v1716
    %v1718 = vpop.f32.mrb[0].mxu0
    %v1719 = vadd.f32 0.0, %v1718
    %v1720 = vpop.f32.mrb[0].mxu0
    %v1721 = vadd.f32 0.0, %v1720
    %1722 = vmatprep.mubr.bf16.mxu0 0
    %1723 = vmatmul.mubr.bf16.gmra.mrb[0].mxu0 %v1625
    %v1724 = vpop.f32.mrb[0].mxu0
    %v1725 = vadd.f32 0.0, %v1724
    %v1726 = vpop.f32.mrb[0].mxu0
    %v1727 = vadd.f32 0.0, %v1726
    %v1728 = vpop.f32.mrb[0].mxu0
    %v1729 = vadd.f32 0.0, %v1728
    %v1730 = vpop.f32.mrb[0].mxu0
    %v1731 = vadd.f32 0.0, %v1730
    %1732 = vmatprep.mubr.bf16.mxu0 0
    %1733 = vmatmul.mubr.bf16.gmra.mrb[0].mxu0 %v1628
    %v1734 = vpop.f32.mrb[0].mxu0
    %v1735 = vadd.f32 0.0, %v1734
    %v1736 = vpop.f32.mrb[0].mxu0
    %v1737 = vadd.f32 0.0, %v1736
    %v1738 = vpop.f32.mrb[0].mxu0
    %v1739 = vadd.f32 0.0, %v1738
    %v1740 = vpop.f32.mrb[0].mxu0
    %v1741 = vadd.f32 0.0, %v1740
    %1742 = vdwg.mxu0
    %1743 = vmatprep.subr.bf16.mxu0 %v1593
    %1744 = vmatpush1.bf16.msra.mxu0 %v1592
    %1745 = vmatprep.subr.bf16.mxu0 %v1597
    %1746 = vmatpush1.bf16.msra.mxu0 %v1596
    %1747 = vmatprep.subr.bf16.mxu0 0
    %1748 = vmatpush1.bf16.msra.mxu0 0
    %1749 = vmatprep.subr.bf16.mxu0 0
    %1750 = vmatpush1.bf16.msra.mxu0 0
    %1751 = vmatprep.subr.bf16.mxu0 0
    %1752 = vmatpush1.bf16.msra.mxu0 0
    %1753 = vmatprep.subr.bf16.mxu0 0
    %1754 = vmatpush1.bf16.msra.mxu0 0
    %1755 = vmatprep.subr.bf16.mxu0 0
    %1756 = vmatpush1.bf16.msra.mxu0 0
    %1757 = vmatprep.subr.bf16.mxu0 0
    %1758 = vmatpush1.bf16.msra.mxu0 0
    %1759 = vmatprep.subr.bf16.mxu0 0
    %1760 = vmatpush1.bf16.msra.mxu0 0
    %1761 = vmatprep.subr.bf16.mxu0 0
    %1762 = vmatpush1.bf16.msra.mxu0 0
    %1763 = vmatprep.subr.bf16.mxu0 0
    %1764 = vmatpush1.bf16.msra.mxu0 0
    %1765 = vmatprep.subr.bf16.mxu0 0
    %1766 = vmatpush1.bf16.msra.mxu0 0
    %1767 = vmatprep.subr.bf16.mxu0 0
    %1768 = vmatpush1.bf16.msra.mxu0 0
    %1769 = vmatprep.subr.bf16.mxu0 0
    %1770 = vmatpush1.bf16.msra.mxu0 0
    %1771 = vmatprep.subr.bf16.mxu0 0
    %1772 = vmatpush1.bf16.msra.mxu0 0
    %1773 = vmatprep.subr.bf16.mxu0 0
    %1774 = vmatpush1.bf16.msra.mxu0 0
    %1775 = vmatprep.mubr.bf16.mxu0 0
    %1776 = vmatmul.mubr.bf16.gmra.mrb[0].mxu0 %v1607
    %v1777 = vpop.f32.mrb[0].mxu0
    %v1778 = vadd.f32 0.0, %v1777
    %v1779 = vpop.f32.mrb[0].mxu0
    %v1780 = vadd.f32 0.0, %v1779
    %v1781 = vpop.f32.mrb[0].mxu0
    %v1782 = vadd.f32 0.0, %v1781
    %v1783 = vpop.f32.mrb[0].mxu0
    %v1784 = vadd.f32 0.0, %v1783
    %1785 = vmatprep.mubr.bf16.mxu0 0
    %1786 = vmatmul.mubr.bf16.gmra.mrb[0].mxu0 %v1610
    %v1787 = vpop.f32.mrb[0].mxu0
    %v1788 = vadd.f32 0.0, %v1787
    %v1789 = vpop.f32.mrb[0].mxu0
    %v1790 = vadd.f32 0.0, %v1789
    %v1791 = vpop.f32.mrb[0].mxu0
    %v1792 = vadd.f32 0.0, %v1791
    %v1793 = vpop.f32.mrb[0].mxu0
    %v1794 = vadd.f32 0.0, %v1793
    %1795 = vmatprep.mubr.bf16.mxu0 0
    %1796 = vmatmul.mubr.bf16.gmra.mrb[0].mxu0 %v1613
    %v1797 = vpop.f32.mrb[0].mxu0
    %v1798 = vadd.f32 0.0, %v1797
    %v1799 = vpop.f32.mrb[0].mxu0
    %v1800 = vadd.f32 0.0, %v1799
    %v1801 = vpop.f32.mrb[0].mxu0
    %v1802 = vadd.f32 0.0, %v1801
    %v1803 = vpop.f32.mrb[0].mxu0
    %v1804 = vadd.f32 0.0, %v1803
    %1805 = vmatprep.mubr.bf16.mxu0 0
    %1806 = vmatmul.mubr.bf16.gmra.mrb[0].mxu0 %v1616
    %v1807 = vpop.f32.mrb[0].mxu0
    %v1808 = vadd.f32 0.0, %v1807
    %v1809 = vpop.f32.mrb[0].mxu0
    %v1810 = vadd.f32 0.0, %v1809
    %v1811 = vpop.f32.mrb[0].mxu0
    %v1812 = vadd.f32 0.0, %v1811
    %v1813 = vpop.f32.mrb[0].mxu0
    %v1814 = vadd.f32 0.0, %v1813
    %1815 = vmatprep.mubr.bf16.mxu0 0
    %1816 = vmatmul.mubr.bf16.gmra.mrb[0].mxu0 %v1619
    %v1817 = vpop.f32.mrb[0].mxu0
    %v1818 = vadd.f32 0.0, %v1817
    %v1819 = vpop.f32.mrb[0].mxu0
    %v1820 = vadd.f32 0.0, %v1819
    %v1821 = vpop.f32.mrb[0].mxu0
    %v1822 = vadd.f32 0.0, %v1821
    %v1823 = vpop.f32.mrb[0].mxu0
    %v1824 = vadd.f32 0.0, %v1823
    %1825 = vmatprep.mubr.bf16.mxu0 0
    %1826 = vmatmul.mubr.bf16.gmra.mrb[0].mxu0 %v1622
    %v1827 = vpop.f32.mrb[0].mxu0
    %v1828 = vadd.f32 0.0, %v1827
    %v1829 = vpop.f32.mrb[0].mxu0
    %v1830 = vadd.f32 0.0, %v1829
    %v1831 = vpop.f32.mrb[0].mxu0
    %v1832 = vadd.f32 0.0, %v1831
    %v1833 = vpop.f32.mrb[0].mxu0
    %v1834 = vadd.f32 0.0, %v1833
    %1835 = vmatprep.mubr.bf16.mxu0 0
    %1836 = vmatmul.mubr.bf16.gmra.mrb[0].mxu0 %v1625
    %v1837 = vpop.f32.mrb[0].mxu0
    %v1838 = vadd.f32 0.0, %v1837
    %v1839 = vpop.f32.mrb[0].mxu0
    %v1840 = vadd.f32 0.0, %v1839
    %v1841 = vpop.f32.mrb[0].mxu0
    %v1842 = vadd.f32 0.0, %v1841
    %v1843 = vpop.f32.mrb[0].mxu0
    %v1844 = vadd.f32 0.0, %v1843
    %1845 = vmatprep.mubr.bf16.mxu0 0
    %1846 = vmatmul.mubr.bf16.gmra.mrb[0].mxu0 %v1628
    %v1847 = vpop.f32.mrb[0].mxu0
    %v1848 = vadd.f32 0.0, %v1847
    %v1849 = vpop.f32.mrb[0].mxu0
    %v1850 = vadd.f32 0.0, %v1849
    %v1851 = vpop.f32.mrb[0].mxu0
    %v1852 = vadd.f32 0.0, %v1851
    %v1853 = vpop.f32.mrb[0].mxu0
    %v1854 = vadd.f32 0.0, %v1853
    %1855 = vdwg.mxu0
    %v1856 = vadd.f32 %v1452, %v1665
    %v1857 = vadd.f32 %v1453, %v1667
    %v1858 = vadd.f32 %v1454, %v1778
    %v1859 = vadd.f32 %v1455, %v1780
    %v1860 = vadd.f32 %v1456, %v1669
    %v1861 = vadd.f32 %v1457, %v1671
    %v1862 = vadd.f32 %v1458, %v1782
    %v1863 = vadd.f32 %v1459, %v1784
    %v1864 = vadd.f32 %v1460, %v1675
    %v1865 = vadd.f32 %v1461, %v1677
    %v1866 = vadd.f32 %v1462, %v1788
    %v1867 = vadd.f32 %v1463, %v1790
    %v1868 = vadd.f32 %v1464, %v1679
    %v1869 = vadd.f32 %v1465, %v1681
    %v1870 = vadd.f32 %v1466, %v1792
    %v1871 = vadd.f32 %v1467, %v1794
    %v1872 = vadd.f32 %v1468, %v1685
    %v1873 = vadd.f32 %v1469, %v1687
    %v1874 = vadd.f32 %v1470, %v1798
    %v1875 = vadd.f32 %v1471, %v1800
    %v1876 = vadd.f32 %v1472, %v1689
    %v1877 = vadd.f32 %v1473, %v1691
    %v1878 = vadd.f32 %v1474, %v1802
    %v1879 = vadd.f32 %v1475, %v1804
    %v1880 = vadd.f32 %v1476, %v1695
    %v1881 = vadd.f32 %v1477, %v1697
    %v1882 = vadd.f32 %v1478, %v1808
    %v1883 = vadd.f32 %v1479, %v1810
    %v1884 = vadd.f32 %v1480, %v1699
    %v1885 = vadd.f32 %v1481, %v1701
    %v1886 = vadd.f32 %v1482, %v1812
    %v1887 = vadd.f32 %v1483, %v1814
    %v1888 = vadd.f32 %v1484, %v1705
    %v1889 = vadd.f32 %v1485, %v1707
    %v1890 = vadd.f32 %v1486, %v1818
    %v1891 = vadd.f32 %v1487, %v1820
    %v1892 = vadd.f32 %v1488, %v1709
    %v1893 = vadd.f32 %v1489, %v1711
    %v1894 = vadd.f32 %v1490, %v1822
    %v1895 = vadd.f32 %v1491, %v1824
    %v1896 = vadd.f32 %v1492, %v1715
    %v1897 = vadd.f32 %v1493, %v1717
    %v1898 = vadd.f32 %v1494, %v1828
    %v1899 = vadd.f32 %v1495, %v1830
    %v1900 = vadd.f32 %v1496, %v1719
    %v1901 = vadd.f32 %v1497, %v1721
    %v1902 = vadd.f32 %v1498, %v1832
    %v1903 = vadd.f32 %v1499, %v1834
    %v1904 = vadd.f32 %v1500, %v1725
    %v1905 = vadd.f32 %v1501, %v1727
    %v1906 = vadd.f32 %v1502, %v1838
    %v1907 = vadd.f32 %v1503, %v1840
    %v1908 = vadd.f32 %v1504, %v1729
    %v1909 = vadd.f32 %v1505, %v1731
    %v1910 = vadd.f32 %v1506, %v1842
    %v1911 = vadd.f32 %v1507, %v1844
    %v1912 = vadd.f32 %v1508, %v1735
    %v1913 = vadd.f32 %v1509, %v1737
    %v1914 = vadd.f32 %v1510, %v1848
    %v1915 = vadd.f32 %v1511, %v1850
    %v1916 = vadd.f32 %v1512, %v1739
    %v1917 = vadd.f32 %v1513, %v1741
    %v1918 = vadd.f32 %v1514, %v1852
    %v1919 = vadd.f32 %v1515, %v1854
    %v1920 = vrot.slane %v401, 4
    %v1921 = vrot.slane %v404, 4
    %v1922 = vrot.slane %v409, 4
    %v1923 = vrot.slane %v412, 4
    %v1924 = vrot.slane %v417, 4
    %v1925 = vrot.slane %v420, 4
    %v1926 = vrot.slane %v425, 4
    %v1927 = vrot.slane %v428, 4
    %v1928 = vrot.slane %v433, 4
    %v1929 = vrot.slane %v436, 4
    %v1930 = vrot.slane %v441, 4
    %v1931 = vrot.slane %v444, 4
    %v1932 = vrot.slane %v449, 4
    %v1933 = vrot.slane %v452, 4
    %v1934 = vrot.slane %v457, 4
    %v1935 = vrot.slane %v460, 4
    %vm1936 = vcmp.lt.s32.totalorder %v496, 4
    %v1937 = vsel %vm1936, %v1934, %v1935
    %v1938 = vsel %vm1936, %v1933, %v1934
    %v1939 = vsel %vm1936, %v1932, %v1933
    %v1940 = vsel %vm1936, %v1931, %v1932
    %v1941 = vsel %vm1936, %v1930, %v1931
    %v1942 = vsel %vm1936, %v1929, %v1930
    %v1943 = vsel %vm1936, %v1928, %v1929
    %v1944 = vsel %vm1936, %v1927, %v1928
    %v1945 = vsel %vm1936, %v1926, %v1927
    %v1946 = vsel %vm1936, %v1925, %v1926
    %v1947 = vsel %vm1936, %v1924, %v1925
    %v1948 = vsel %vm1936, %v1923, %v1924
    %v1949 = vsel %vm1936, %v1922, %v1923
    %v1950 = vsel %vm1936, %v1921, %v1922
    %v1951 = vsel %vm1936, %v1920, %v1921
    %v1952 = vsel %vm1936, %v1935, %v1920
    %v1953 = vpack.c.bf16 %v1950, %v1951
    %v1954 = vpack.c.bf16 %v1948, %v1949
    %v1955 = vpack.c.bf16 %v1946, %v1947
    %v1956 = vpack.c.bf16 %v1944, %v1945
    %v1957 = vpack.c.bf16 %v1942, %v1943
    %v1958 = vpack.c.bf16 %v1940, %v1941
    %v1959 = vpack.c.bf16 %v1938, %v1939
    %v1960 = vpack.c.bf16 %v1952, %v1937
    %s1961 = scalar_lea.vmem [#allocation2], 256
    %v1962 = vld [vmem:[%s1961] sm:$0xff]
    %v1963 = vld [vmem:[%s1961 + $0x8] sm:$0xff]
    %v1964 = vld [vmem:[%s1961 + $0x10] sm:$0xff]
    %v1965 = vld [vmem:[%s1961 + $0x18] sm:$0xff]
    %v1966 = vld [vmem:[%s1961 + $0x20] sm:$0xff]
    %v1967 = vld [vmem:[%s1961 + $0x28] sm:$0xff]
    %v1968 = vld [vmem:[%s1961 + $0x30] sm:$0xff]
    %v1969 = vld [vmem:[%s1961 + $0x38] sm:$0xff]
    %v1978 = vunpack.c.l.b16 %v1962
    %v1979 = vunpack.c.h.b16 %v1962
    %v1980 = vunpack.c.l.b16 %v1963
    %v1981 = vunpack.c.h.b16 %v1963
    %v1982 = vunpack.c.l.b16 %v1964
    %v1983 = vunpack.c.h.b16 %v1964
    %v1984 = vunpack.c.l.b16 %v1965
    %v1985 = vunpack.c.h.b16 %v1965
    %v1986 = vunpack.c.l.b16 %v1966
    %v1987 = vunpack.c.h.b16 %v1966
    %v1988 = vunpack.c.l.b16 %v1967
    %v1989 = vunpack.c.h.b16 %v1967
    %v1990 = vunpack.c.l.b16 %v1968
    %v1991 = vunpack.c.h.b16 %v1968
    %v1992 = vunpack.c.l.b16 %v1969
    %v1993 = vunpack.c.h.b16 %v1969
    %v1994 = vpack.c.b16 %v1982, %v1978
    %v1995 = vpack.c.b16 %v1983, %v1979
    %v1996 = vpack.c.b16 %v1984, %v1980
    %v1997 = vpack.c.b16 %v1985, %v1981
    %v1998 = vpack.c.b16 %v1990, %v1986
    %v1999 = vpack.c.b16 %v1991, %v1987
    %v2000 = vpack.c.b16 %v1992, %v1988
    %v2001 = vpack.c.b16 %v1993, %v1989
    %v2011 = vsel %vm571, %v1953, 0
    %v2014 = vsel %vm571, %v1954, 0
    %v2017 = vsel %vm571, %v1955, 0
    %v2020 = vsel %vm571, %v1956, 0
    %v2023 = vsel %vm571, %v1957, 0
    %v2026 = vsel %vm571, %v1958, 0
    %v2029 = vsel %vm571, %v1959, 0
    %v2032 = vsel %vm571, %v1960, 0
    %2034 = vmatprep.subr.bf16.mxu0 %v1995
    %2035 = vmatpush1.bf16.msra.mxu0 %v1994
    %2036 = vmatprep.subr.bf16.mxu0 %v1999
    %2037 = vmatpush1.bf16.msra.mxu0 %v1998
    %2038 = vmatprep.subr.bf16.mxu0 0
    %2039 = vmatpush1.bf16.msra.mxu0 0
    %2040 = vmatprep.subr.bf16.mxu0 0
    %2041 = vmatpush1.bf16.msra.mxu0 0
    %2042 = vmatprep.subr.bf16.mxu0 0
    %2043 = vmatpush1.bf16.msra.mxu0 0
    %2044 = vmatprep.subr.bf16.mxu0 0
    %2045 = vmatpush1.bf16.msra.mxu0 0
    %2046 = vmatprep.subr.bf16.mxu0 0
    %2047 = vmatpush1.bf16.msra.mxu0 0
    %2048 = vmatprep.subr.bf16.mxu0 0
    %2049 = vmatpush1.bf16.msra.mxu0 0
    %2050 = vmatprep.subr.bf16.mxu0 0
    %2051 = vmatpush1.bf16.msra.mxu0 0
    %2052 = vmatprep.subr.bf16.mxu0 0
    %2053 = vmatpush1.bf16.msra.mxu0 0
    %2054 = vmatprep.subr.bf16.mxu0 0
    %2055 = vmatpush1.bf16.msra.mxu0 0
    %2056 = vmatprep.subr.bf16.mxu0 0
    %2057 = vmatpush1.bf16.msra.mxu0 0
    %2058 = vmatprep.subr.bf16.mxu0 0
    %2059 = vmatpush1.bf16.msra.mxu0 0
    %2060 = vmatprep.subr.bf16.mxu0 0
    %2061 = vmatpush1.bf16.msra.mxu0 0
    %2062 = vmatprep.subr.bf16.mxu0 0
    %2063 = vmatpush1.bf16.msra.mxu0 0
    %2064 = vmatprep.subr.bf16.mxu0 0
    %2065 = vmatpush1.bf16.msra.mxu0 0
    %2066 = vmatprep.mubr.bf16.mxu0 0
    %2067 = vmatmul.mubr.bf16.gmra.mrb[0].mxu0 %v2011
    %v2068 = vpop.f32.mrb[0].mxu0
    %v2069 = vadd.f32 0.0, %v2068
    %v2070 = vpop.f32.mrb[0].mxu0
    %v2071 = vadd.f32 0.0, %v2070
    %v2072 = vpop.f32.mrb[0].mxu0
    %v2073 = vadd.f32 0.0, %v2072
    %v2074 = vpop.f32.mrb[0].mxu0
    %v2075 = vadd.f32 0.0, %v2074
    %2076 = vmatprep.mubr.bf16.mxu0 0
    %2077 = vmatmul.mubr.bf16.gmra.mrb[0].mxu0 %v2014
    %v2078 = vpop.f32.mrb[0].mxu0
    %v2079 = vadd.f32 0.0, %v2078
    %v2080 = vpop.f32.mrb[0].mxu0
    %v2081 = vadd.f32 0.0, %v2080
    %v2082 = vpop.f32.mrb[0].mxu0
    %v2083 = vadd.f32 0.0, %v2082
    %v2084 = vpop.f32.mrb[0].mxu0
    %v2085 = vadd.f32 0.0, %v2084
    %2086 = vmatprep.mubr.bf16.mxu0 0
    %2087 = vmatmul.mubr.bf16.gmra.mrb[0].mxu0 %v2017
    %v2088 = vpop.f32.mrb[0].mxu0
    %v2089 = vadd.f32 0.0, %v2088
    %v2090 = vpop.f32.mrb[0].mxu0
    %v2091 = vadd.f32 0.0, %v2090
    %v2092 = vpop.f32.mrb[0].mxu0
    %v2093 = vadd.f32 0.0, %v2092
    %v2094 = vpop.f32.mrb[0].mxu0
    %v2095 = vadd.f32 0.0, %v2094
    %2096 = vmatprep.mubr.bf16.mxu0 0
    %2097 = vmatmul.mubr.bf16.gmra.mrb[0].mxu0 %v2020
    %v2098 = vpop.f32.mrb[0].mxu0
    %v2099 = vadd.f32 0.0, %v2098
    %v2100 = vpop.f32.mrb[0].mxu0
    %v2101 = vadd.f32 0.0, %v2100
    %v2102 = vpop.f32.mrb[0].mxu0
    %v2103 = vadd.f32 0.0, %v2102
    %v2104 = vpop.f32.mrb[0].mxu0
    %v2105 = vadd.f32 0.0, %v2104
    %2106 = vmatprep.mubr.bf16.mxu0 0
    %2107 = vmatmul.mubr.bf16.gmra.mrb[0].mxu0 %v2023
    %v2108 = vpop.f32.mrb[0].mxu0
    %v2109 = vadd.f32 0.0, %v2108
    %v2110 = vpop.f32.mrb[0].mxu0
    %v2111 = vadd.f32 0.0, %v2110
    %v2112 = vpop.f32.mrb[0].mxu0
    %v2113 = vadd.f32 0.0, %v2112
    %v2114 = vpop.f32.mrb[0].mxu0
    %v2115 = vadd.f32 0.0, %v2114
    %2116 = vmatprep.mubr.bf16.mxu0 0
    %2117 = vmatmul.mubr.bf16.gmra.mrb[0].mxu0 %v2026
    %v2118 = vpop.f32.mrb[0].mxu0
    %v2119 = vadd.f32 0.0, %v2118
    %v2120 = vpop.f32.mrb[0].mxu0
    %v2121 = vadd.f32 0.0, %v2120
    %v2122 = vpop.f32.mrb[0].mxu0
    %v2123 = vadd.f32 0.0, %v2122
    %v2124 = vpop.f32.mrb[0].mxu0
    %v2125 = vadd.f32 0.0, %v2124
    %2126 = vmatprep.mubr.bf16.mxu0 0
    %2127 = vmatmul.mubr.bf16.gmra.mrb[0].mxu0 %v2029
    %v2128 = vpop.f32.mrb[0].mxu0
    %v2129 = vadd.f32 0.0, %v2128
    %v2130 = vpop.f32.mrb[0].mxu0
    %v2131 = vadd.f32 0.0, %v2130
    %v2132 = vpop.f32.mrb[0].mxu0
    %v2133 = vadd.f32 0.0, %v2132
    %v2134 = vpop.f32.mrb[0].mxu0
    %v2135 = vadd.f32 0.0, %v2134
    %2136 = vmatprep.mubr.bf16.mxu0 0
    %2137 = vmatmul.mubr.bf16.gmra.mrb[0].mxu0 %v2032
    %v2138 = vpop.f32.mrb[0].mxu0
    %v2139 = vadd.f32 0.0, %v2138
    %v2140 = vpop.f32.mrb[0].mxu0
    %v2141 = vadd.f32 0.0, %v2140
    %v2142 = vpop.f32.mrb[0].mxu0
    %v2143 = vadd.f32 0.0, %v2142
    %v2144 = vpop.f32.mrb[0].mxu0
    %v2145 = vadd.f32 0.0, %v2144
    %2146 = vdwg.mxu0
    %2147 = vmatprep.subr.bf16.mxu0 %v1997
    %2148 = vmatpush1.bf16.msra.mxu0 %v1996
    %2149 = vmatprep.subr.bf16.mxu0 %v2001
    %2150 = vmatpush1.bf16.msra.mxu0 %v2000
    %2151 = vmatprep.subr.bf16.mxu0 0
    %2152 = vmatpush1.bf16.msra.mxu0 0
    %2153 = vmatprep.subr.bf16.mxu0 0
    %2154 = vmatpush1.bf16.msra.mxu0 0
    %2155 = vmatprep.subr.bf16.mxu0 0
    %2156 = vmatpush1.bf16.msra.mxu0 0
    %2157 = vmatprep.subr.bf16.mxu0 0
    %2158 = vmatpush1.bf16.msra.mxu0 0
    %2159 = vmatprep.subr.bf16.mxu0 0
    %2160 = vmatpush1.bf16.msra.mxu0 0
    %2161 = vmatprep.subr.bf16.mxu0 0
    %2162 = vmatpush1.bf16.msra.mxu0 0
    %2163 = vmatprep.subr.bf16.mxu0 0
    %2164 = vmatpush1.bf16.msra.mxu0 0
    %2165 = vmatprep.subr.bf16.mxu0 0
    %2166 = vmatpush1.bf16.msra.mxu0 0
    %2167 = vmatprep.subr.bf16.mxu0 0
    %2168 = vmatpush1.bf16.msra.mxu0 0
    %2169 = vmatprep.subr.bf16.mxu0 0
    %2170 = vmatpush1.bf16.msra.mxu0 0
    %2171 = vmatprep.subr.bf16.mxu0 0
    %2172 = vmatpush1.bf16.msra.mxu0 0
    %2173 = vmatprep.subr.bf16.mxu0 0
    %2174 = vmatpush1.bf16.msra.mxu0 0
    %2175 = vmatprep.subr.bf16.mxu0 0
    %2176 = vmatpush1.bf16.msra.mxu0 0
    %2177 = vmatprep.subr.bf16.mxu0 0
    %2178 = vmatpush1.bf16.msra.mxu0 0
    %2179 = vmatprep.mubr.bf16.mxu0 0
    %2180 = vmatmul.mubr.bf16.gmra.mrb[0].mxu0 %v2011
    %v2181 = vpop.f32.mrb[0].mxu0
    %v2182 = vadd.f32 0.0, %v2181
    %v2183 = vpop.f32.mrb[0].mxu0
    %v2184 = vadd.f32 0.0, %v2183
    %v2185 = vpop.f32.mrb[0].mxu0
    %v2186 = vadd.f32 0.0, %v2185
    %v2187 = vpop.f32.mrb[0].mxu0
    %v2188 = vadd.f32 0.0, %v2187
    %2189 = vmatprep.mubr.bf16.mxu0 0
    %2190 = vmatmul.mubr.bf16.gmra.mrb[0].mxu0 %v2014
    %v2191 = vpop.f32.mrb[0].mxu0
    %v2192 = vadd.f32 0.0, %v2191
    %v2193 = vpop.f32.mrb[0].mxu0
    %v2194 = vadd.f32 0.0, %v2193
    %v2195 = vpop.f32.mrb[0].mxu0
    %v2196 = vadd.f32 0.0, %v2195
    %v2197 = vpop.f32.mrb[0].mxu0
    %v2198 = vadd.f32 0.0, %v2197
    %2199 = vmatprep.mubr.bf16.mxu0 0
    %2200 = vmatmul.mubr.bf16.gmra.mrb[0].mxu0 %v2017
    %v2201 = vpop.f32.mrb[0].mxu0
    %v2202 = vadd.f32 0.0, %v2201
    %v2203 = vpop.f32.mrb[0].mxu0
    %v2204 = vadd.f32 0.0, %v2203
    %v2205 = vpop.f32.mrb[0].mxu0
    %v2206 = vadd.f32 0.0, %v2205
    %v2207 = vpop.f32.mrb[0].mxu0
    %v2208 = vadd.f32 0.0, %v2207
    %2209 = vmatprep.mubr.bf16.mxu0 0
    %2210 = vmatmul.mubr.bf16.gmra.mrb[0].mxu0 %v2020
    %v2211 = vpop.f32.mrb[0].mxu0
    %v2212 = vadd.f32 0.0, %v2211
    %v2213 = vpop.f32.mrb[0].mxu0
    %v2214 = vadd.f32 0.0, %v2213
    %v2215 = vpop.f32.mrb[0].mxu0
    %v2216 = vadd.f32 0.0, %v2215
    %v2217 = vpop.f32.mrb[0].mxu0
    %v2218 = vadd.f32 0.0, %v2217
    %2219 = vmatprep.mubr.bf16.mxu0 0
    %2220 = vmatmul.mubr.bf16.gmra.mrb[0].mxu0 %v2023
    %v2221 = vpop.f32.mrb[0].mxu0
    %v2222 = vadd.f32 0.0, %v2221
    %v2223 = vpop.f32.mrb[0].mxu0
    %v2224 = vadd.f32 0.0, %v2223
    %v2225 = vpop.f32.mrb[0].mxu0
    %v2226 = vadd.f32 0.0, %v2225
    %v2227 = vpop.f32.mrb[0].mxu0
    %v2228 = vadd.f32 0.0, %v2227
    %2229 = vmatprep.mubr.bf16.mxu0 0
    %2230 = vmatmul.mubr.bf16.gmra.mrb[0].mxu0 %v2026
    %v2231 = vpop.f32.mrb[0].mxu0
    %v2232 = vadd.f32 0.0, %v2231
    %v2233 = vpop.f32.mrb[0].mxu0
    %v2234 = vadd.f32 0.0, %v2233
    %v2235 = vpop.f32.mrb[0].mxu0
    %v2236 = vadd.f32 0.0, %v2235
    %v2237 = vpop.f32.mrb[0].mxu0
    %v2238 = vadd.f32 0.0, %v2237
    %2239 = vmatprep.mubr.bf16.mxu0 0
    %2240 = vmatmul.mubr.bf16.gmra.mrb[0].mxu0 %v2029
    %v2241 = vpop.f32.mrb[0].mxu0
    %v2242 = vadd.f32 0.0, %v2241
    %v2243 = vpop.f32.mrb[0].mxu0
    %v2244 = vadd.f32 0.0, %v2243
    %v2245 = vpop.f32.mrb[0].mxu0
    %v2246 = vadd.f32 0.0, %v2245
    %v2247 = vpop.f32.mrb[0].mxu0
    %v2248 = vadd.f32 0.0, %v2247
    %2249 = vmatprep.mubr.bf16.mxu0 0
    %2250 = vmatmul.mubr.bf16.gmra.mrb[0].mxu0 %v2032
    %v2251 = vpop.f32.mrb[0].mxu0
    %v2252 = vadd.f32 0.0, %v2251
    %v2253 = vpop.f32.mrb[0].mxu0
    %v2254 = vadd.f32 0.0, %v2253
    %v2255 = vpop.f32.mrb[0].mxu0
    %v2256 = vadd.f32 0.0, %v2255
    %v2257 = vpop.f32.mrb[0].mxu0
    %v2258 = vadd.f32 0.0, %v2257
    %2259 = vdwg.mxu0
    %v2260 = vadd.f32 %v1856, %v2069
    %v2261 = vadd.f32 %v1857, %v2071
    %v2262 = vadd.f32 %v1858, %v2182
    %v2263 = vadd.f32 %v1859, %v2184
    %v2264 = vadd.f32 %v1860, %v2073
    %v2265 = vadd.f32 %v1861, %v2075
    %v2266 = vadd.f32 %v1862, %v2186
    %v2267 = vadd.f32 %v1863, %v2188
    %v2268 = vadd.f32 %v1864, %v2079
    %v2269 = vadd.f32 %v1865, %v2081
    %v2270 = vadd.f32 %v1866, %v2192
    %v2271 = vadd.f32 %v1867, %v2194
    %v2272 = vadd.f32 %v1868, %v2083
    %v2273 = vadd.f32 %v1869, %v2085
    %v2274 = vadd.f32 %v1870, %v2196
    %v2275 = vadd.f32 %v1871, %v2198
    %v2276 = vadd.f32 %v1872, %v2089
    %v2277 = vadd.f32 %v1873, %v2091
    %v2278 = vadd.f32 %v1874, %v2202
    %v2279 = vadd.f32 %v1875, %v2204
    %v2280 = vadd.f32 %v1876, %v2093
    %v2281 = vadd.f32 %v1877, %v2095
    %v2282 = vadd.f32 %v1878, %v2206
    %v2283 = vadd.f32 %v1879, %v2208
    %v2284 = vadd.f32 %v1880, %v2099
    %v2285 = vadd.f32 %v1881, %v2101
    %v2286 = vadd.f32 %v1882, %v2212
    %v2287 = vadd.f32 %v1883, %v2214
    %v2288 = vadd.f32 %v1884, %v2103
    %v2289 = vadd.f32 %v1885, %v2105
    %v2290 = vadd.f32 %v1886, %v2216
    %v2291 = vadd.f32 %v1887, %v2218
    %v2292 = vadd.f32 %v1888, %v2109
    %v2293 = vadd.f32 %v1889, %v2111
    %v2294 = vadd.f32 %v1890, %v2222
    %v2295 = vadd.f32 %v1891, %v2224
    %v2296 = vadd.f32 %v1892, %v2113
    %v2297 = vadd.f32 %v1893, %v2115
    %v2298 = vadd.f32 %v1894, %v2226
    %v2299 = vadd.f32 %v1895, %v2228
    %v2300 = vadd.f32 %v1896, %v2119
    %v2301 = vadd.f32 %v1897, %v2121
    %v2302 = vadd.f32 %v1898, %v2232
    %v2303 = vadd.f32 %v1899, %v2234
    %v2304 = vadd.f32 %v1900, %v2123
    %v2305 = vadd.f32 %v1901, %v2125
    %v2306 = vadd.f32 %v1902, %v2236
    %v2307 = vadd.f32 %v1903, %v2238
    %v2308 = vadd.f32 %v1904, %v2129
    %v2309 = vadd.f32 %v1905, %v2131
    %v2310 = vadd.f32 %v1906, %v2242
    %v2311 = vadd.f32 %v1907, %v2244
    %v2312 = vadd.f32 %v1908, %v2133
    %v2313 = vadd.f32 %v1909, %v2135
    %v2314 = vadd.f32 %v1910, %v2246
    %v2315 = vadd.f32 %v1911, %v2248
    %v2316 = vadd.f32 %v1912, %v2139
    %v2317 = vadd.f32 %v1913, %v2141
    %v2318 = vadd.f32 %v1914, %v2252
    %v2319 = vadd.f32 %v1915, %v2254
    %v2320 = vadd.f32 %v1916, %v2143
    %v2321 = vadd.f32 %v1917, %v2145
    %v2322 = vadd.f32 %v1918, %v2256
    %v2323 = vadd.f32 %v1919, %v2258
    %v2324 = vadd.s32 %v76, 256
    %v2325 = vadd.s32 %v76, 384
    %v2326 = vadd.s32 %v496, 8
    %vm2327 = vcmp.ge.s32.totalorder %v76, 0
    %vm2328 = vcmp.ge.s32.totalorder %v77, 0
    %vm2329 = vcmp.ge.s32.totalorder %v2324, 0
    %vm2330 = vcmp.ge.s32.totalorder %v2325, 0
    %vm2331 = vcmp.lt.s32.totalorder %v76, 128
    %vm2332 = vcmp.lt.s32.totalorder %v77, 128
    %vm2333 = vcmp.lt.s32.totalorder %v2324, 128
    %vm2334 = vcmp.lt.s32.totalorder %v2325, 128
    %vm2335 = vmand %vm2327, %vm2331
    %vm2336 = vmand %vm2328, %vm2332
    %vm2337 = vmand %vm2329, %vm2333
    %vm2338 = vmand %vm2330, %vm2334
    %v2339 = vsel %vm2335, 15, 0
    %v2340 = vsel %vm2336, 15, 0
    %v2341 = vsel %vm2337, 15, 0
    %v2342 = vsel %vm2338, 15, 0
    %vm2343 = vcmp.ge.s32.totalorder %v76, 128
    %vm2344 = vcmp.ge.s32.totalorder %v77, 128
    %vm2345 = vcmp.ge.s32.totalorder %v2324, 128
    %vm2346 = vcmp.ge.s32.totalorder %v2325, 128
    %vm2347 = vcmp.lt.s32.totalorder %v76, 256
    %vm2348 = vcmp.lt.s32.totalorder %v77, 256
    %vm2349 = vcmp.lt.s32.totalorder %v2324, 256
    %vm2350 = vcmp.lt.s32.totalorder %v2325, 256
    %vm2351 = vmand %vm2343, %vm2347
    %vm2352 = vmand %vm2344, %vm2348
    %vm2353 = vmand %vm2345, %vm2349
    %vm2354 = vmand %vm2346, %vm2350
    %v2355 = vsel %vm2351, 14, %v2339
    %v2356 = vsel %vm2352, 14, %v2340
    %v2357 = vsel %vm2353, 14, %v2341
    %v2358 = vsel %vm2354, 14, %v2342
    %vm2359 = vcmp.ge.s32.totalorder %v76, 256
    %vm2360 = vcmp.ge.s32.totalorder %v77, 256
    %vm2361 = vcmp.ge.s32.totalorder %v2324, 256
    %vm2362 = vcmp.ge.s32.totalorder %v2325, 256
    %vm2363 = vcmp.lt.s32.totalorder %v76, 384
    %vm2364 = vcmp.lt.s32.totalorder %v77, 384
    %vm2365 = vcmp.lt.s32.totalorder %v2324, 384
    %vm2366 = vcmp.lt.s32.totalorder %v2325, 384
    %vm2367 = vmand %vm2359, %vm2363
    %vm2368 = vmand %vm2360, %vm2364
    %vm2369 = vmand %vm2361, %vm2365
    %vm2370 = vmand %vm2362, %vm2366
    %v2371 = vsel %vm2367, 13, %v2355
    %v2372 = vsel %vm2368, 13, %v2356
    %v2373 = vsel %vm2369, 13, %v2357
    %v2374 = vsel %vm2370, 13, %v2358
    %vm2375 = vcmp.ge.s32.totalorder %v76, 384
    %vm2376 = vcmp.ge.s32.totalorder %v77, 384
    %vm2377 = vcmp.ge.s32.totalorder %v2324, 384
    %vm2378 = vcmp.ge.s32.totalorder %v2325, 384
    %vm2379 = vcmp.lt.s32.totalorder %v76, 512
    %vm2380 = vcmp.lt.s32.totalorder %v77, 512
    %vm2381 = vcmp.lt.s32.totalorder %v2324, 512
    %vm2382 = vcmp.lt.s32.totalorder %v2325, 512
    %vm2383 = vmand %vm2375, %vm2379
    %vm2384 = vmand %vm2376, %vm2380
    %vm2385 = vmand %vm2377, %vm2381
    %vm2386 = vmand %vm2378, %vm2382
    %v2387 = vsel %vm2383, 12, %v2371
    %v2388 = vsel %vm2384, 12, %v2372
    %v2389 = vsel %vm2385, 12, %v2373
    %v2390 = vsel %vm2386, 12, %v2374
    %vm2391 = vcmp.lt.s32.totalorder %v496, %v2387
    %vm2392 = vcmp.lt.s32.totalorder %v496, %v2388
    %vm2393 = vcmp.lt.s32.totalorder %v496, %v2389
    %vm2394 = vcmp.lt.s32.totalorder %v496, %v2390
    %vm2395 = vcmp.lt.s32.totalorder %v2326, %v2387
    %vm2396 = vcmp.lt.s32.totalorder %v2326, %v2388
    %vm2397 = vcmp.lt.s32.totalorder %v2326, %v2389
    %vm2398 = vcmp.lt.s32.totalorder %v2326, %v2390
    %v2399 = vsel %vm2391, 0.0, -1e+30
    %v2400 = vsel %vm2392, 0.0, -1e+30
    %v2401 = vsel %vm2393, 0.0, -1e+30
    %v2402 = vsel %vm2394, 0.0, -1e+30
    %v2403 = vsel %vm2395, 0.0, -1e+30
    %v2404 = vsel %vm2396, 0.0, -1e+30
    %v2405 = vsel %vm2397, 0.0, -1e+30
    %v2406 = vsel %vm2398, 0.0, -1e+30
    %v2407 = vadd.f32 %v2260, %v2399
    %v2408 = vadd.f32 %v2261, %v2400
    %v2409 = vadd.f32 %v2262, %v2401
    %v2410 = vadd.f32 %v2263, %v2402
    %v2411 = vadd.f32 %v2264, %v2403
    %v2412 = vadd.f32 %v2265, %v2404
    %v2413 = vadd.f32 %v2266, %v2405
    %v2414 = vadd.f32 %v2267, %v2406
    %v2415 = vadd.f32 %v2268, %v2399
    %v2416 = vadd.f32 %v2269, %v2400
    %v2417 = vadd.f32 %v2270, %v2401
    %v2418 = vadd.f32 %v2271, %v2402
    %v2419 = vadd.f32 %v2272, %v2403
    %v2420 = vadd.f32 %v2273, %v2404
    %v2421 = vadd.f32 %v2274, %v2405
    %v2422 = vadd.f32 %v2275, %v2406
    %v2423 = vadd.f32 %v2276, %v2399
    %v2424 = vadd.f32 %v2277, %v2400
    %v2425 = vadd.f32 %v2278, %v2401
    %v2426 = vadd.f32 %v2279, %v2402
    %v2427 = vadd.f32 %v2280, %v2403
    %v2428 = vadd.f32 %v2281, %v2404
    %v2429 = vadd.f32 %v2282, %v2405
    %v2430 = vadd.f32 %v2283, %v2406
    %v2431 = vadd.f32 %v2284, %v2399
    %v2432 = vadd.f32 %v2285, %v2400
    %v2433 = vadd.f32 %v2286, %v2401
    %v2434 = vadd.f32 %v2287, %v2402
    %v2435 = vadd.f32 %v2288, %v2403
    %v2436 = vadd.f32 %v2289, %v2404
    %v2437 = vadd.f32 %v2290, %v2405
    %v2438 = vadd.f32 %v2291, %v2406
    %v2439 = vadd.f32 %v2292, %v2399
    %v2440 = vadd.f32 %v2293, %v2400
    %v2441 = vadd.f32 %v2294, %v2401
    %v2442 = vadd.f32 %v2295, %v2402
    %v2443 = vadd.f32 %v2296, %v2403
    %v2444 = vadd.f32 %v2297, %v2404
    %v2445 = vadd.f32 %v2298, %v2405
    %v2446 = vadd.f32 %v2299, %v2406
    %v2447 = vadd.f32 %v2300, %v2399
    %v2448 = vadd.f32 %v2301, %v2400
    %v2449 = vadd.f32 %v2302, %v2401
    %v2450 = vadd.f32 %v2303, %v2402
    %v2451 = vadd.f32 %v2304, %v2403
    %v2452 = vadd.f32 %v2305, %v2404
    %v2453 = vadd.f32 %v2306, %v2405
    %v2454 = vadd.f32 %v2307, %v2406
    %v2455 = vadd.f32 %v2308, %v2399
    %v2456 = vadd.f32 %v2309, %v2400
    %v2457 = vadd.f32 %v2310, %v2401
    %v2458 = vadd.f32 %v2311, %v2402
    %v2459 = vadd.f32 %v2312, %v2403
    %v2460 = vadd.f32 %v2313, %v2404
    %v2461 = vadd.f32 %v2314, %v2405
    %v2462 = vadd.f32 %v2315, %v2406
    %v2463 = vadd.f32 %v2316, %v2399
    %v2464 = vadd.f32 %v2317, %v2400
    %v2465 = vadd.f32 %v2318, %v2401
    %v2466 = vadd.f32 %v2319, %v2402
    %v2467 = vadd.f32 %v2320, %v2403
    %v2468 = vadd.f32 %v2321, %v2404
    %v2469 = vadd.f32 %v2322, %v2405
    %v2470 = vadd.f32 %v2323, %v2406
    %v2471 = vmax.f32 %v2407, %v2411
    %v2472 = vrot.slane %v2471, 4
    %v2473 = vmax.f32 %v2471, %v2472
    %v2474 = vrot.slane %v2473, 2
    %v2475 = vmax.f32 %v2473, %v2474
    %v2476 = vrot.slane %v2475, 1
    %v2477 = vmax.f32 %v2475, %v2476
    %v2478 = vmax.f32 %v2408, %v2412
    %v2479 = vrot.slane %v2478, 4
    %v2480 = vmax.f32 %v2478, %v2479
    %v2481 = vrot.slane %v2480, 2
    %v2482 = vmax.f32 %v2480, %v2481
    %v2483 = vrot.slane %v2482, 1
    %v2484 = vmax.f32 %v2482, %v2483
    %v2485 = vmax.f32 %v2409, %v2413
    %v2486 = vrot.slane %v2485, 4
    %v2487 = vmax.f32 %v2485, %v2486
    %v2488 = vrot.slane %v2487, 2
    %v2489 = vmax.f32 %v2487, %v2488
    %v2490 = vrot.slane %v2489, 1
    %v2491 = vmax.f32 %v2489, %v2490
    %v2492 = vmax.f32 %v2410, %v2414
    %v2493 = vrot.slane %v2492, 4
    %v2494 = vmax.f32 %v2492, %v2493
    %v2495 = vrot.slane %v2494, 2
    %v2496 = vmax.f32 %v2494, %v2495
    %v2497 = vrot.slane %v2496, 1
    %v2498 = vmax.f32 %v2496, %v2497
    %v2499 = vmax.f32 %v2415, %v2419
    %v2500 = vrot.slane %v2499, 4
    %v2501 = vmax.f32 %v2499, %v2500
    %v2502 = vrot.slane %v2501, 2
    %v2503 = vmax.f32 %v2501, %v2502
    %v2504 = vrot.slane %v2503, 1
    %v2505 = vmax.f32 %v2503, %v2504
    %v2506 = vmax.f32 %v2416, %v2420
    %v2507 = vrot.slane %v2506, 4
    %v2508 = vmax.f32 %v2506, %v2507
    %v2509 = vrot.slane %v2508, 2
    %v2510 = vmax.f32 %v2508, %v2509
    %v2511 = vrot.slane %v2510, 1
    %v2512 = vmax.f32 %v2510, %v2511
    %v2513 = vmax.f32 %v2417, %v2421
    %v2514 = vrot.slane %v2513, 4
    %v2515 = vmax.f32 %v2513, %v2514
    %v2516 = vrot.slane %v2515, 2
    %v2517 = vmax.f32 %v2515, %v2516
    %v2518 = vrot.slane %v2517, 1
    %v2519 = vmax.f32 %v2517, %v2518
    %v2520 = vmax.f32 %v2418, %v2422
    %v2521 = vrot.slane %v2520, 4
    %v2522 = vmax.f32 %v2520, %v2521
    %v2523 = vrot.slane %v2522, 2
    %v2524 = vmax.f32 %v2522, %v2523
    %v2525 = vrot.slane %v2524, 1
    %v2526 = vmax.f32 %v2524, %v2525
    %v2527 = vmax.f32 %v2423, %v2427
    %v2528 = vrot.slane %v2527, 4
    %v2529 = vmax.f32 %v2527, %v2528
    %v2530 = vrot.slane %v2529, 2
    %v2531 = vmax.f32 %v2529, %v2530
    %v2532 = vrot.slane %v2531, 1
    %v2533 = vmax.f32 %v2531, %v2532
    %v2534 = vmax.f32 %v2424, %v2428
    %v2535 = vrot.slane %v2534, 4
    %v2536 = vmax.f32 %v2534, %v2535
    %v2537 = vrot.slane %v2536, 2
    %v2538 = vmax.f32 %v2536, %v2537
    %v2539 = vrot.slane %v2538, 1
    %v2540 = vmax.f32 %v2538, %v2539
    %v2541 = vmax.f32 %v2425, %v2429
    %v2542 = vrot.slane %v2541, 4
    %v2543 = vmax.f32 %v2541, %v2542
    %v2544 = vrot.slane %v2543, 2
    %v2545 = vmax.f32 %v2543, %v2544
    %v2546 = vrot.slane %v2545, 1
    %v2547 = vmax.f32 %v2545, %v2546
    %v2548 = vmax.f32 %v2426, %v2430
    %v2549 = vrot.slane %v2548, 4
    %v2550 = vmax.f32 %v2548, %v2549
    %v2551 = vrot.slane %v2550, 2
    %v2552 = vmax.f32 %v2550, %v2551
    %v2553 = vrot.slane %v2552, 1
    %v2554 = vmax.f32 %v2552, %v2553
    %v2555 = vmax.f32 %v2431, %v2435
    %v2556 = vrot.slane %v2555, 4
    %v2557 = vmax.f32 %v2555, %v2556
    %v2558 = vrot.slane %v2557, 2
    %v2559 = vmax.f32 %v2557, %v2558
    %v2560 = vrot.slane %v2559, 1
    %v2561 = vmax.f32 %v2559, %v2560
    %v2562 = vmax.f32 %v2432, %v2436
    %v2563 = vrot.slane %v2562, 4
    %v2564 = vmax.f32 %v2562, %v2563
    %v2565 = vrot.slane %v2564, 2
    %v2566 = vmax.f32 %v2564, %v2565
    %v2567 = vrot.slane %v2566, 1
    %v2568 = vmax.f32 %v2566, %v2567
    %v2569 = vmax.f32 %v2433, %v2437
    %v2570 = vrot.slane %v2569, 4
    %v2571 = vmax.f32 %v2569, %v2570
    %v2572 = vrot.slane %v2571, 2
    %v2573 = vmax.f32 %v2571, %v2572
    %v2574 = vrot.slane %v2573, 1
    %v2575 = vmax.f32 %v2573, %v2574
    %v2576 = vmax.f32 %v2434, %v2438
    %v2577 = vrot.slane %v2576, 4
    %v2578 = vmax.f32 %v2576, %v2577
    %v2579 = vrot.slane %v2578, 2
    %v2580 = vmax.f32 %v2578, %v2579
    %v2581 = vrot.slane %v2580, 1
    %v2582 = vmax.f32 %v2580, %v2581
    %v2583 = vmax.f32 %v2439, %v2443
    %v2584 = vrot.slane %v2583, 4
    %v2585 = vmax.f32 %v2583, %v2584
    %v2586 = vrot.slane %v2585, 2
    %v2587 = vmax.f32 %v2585, %v2586
    %v2588 = vrot.slane %v2587, 1
    %v2589 = vmax.f32 %v2587, %v2588
    %v2590 = vmax.f32 %v2440, %v2444
    %v2591 = vrot.slane %v2590, 4
    %v2592 = vmax.f32 %v2590, %v2591
    %v2593 = vrot.slane %v2592, 2
    %v2594 = vmax.f32 %v2592, %v2593
    %v2595 = vrot.slane %v2594, 1
    %v2596 = vmax.f32 %v2594, %v2595
    %v2597 = vmax.f32 %v2441, %v2445
    %v2598 = vrot.slane %v2597, 4
    %v2599 = vmax.f32 %v2597, %v2598
    %v2600 = vrot.slane %v2599, 2
    %v2601 = vmax.f32 %v2599, %v2600
    %v2602 = vrot.slane %v2601, 1
    %v2603 = vmax.f32 %v2601, %v2602
    %v2604 = vmax.f32 %v2442, %v2446
    %v2605 = vrot.slane %v2604, 4
    %v2606 = vmax.f32 %v2604, %v2605
    %v2607 = vrot.slane %v2606, 2
    %v2608 = vmax.f32 %v2606, %v2607
    %v2609 = vrot.slane %v2608, 1
    %v2610 = vmax.f32 %v2608, %v2609
    %v2611 = vmax.f32 %v2447, %v2451
    %v2612 = vrot.slane %v2611, 4
    %v2613 = vmax.f32 %v2611, %v2612
    %v2614 = vrot.slane %v2613, 2
    %v2615 = vmax.f32 %v2613, %v2614
    %v2616 = vrot.slane %v2615, 1
    %v2617 = vmax.f32 %v2615, %v2616
    %v2618 = vmax.f32 %v2448, %v2452
    %v2619 = vrot.slane %v2618, 4
    %v2620 = vmax.f32 %v2618, %v2619
    %v2621 = vrot.slane %v2620, 2
    %v2622 = vmax.f32 %v2620, %v2621
    %v2623 = vrot.slane %v2622, 1
    %v2624 = vmax.f32 %v2622, %v2623
    %v2625 = vmax.f32 %v2449, %v2453
    %v2626 = vrot.slane %v2625, 4
    %v2627 = vmax.f32 %v2625, %v2626
    %v2628 = vrot.slane %v2627, 2
    %v2629 = vmax.f32 %v2627, %v2628
    %v2630 = vrot.slane %v2629, 1
    %v2631 = vmax.f32 %v2629, %v2630
    %v2632 = vmax.f32 %v2450, %v2454
    %v2633 = vrot.slane %v2632, 4
    %v2634 = vmax.f32 %v2632, %v2633
    %v2635 = vrot.slane %v2634, 2
    %v2636 = vmax.f32 %v2634, %v2635
    %v2637 = vrot.slane %v2636, 1
    %v2638 = vmax.f32 %v2636, %v2637
    %v2639 = vmax.f32 %v2455, %v2459
    %v2640 = vrot.slane %v2639, 4
    %v2641 = vmax.f32 %v2639, %v2640
    %v2642 = vrot.slane %v2641, 2
    %v2643 = vmax.f32 %v2641, %v2642
    %v2644 = vrot.slane %v2643, 1
    %v2645 = vmax.f32 %v2643, %v2644
    %v2646 = vmax.f32 %v2456, %v2460
    %v2647 = vrot.slane %v2646, 4
    %v2648 = vmax.f32 %v2646, %v2647
    %v2649 = vrot.slane %v2648, 2
    %v2650 = vmax.f32 %v2648, %v2649
    %v2651 = vrot.slane %v2650, 1
    %v2652 = vmax.f32 %v2650, %v2651
    %v2653 = vmax.f32 %v2457, %v2461
    %v2654 = vrot.slane %v2653, 4
    %v2655 = vmax.f32 %v2653, %v2654
    %v2656 = vrot.slane %v2655, 2
    %v2657 = vmax.f32 %v2655, %v2656
    %v2658 = vrot.slane %v2657, 1
    %v2659 = vmax.f32 %v2657, %v2658
    %v2660 = vmax.f32 %v2458, %v2462
    %v2661 = vrot.slane %v2660, 4
    %v2662 = vmax.f32 %v2660, %v2661
    %v2663 = vrot.slane %v2662, 2
    %v2664 = vmax.f32 %v2662, %v2663
    %v2665 = vrot.slane %v2664, 1
    %v2666 = vmax.f32 %v2664, %v2665
    %v2667 = vmax.f32 %v2463, %v2467
    %v2668 = vrot.slane %v2667, 4
    %v2669 = vmax.f32 %v2667, %v2668
    %v2670 = vrot.slane %v2669, 2
    %v2671 = vmax.f32 %v2669, %v2670
    %v2672 = vrot.slane %v2671, 1
    %v2673 = vmax.f32 %v2671, %v2672
    %v2674 = vmax.f32 %v2464, %v2468
    %v2675 = vrot.slane %v2674, 4
    %v2676 = vmax.f32 %v2674, %v2675
    %v2677 = vrot.slane %v2676, 2
    %v2678 = vmax.f32 %v2676, %v2677
    %v2679 = vrot.slane %v2678, 1
    %v2680 = vmax.f32 %v2678, %v2679
    %v2681 = vmax.f32 %v2465, %v2469
    %v2682 = vrot.slane %v2681, 4
    %v2683 = vmax.f32 %v2681, %v2682
    %v2684 = vrot.slane %v2683, 2
    %v2685 = vmax.f32 %v2683, %v2684
    %v2686 = vrot.slane %v2685, 1
    %v2687 = vmax.f32 %v2685, %v2686
    %v2688 = vmax.f32 %v2466, %v2470
    %v2689 = vrot.slane %v2688, 4
    %v2690 = vmax.f32 %v2688, %v2689
    %v2691 = vrot.slane %v2690, 2
    %v2692 = vmax.f32 %v2690, %v2691
    %v2693 = vrot.slane %v2692, 1
    %v2694 = vmax.f32 %v2692, %v2693
    %v2695 = vld [vmem:[%s3] sm:$0xf]
    %v2697 = vlaneseq
    %v2698 = vshrl.u32 %v2697, 7
    %v2699 = vsub.s32 0, %v2698
    %v2700 = vrot.slane %v2695, %v2699
    %v2701 = vlaneseq
    %v2702 = vshrl.u32 %v2701, 7
    %v2703 = vsub.s32 1, %v2702
    %v2704 = vrot.slane %v2695, %v2703
    %v2705 = vlaneseq
    %v2706 = vshrl.u32 %v2705, 7
    %v2707 = vsub.s32 2, %v2706
    %v2708 = vrot.slane %v2695, %v2707
    %v2709 = vlaneseq
    %v2710 = vshrl.u32 %v2709, 7
    %v2711 = vsub.s32 3, %v2710
    %v2712 = vrot.slane %v2695, %v2711
    %v2717 = vadd.f32 %v2477, %v2700
    %v2718 = vadd.f32 %v2484, %v2704
    %v2719 = vadd.f32 %v2491, %v2708
    %v2720 = vadd.f32 %v2498, %v2712
    %v2721 = vadd.f32 %v2505, %v2700
    %v2722 = vadd.f32 %v2512, %v2704
    %v2723 = vadd.f32 %v2519, %v2708
    %v2724 = vadd.f32 %v2526, %v2712
    %v2725 = vadd.f32 %v2533, %v2700
    %v2726 = vadd.f32 %v2540, %v2704
    %v2727 = vadd.f32 %v2547, %v2708
    %v2728 = vadd.f32 %v2554, %v2712
    %v2729 = vadd.f32 %v2561, %v2700
    %v2730 = vadd.f32 %v2568, %v2704
    %v2731 = vadd.f32 %v2575, %v2708
    %v2732 = vadd.f32 %v2582, %v2712
    %v2733 = vadd.f32 %v2589, %v2700
    %v2734 = vadd.f32 %v2596, %v2704
    %v2735 = vadd.f32 %v2603, %v2708
    %v2736 = vadd.f32 %v2610, %v2712
    %v2737 = vadd.f32 %v2617, %v2700
    %v2738 = vadd.f32 %v2624, %v2704
    %v2739 = vadd.f32 %v2631, %v2708
    %v2740 = vadd.f32 %v2638, %v2712
    %v2741 = vadd.f32 %v2645, %v2700
    %v2742 = vadd.f32 %v2652, %v2704
    %v2743 = vadd.f32 %v2659, %v2708
    %v2744 = vadd.f32 %v2666, %v2712
    %v2745 = vadd.f32 %v2673, %v2700
    %v2746 = vadd.f32 %v2680, %v2704
    %v2747 = vadd.f32 %v2687, %v2708
    %v2748 = vadd.f32 %v2694, %v2712
    %v2749 = vmax.f32 %v2717, 0.0
    %v2750 = vmax.f32 %v2718, 0.0
    %v2751 = vmax.f32 %v2719, 0.0
    %v2752 = vmax.f32 %v2720, 0.0
    %v2753 = vmax.f32 %v2721, 0.0
    %v2754 = vmax.f32 %v2722, 0.0
    %v2755 = vmax.f32 %v2723, 0.0
    %v2756 = vmax.f32 %v2724, 0.0
    %v2757 = vmax.f32 %v2725, 0.0
    %v2758 = vmax.f32 %v2726, 0.0
    %v2759 = vmax.f32 %v2727, 0.0
    %v2760 = vmax.f32 %v2728, 0.0
    %v2761 = vmax.f32 %v2729, 0.0
    %v2762 = vmax.f32 %v2730, 0.0
    %v2763 = vmax.f32 %v2731, 0.0
    %v2764 = vmax.f32 %v2732, 0.0
    %v2765 = vmax.f32 %v2733, 0.0
    %v2766 = vmax.f32 %v2734, 0.0
    %v2767 = vmax.f32 %v2735, 0.0
    %v2768 = vmax.f32 %v2736, 0.0
    %v2769 = vmax.f32 %v2737, 0.0
    %v2770 = vmax.f32 %v2738, 0.0
    %v2771 = vmax.f32 %v2739, 0.0
    %v2772 = vmax.f32 %v2740, 0.0
    %v2773 = vmax.f32 %v2741, 0.0
    %v2774 = vmax.f32 %v2742, 0.0
    %v2775 = vmax.f32 %v2743, 0.0
    %v2776 = vmax.f32 %v2744, 0.0
    %v2777 = vmax.f32 %v2745, 0.0
    %v2778 = vmax.f32 %v2746, 0.0
    %v2779 = vmax.f32 %v2747, 0.0
    %v2780 = vmax.f32 %v2748, 0.0
    %v2781 = vpack.c.bf16 %v2749, %v2749
    %v2782 = vpack.c.bf16 %v2750, %v2750
    %v2783 = vpack.c.bf16 %v2751, %v2751
    %v2784 = vpack.c.bf16 %v2752, %v2752
    %v2785 = vpack.c.bf16 %v2753, %v2753
    %v2786 = vpack.c.bf16 %v2754, %v2754
    %v2787 = vpack.c.bf16 %v2755, %v2755
    %v2788 = vpack.c.bf16 %v2756, %v2756
    %v2789 = vpack.c.bf16 %v2757, %v2757
    %v2790 = vpack.c.bf16 %v2758, %v2758
    %v2791 = vpack.c.bf16 %v2759, %v2759
    %v2792 = vpack.c.bf16 %v2760, %v2760
    %v2793 = vpack.c.bf16 %v2761, %v2761
    %v2794 = vpack.c.bf16 %v2762, %v2762
    %v2795 = vpack.c.bf16 %v2763, %v2763
    %v2796 = vpack.c.bf16 %v2764, %v2764
    %v2797 = vpack.c.bf16 %v2765, %v2765
    %v2798 = vpack.c.bf16 %v2766, %v2766
    %v2799 = vpack.c.bf16 %v2767, %v2767
    %v2800 = vpack.c.bf16 %v2768, %v2768
    %v2801 = vpack.c.bf16 %v2769, %v2769
    %v2802 = vpack.c.bf16 %v2770, %v2770
    %v2803 = vpack.c.bf16 %v2771, %v2771
    %v2804 = vpack.c.bf16 %v2772, %v2772
    %v2805 = vpack.c.bf16 %v2773, %v2773
    %v2806 = vpack.c.bf16 %v2774, %v2774
    %v2807 = vpack.c.bf16 %v2775, %v2775
    %v2808 = vpack.c.bf16 %v2776, %v2776
    %v2809 = vpack.c.bf16 %v2777, %v2777
    %v2810 = vpack.c.bf16 %v2778, %v2778
    %v2811 = vpack.c.bf16 %v2779, %v2779
    %v2812 = vpack.c.bf16 %v2780, %v2780
    %v2813 = vld [vmem:[%s4] sm:$0xf]
    %v2814 = vld [vmem:[%s4 + $0x4] sm:$0xf]
    %v2815 = vld [vmem:[%s4 + $0x8] sm:$0xf]
    %v2816 = vld [vmem:[%s4 + $0xc] sm:$0xf]
    %v2817 = vld [vmem:[%s4 + $0x10] sm:$0xf]
    %v2818 = vld [vmem:[%s4 + $0x14] sm:$0xf]
    %v2819 = vld [vmem:[%s4 + $0x18] sm:$0xf]
    %v2820 = vld [vmem:[%s4 + $0x1c] sm:$0xf]
    %v2821 = vld [vmem:[%s4 + $0x20] sm:$0xf]
    %v2822 = vld [vmem:[%s4 + $0x24] sm:$0xf]
    %v2823 = vld [vmem:[%s4 + $0x28] sm:$0xf]
    %v2824 = vld [vmem:[%s4 + $0x2c] sm:$0xf]
    %v2825 = vld [vmem:[%s4 + $0x30] sm:$0xf]
    %v2826 = vld [vmem:[%s4 + $0x34] sm:$0xf]
    %v2827 = vld [vmem:[%s4 + $0x38] sm:$0xf]
    %v2828 = vld [vmem:[%s4 + $0x3c] sm:$0xf]
    %v2829 = vld [vmem:[%s4 + $0x40] sm:$0xf]
    %v2830 = vld [vmem:[%s4 + $0x44] sm:$0xf]
    %v2831 = vld [vmem:[%s4 + $0x48] sm:$0xf]
    %v2832 = vld [vmem:[%s4 + $0x4c] sm:$0xf]
    %v2833 = vld [vmem:[%s4 + $0x50] sm:$0xf]
    %v2834 = vld [vmem:[%s4 + $0x54] sm:$0xf]
    %v2835 = vld [vmem:[%s4 + $0x58] sm:$0xf]
    %v2836 = vld [vmem:[%s4 + $0x5c] sm:$0xf]
    %v2837 = vld [vmem:[%s4 + $0x60] sm:$0xf]
    %v2838 = vld [vmem:[%s4 + $0x64] sm:$0xf]
    %v2839 = vld [vmem:[%s4 + $0x68] sm:$0xf]
    %v2840 = vld [vmem:[%s4 + $0x6c] sm:$0xf]
    %v2841 = vld [vmem:[%s4 + $0x70] sm:$0xf]
    %v2842 = vld [vmem:[%s4 + $0x74] sm:$0xf]
    %v2843 = vld [vmem:[%s4 + $0x78] sm:$0xf]
    %v2844 = vld [vmem:[%s4 + $0x7c] sm:$0xf]
    %v2845 = vld [vmem:[%s4 + $0x80] sm:$0xf]
    %v2846 = vld [vmem:[%s4 + $0x84] sm:$0xf]
    %v2847 = vld [vmem:[%s4 + $0x88] sm:$0xf]
    %v2848 = vld [vmem:[%s4 + $0x8c] sm:$0xf]
    %v2849 = vld [vmem:[%s4 + $0x90] sm:$0xf]
    %v2850 = vld [vmem:[%s4 + $0x94] sm:$0xf]
    %v2851 = vld [vmem:[%s4 + $0x98] sm:$0xf]
    %v2852 = vld [vmem:[%s4 + $0x9c] sm:$0xf]
    %v2853 = vld [vmem:[%s4 + $0xa0] sm:$0xf]
    %v2854 = vld [vmem:[%s4 + $0xa4] sm:$0xf]
    %v2855 = vld [vmem:[%s4 + $0xa8] sm:$0xf]
    %v2856 = vld [vmem:[%s4 + $0xac] sm:$0xf]
    %v2857 = vld [vmem:[%s4 + $0xb0] sm:$0xf]
    %v2858 = vld [vmem:[%s4 + $0xb4] sm:$0xf]
    %v2859 = vld [vmem:[%s4 + $0xb8] sm:$0xf]
    %v2860 = vld [vmem:[%s4 + $0xbc] sm:$0xf]
    %v2861 = vld [vmem:[%s4 + $0xc0] sm:$0xf]
    %v2862 = vld [vmem:[%s4 + $0xc4] sm:$0xf]
    %v2863 = vld [vmem:[%s4 + $0xc8] sm:$0xf]
    %v2864 = vld [vmem:[%s4 + $0xcc] sm:$0xf]
    %v2865 = vld [vmem:[%s4 + $0xd0] sm:$0xf]
    %v2866 = vld [vmem:[%s4 + $0xd4] sm:$0xf]
    %v2867 = vld [vmem:[%s4 + $0xd8] sm:$0xf]
    %v2868 = vld [vmem:[%s4 + $0xdc] sm:$0xf]
    %v2869 = vld [vmem:[%s4 + $0xe0] sm:$0xf]
    %v2870 = vld [vmem:[%s4 + $0xe4] sm:$0xf]
    %v2871 = vld [vmem:[%s4 + $0xe8] sm:$0xf]
    %v2872 = vld [vmem:[%s4 + $0xec] sm:$0xf]
    %v2873 = vld [vmem:[%s4 + $0xf0] sm:$0xf]
    %v2874 = vld [vmem:[%s4 + $0xf4] sm:$0xf]
    %v2875 = vld [vmem:[%s4 + $0xf8] sm:$0xf]
    %v2876 = vld [vmem:[%s4 + $0xfc] sm:$0xf]
    %v2877 = vld [vmem:[%s5] sm:$0x1]
    %v2879 = vlaneseq
    %v2880 = vshrl.u32 %v2879, 7
    %v2881 = vsub.s32 0, %v2880
    %v2882 = vrot.slane %v2877, %v2881
    %v2916 = vunpack.c.l.b16 %v2781
    %v2917 = vunpack.c.l.b16 %v2782
    %v2918 = vunpack.c.l.b16 %v2783
    %v2919 = vunpack.c.l.b16 %v2784
    %v2920 = vunpack.c.l.b16 %v2785
    %v2921 = vunpack.c.l.b16 %v2786
    %v2922 = vunpack.c.l.b16 %v2787
    %v2923 = vunpack.c.l.b16 %v2788
    %v2924 = vunpack.c.l.b16 %v2789
    %v2925 = vunpack.c.l.b16 %v2790
    %v2926 = vunpack.c.l.b16 %v2791
    %v2927 = vunpack.c.l.b16 %v2792
    %v2928 = vunpack.c.l.b16 %v2793
    %v2929 = vunpack.c.l.b16 %v2794
    %v2930 = vunpack.c.l.b16 %v2795
    %v2931 = vunpack.c.l.b16 %v2796
    %v2932 = vunpack.c.l.b16 %v2797
    %v2933 = vunpack.c.l.b16 %v2798
    %v2934 = vunpack.c.l.b16 %v2799
    %v2935 = vunpack.c.l.b16 %v2800
    %v2936 = vunpack.c.l.b16 %v2801
    %v2937 = vunpack.c.l.b16 %v2802
    %v2938 = vunpack.c.l.b16 %v2803
    %v2939 = vunpack.c.l.b16 %v2804
    %v2940 = vunpack.c.l.b16 %v2805
    %v2941 = vunpack.c.l.b16 %v2806
    %v2942 = vunpack.c.l.b16 %v2807
    %v2943 = vunpack.c.l.b16 %v2808
    %v2944 = vunpack.c.l.b16 %v2809
    %v2945 = vunpack.c.l.b16 %v2810
    %v2946 = vunpack.c.l.b16 %v2811
    %v2947 = vunpack.c.l.b16 %v2812
    %v2948 = vrot.slane %v2920, 7
    %vm2949 = vcmask 1041409
    %v2950 = vsel %vm2949, %v2948, %v2916
    %v2951 = vrot.slane %v2924, 6
    %vm2952 = vcmask 1042434
    %v2953 = vsel %vm2952, %v2951, %v2950
    %v2954 = vrot.slane %v2928, 5
    %vm2955 = vcmask 1043459
    %v2956 = vsel %vm2955, %v2954, %v2953
    %v2957 = vrot.slane %v2932, 4
    %vm2958 = vcmask 1044484
    %v2959 = vsel %vm2958, %v2957, %v2956
    %v2960 = vrot.slane %v2936, 3
    %vm2961 = vcmask 1045509
    %v2962 = vsel %vm2961, %v2960, %v2959
    %v2963 = vrot.slane %v2940, 2
    %vm2964 = vcmask 1046534
    %v2965 = vsel %vm2964, %v2963, %v2962
    %v2966 = vrot.slane %v2944, 1
    %vm2967 = vcmask 1047559
    %v2968 = vsel %vm2967, %v2966, %v2965
    %v2969 = vrot.slane %v2921, 7
    %v2970 = vsel %vm2949, %v2969, %v2917
    %v2971 = vrot.slane %v2925, 6
    %v2972 = vsel %vm2952, %v2971, %v2970
    %v2973 = vrot.slane %v2929, 5
    %v2974 = vsel %vm2955, %v2973, %v2972
    %v2975 = vrot.slane %v2933, 4
    %v2976 = vsel %vm2958, %v2975, %v2974
    %v2977 = vrot.slane %v2937, 3
    %v2978 = vsel %vm2961, %v2977, %v2976
    %v2979 = vrot.slane %v2941, 2
    %v2980 = vsel %vm2964, %v2979, %v2978
    %v2981 = vrot.slane %v2945, 1
    %v2982 = vsel %vm2967, %v2981, %v2980
    %v2983 = vrot.slane %v2922, 7
    %v2984 = vsel %vm2949, %v2983, %v2918
    %v2985 = vrot.slane %v2926, 6
    %v2986 = vsel %vm2952, %v2985, %v2984
    %v2987 = vrot.slane %v2930, 5
    %v2988 = vsel %vm2955, %v2987, %v2986
    %v2989 = vrot.slane %v2934, 4
    %v2990 = vsel %vm2958, %v2989, %v2988
    %v2991 = vrot.slane %v2938, 3
    %v2992 = vsel %vm2961, %v2991, %v2990
    %v2993 = vrot.slane %v2942, 2
    %v2994 = vsel %vm2964, %v2993, %v2992
    %v2995 = vrot.slane %v2946, 1
    %v2996 = vsel %vm2967, %v2995, %v2994
    %v2997 = vrot.slane %v2923, 7
    %v2998 = vsel %vm2949, %v2997, %v2919
    %v2999 = vrot.slane %v2927, 6
    %v3000 = vsel %vm2952, %v2999, %v2998
    %v3001 = vrot.slane %v2931, 5
    %v3002 = vsel %vm2955, %v3001, %v3000
    %v3003 = vrot.slane %v2935, 4
    %v3004 = vsel %vm2958, %v3003, %v3002
    %v3005 = vrot.slane %v2939, 3
    %v3006 = vsel %vm2961, %v3005, %v3004
    %v3007 = vrot.slane %v2943, 2
    %v3008 = vsel %vm2964, %v3007, %v3006
    %v3009 = vrot.slane %v2947, 1
    %v3010 = vsel %vm2967, %v3009, %v3008
    %v3011 = vpack.c.b16 %v2968, %v2968
    %v3012 = vpack.c.b16 %v2982, %v2982
    %v3013 = vpack.c.b16 %v2996, %v2996
    %v3014 = vpack.c.b16 %v3010, %v3010
    %v3083 = vunpack.c.l.b16 %v2813
    %v3084 = vunpack.c.l.b16 %v2814
    %v3085 = vunpack.c.l.b16 %v2815
    %v3086 = vunpack.c.l.b16 %v2816
    %v3087 = vunpack.c.l.b16 %v2817
    %v3088 = vunpack.c.l.b16 %v2818
    %v3089 = vunpack.c.l.b16 %v2819
    %v3090 = vunpack.c.l.b16 %v2820
    %v3091 = vunpack.c.l.b16 %v2821
    %v3092 = vunpack.c.l.b16 %v2822
    %v3093 = vunpack.c.l.b16 %v2823
    %v3094 = vunpack.c.l.b16 %v2824
    %v3095 = vunpack.c.l.b16 %v2825
    %v3096 = vunpack.c.l.b16 %v2826
    %v3097 = vunpack.c.l.b16 %v2827
    %v3098 = vunpack.c.l.b16 %v2828
    %v3099 = vunpack.c.l.b16 %v2829
    %v3100 = vunpack.c.l.b16 %v2830
    %v3101 = vunpack.c.l.b16 %v2831
    %v3102 = vunpack.c.l.b16 %v2832
    %v3103 = vunpack.c.l.b16 %v2833
    %v3104 = vunpack.c.l.b16 %v2834
    %v3105 = vunpack.c.l.b16 %v2835
    %v3106 = vunpack.c.l.b16 %v2836
    %v3107 = vunpack.c.l.b16 %v2837
    %v3108 = vunpack.c.l.b16 %v2838
    %v3109 = vunpack.c.l.b16 %v2839
    %v3110 = vunpack.c.l.b16 %v2840
    %v3111 = vunpack.c.l.b16 %v2841
    %v3112 = vunpack.c.l.b16 %v2842
    %v3113 = vunpack.c.l.b16 %v2843
    %v3114 = vunpack.c.l.b16 %v2844
    %v3115 = vunpack.c.l.b16 %v2845
    %v3116 = vunpack.c.l.b16 %v2846
    %v3117 = vunpack.c.l.b16 %v2847
    %v3118 = vunpack.c.l.b16 %v2848
    %v3119 = vunpack.c.l.b16 %v2849
    %v3120 = vunpack.c.l.b16 %v2850
    %v3121 = vunpack.c.l.b16 %v2851
    %v3122 = vunpack.c.l.b16 %v2852
    %v3123 = vunpack.c.l.b16 %v2853
    %v3124 = vunpack.c.l.b16 %v2854
    %v3125 = vunpack.c.l.b16 %v2855
    %v3126 = vunpack.c.l.b16 %v2856
    %v3127 = vunpack.c.l.b16 %v2857
    %v3128 = vunpack.c.l.b16 %v2858
    %v3129 = vunpack.c.l.b16 %v2859
    %v3130 = vunpack.c.l.b16 %v2860
    %v3131 = vunpack.c.l.b16 %v2861
    %v3132 = vunpack.c.l.b16 %v2862
    %v3133 = vunpack.c.l.b16 %v2863
    %v3134 = vunpack.c.l.b16 %v2864
    %v3135 = vunpack.c.l.b16 %v2865
    %v3136 = vunpack.c.l.b16 %v2866
    %v3137 = vunpack.c.l.b16 %v2867
    %v3138 = vunpack.c.l.b16 %v2868
    %v3139 = vunpack.c.l.b16 %v2869
    %v3140 = vunpack.c.l.b16 %v2870
    %v3141 = vunpack.c.l.b16 %v2871
    %v3142 = vunpack.c.l.b16 %v2872
    %v3143 = vunpack.c.l.b16 %v2873
    %v3144 = vunpack.c.l.b16 %v2874
    %v3145 = vunpack.c.l.b16 %v2875
    %v3146 = vunpack.c.l.b16 %v2876
    %v3147 = vpack.c.b16 %v3084, %v3083
    %v3148 = vpack.c.b16 %v3086, %v3085
    %v3149 = vpack.c.b16 %v3088, %v3087
    %v3150 = vpack.c.b16 %v3090, %v3089
    %v3151 = vpack.c.b16 %v3092, %v3091
    %v3152 = vpack.c.b16 %v3094, %v3093
    %v3153 = vpack.c.b16 %v3096, %v3095
    %v3154 = vpack.c.b16 %v3098, %v3097
    %v3155 = vpack.c.b16 %v3100, %v3099
    %v3156 = vpack.c.b16 %v3102, %v3101
    %v3157 = vpack.c.b16 %v3104, %v3103
    %v3158 = vpack.c.b16 %v3106, %v3105
    %v3159 = vpack.c.b16 %v3108, %v3107
    %v3160 = vpack.c.b16 %v3110, %v3109
    %v3161 = vpack.c.b16 %v3112, %v3111
    %v3162 = vpack.c.b16 %v3114, %v3113
    %v3163 = vpack.c.b16 %v3116, %v3115
    %v3164 = vpack.c.b16 %v3118, %v3117
    %v3165 = vpack.c.b16 %v3120, %v3119
    %v3166 = vpack.c.b16 %v3122, %v3121
    %v3167 = vpack.c.b16 %v3124, %v3123
    %v3168 = vpack.c.b16 %v3126, %v3125
    %v3169 = vpack.c.b16 %v3128, %v3127
    %v3170 = vpack.c.b16 %v3130, %v3129
    %v3171 = vpack.c.b16 %v3132, %v3131
    %v3172 = vpack.c.b16 %v3134, %v3133
    %v3173 = vpack.c.b16 %v3136, %v3135
    %v3174 = vpack.c.b16 %v3138, %v3137
    %v3175 = vpack.c.b16 %v3140, %v3139
    %v3176 = vpack.c.b16 %v3142, %v3141
    %v3177 = vpack.c.b16 %v3144, %v3143
    %v3178 = vpack.c.b16 %v3146, %v3145
    %3211 = vmatprep.subr.bf16.mxu0 0
    %3212 = vmatpush1.bf16.msra.mxu0 %v3147
    %3213 = vmatprep.subr.bf16.mxu0 0
    %3214 = vmatpush1.bf16.msra.mxu0 %v3148
    %3215 = vmatprep.subr.bf16.mxu0 0
    %3216 = vmatpush1.bf16.msra.mxu0 %v3149
    %3217 = vmatprep.subr.bf16.mxu0 0
    %3218 = vmatpush1.bf16.msra.mxu0 %v3150
    %3219 = vmatprep.subr.bf16.mxu0 0
    %3220 = vmatpush1.bf16.msra.mxu0 %v3151
    %3221 = vmatprep.subr.bf16.mxu0 0
    %3222 = vmatpush1.bf16.msra.mxu0 %v3152
    %3223 = vmatprep.subr.bf16.mxu0 0
    %3224 = vmatpush1.bf16.msra.mxu0 %v3153
    %3225 = vmatprep.subr.bf16.mxu0 0
    %3226 = vmatpush1.bf16.msra.mxu0 %v3154
    %3227 = vmatprep.subr.bf16.mxu0 0
    %3228 = vmatpush1.bf16.msra.mxu0 %v3155
    %3229 = vmatprep.subr.bf16.mxu0 0
    %3230 = vmatpush1.bf16.msra.mxu0 %v3156
    %3231 = vmatprep.subr.bf16.mxu0 0
    %3232 = vmatpush1.bf16.msra.mxu0 %v3157
    %3233 = vmatprep.subr.bf16.mxu0 0
    %3234 = vmatpush1.bf16.msra.mxu0 %v3158
    %3235 = vmatprep.subr.bf16.mxu0 0
    %3236 = vmatpush1.bf16.msra.mxu0 %v3159
    %3237 = vmatprep.subr.bf16.mxu0 0
    %3238 = vmatpush1.bf16.msra.mxu0 %v3160
    %3239 = vmatprep.subr.bf16.mxu0 0
    %3240 = vmatpush1.bf16.msra.mxu0 %v3161
    %3241 = vmatprep.subr.bf16.mxu0 0
    %3242 = vmatpush1.bf16.msra.mxu0 %v3162
    %3243 = vmatprep.mubr.bf16.mxu0 %v3012
    %3244 = vmatmul.mubr.bf16.gmra.mrb[0].mxu0 %v3011
    %v3245 = vpop.f32.mrb[0].mxu0
    %v3246 = vadd.f32 %v2882, %v3245
    %v3247 = vpop.f32.mrb[0].mxu0
    %v3248 = vpop.f32.mrb[0].mxu0
    %v3249 = vpop.f32.mrb[0].mxu0
    %3250 = vdwg.mxu0
    %3251 = vmatprep.subr.bf16.mxu0 0
    %3252 = vmatpush1.bf16.msra.mxu0 %v3163
    %3253 = vmatprep.subr.bf16.mxu0 0
    %3254 = vmatpush1.bf16.msra.mxu0 %v3164
    %3255 = vmatprep.subr.bf16.mxu0 0
    %3256 = vmatpush1.bf16.msra.mxu0 %v3165
    %3257 = vmatprep.subr.bf16.mxu0 0
    %3258 = vmatpush1.bf16.msra.mxu0 %v3166
    %3259 = vmatprep.subr.bf16.mxu0 0
    %3260 = vmatpush1.bf16.msra.mxu0 %v3167
    %3261 = vmatprep.subr.bf16.mxu0 0
    %3262 = vmatpush1.bf16.msra.mxu0 %v3168
    %3263 = vmatprep.subr.bf16.mxu0 0
    %3264 = vmatpush1.bf16.msra.mxu0 %v3169
    %3265 = vmatprep.subr.bf16.mxu0 0
    %3266 = vmatpush1.bf16.msra.mxu0 %v3170
    %3267 = vmatprep.subr.bf16.mxu0 0
    %3268 = vmatpush1.bf16.msra.mxu0 %v3171
    %3269 = vmatprep.subr.bf16.mxu0 0
    %3270 = vmatpush1.bf16.msra.mxu0 %v3172
    %3271 = vmatprep.subr.bf16.mxu0 0
    %3272 = vmatpush1.bf16.msra.mxu0 %v3173
    %3273 = vmatprep.subr.bf16.mxu0 0
    %3274 = vmatpush1.bf16.msra.mxu0 %v3174
    %3275 = vmatprep.subr.bf16.mxu0 0
    %3276 = vmatpush1.bf16.msra.mxu0 %v3175
    %3277 = vmatprep.subr.bf16.mxu0 0
    %3278 = vmatpush1.bf16.msra.mxu0 %v3176
    %3279 = vmatprep.subr.bf16.mxu0 0
    %3280 = vmatpush1.bf16.msra.mxu0 %v3177
    %3281 = vmatprep.subr.bf16.mxu0 0
    %3282 = vmatpush1.bf16.msra.mxu0 %v3178
    %3283 = vmatprep.mubr.bf16.mxu0 %v3014
    %3284 = vmatmul.mubr.bf16.gmra.mrb[0].mxu0 %v3013
    %v3285 = vpop.f32.mrb[0].mxu0
    %v3286 = vadd.f32 %v3246, %v3285
    %v3287 = vpop.f32.mrb[0].mxu0
    %v3288 = vpop.f32.mrb[0].mxu0
    %v3289 = vpop.f32.mrb[0].mxu0
    %3290 = vdwg.mxu0
    %v3291 = vmax.f32 %v3286, 0.0
    %v3292 = vld [vmem:[#allocation5] sm:$0xff]
    %v3293 = vld [vmem:[#allocation5 + $0x8] sm:$0xff]
    %v3294 = vld [vmem:[#allocation5 + $0x10] sm:$0xff]
    %v3295 = vld [vmem:[#allocation5 + $0x18] sm:$0xff]
    %v3296 = vld [vmem:[#allocation5 + $0x20] sm:$0xff]
    %v3297 = vld [vmem:[#allocation5 + $0x28] sm:$0xff]
    %v3298 = vld [vmem:[#allocation5 + $0x30] sm:$0xff]
    %v3299 = vld [vmem:[#allocation5 + $0x38] sm:$0xff]
    %v3300 = vld [vmem:[#allocation5 + $0x40] sm:$0xff]
    %v3301 = vld [vmem:[#allocation5 + $0x48] sm:$0xff]
    %v3302 = vld [vmem:[#allocation5 + $0x50] sm:$0xff]
    %v3303 = vld [vmem:[#allocation5 + $0x58] sm:$0xff]
    %v3304 = vld [vmem:[#allocation5 + $0x60] sm:$0xff]
    %v3305 = vld [vmem:[#allocation5 + $0x68] sm:$0xff]
    %v3306 = vld [vmem:[#allocation5 + $0x70] sm:$0xff]
    %v3307 = vld [vmem:[#allocation5 + $0x78] sm:$0xff]
    %v3308 = vld [vmem:[%s7] sm:$0x1]
    %v3310 = vlaneseq
    %v3311 = vshrl.u32 %v3310, 7
    %v3312 = vsub.s32 0, %v3311
    %v3313 = vrot.slane %v3308, %v3312
    %3315 = vmatprep.subr.mxu0 0.0
    %3316 = vmatpush1.msra.mxu0 %v3292
    %3317 = vmatprep.subr.mxu0 0.0
    %3318 = vmatpush1.msra.mxu0 %v3293
    %3319 = vmatprep.subr.mxu0 0.0
    %3320 = vmatpush1.msra.mxu0 %v3294
    %3321 = vmatprep.subr.mxu0 0.0
    %3322 = vmatpush1.msra.mxu0 %v3295
    %3323 = vmatprep.subr.mxu0 0.0
    %3324 = vmatpush1.msra.mxu0 %v3296
    %3325 = vmatprep.subr.mxu0 0.0
    %3326 = vmatpush1.msra.mxu0 %v3297
    %3327 = vmatprep.subr.mxu0 0.0
    %3328 = vmatpush1.msra.mxu0 %v3298
    %3329 = vmatprep.subr.mxu0 0.0
    %3330 = vmatpush1.msra.mxu0 %v3299
    %3331 = vmatprep.subr.mxu0 0.0
    %3332 = vmatpush1.msra.mxu0 %v3300
    %3333 = vmatprep.subr.mxu0 0.0
    %3334 = vmatpush1.msra.mxu0 %v3301
    %3335 = vmatprep.subr.mxu0 0.0
    %3336 = vmatpush1.msra.mxu0 %v3302
    %3337 = vmatprep.subr.mxu0 0.0
    %3338 = vmatpush1.msra.mxu0 %v3303
    %3339 = vmatprep.subr.mxu0 0.0
    %3340 = vmatpush1.msra.mxu0 %v3304
    %3341 = vmatprep.subr.mxu0 0.0
    %3342 = vmatpush1.msra.mxu0 %v3305
    %3343 = vmatprep.subr.mxu0 0.0
    %3344 = vmatpush1.msra.mxu0 %v3306
    %3345 = vmatprep.subr.mxu0 0.0
    %3346 = vmatpush1.msra.mxu0 %v3307
    %3347 = vmatprep.subr.mxu0 0.0
    %3348 = vmatpush1.msra.mxu0 0.0
    %3349 = vmatprep.subr.mxu0 0.0
    %3350 = vmatpush1.msra.mxu0 0.0
    %3351 = vmatprep.subr.mxu0 0.0
    %3352 = vmatpush1.msra.mxu0 0.0
    %3353 = vmatprep.subr.mxu0 0.0
    %3354 = vmatpush1.msra.mxu0 0.0
    %3355 = vmatprep.subr.mxu0 0.0
    %3356 = vmatpush1.msra.mxu0 0.0
    %3357 = vmatprep.subr.mxu0 0.0
    %3358 = vmatpush1.msra.mxu0 0.0
    %3359 = vmatprep.subr.mxu0 0.0
    %3360 = vmatpush1.msra.mxu0 0.0
    %3361 = vmatprep.subr.mxu0 0.0
    %3362 = vmatpush1.msra.mxu0 0.0
    %3363 = vmatprep.subr.mxu0 0.0
    %3364 = vmatpush1.msra.mxu0 0.0
    %3365 = vmatprep.subr.mxu0 0.0
    %3366 = vmatpush1.msra.mxu0 0.0
    %3367 = vmatprep.subr.mxu0 0.0
    %3368 = vmatpush1.msra.mxu0 0.0
    %3369 = vmatprep.subr.mxu0 0.0
    %3370 = vmatpush1.msra.mxu0 0.0
    %3371 = vmatprep.subr.mxu0 0.0
    %3372 = vmatpush1.msra.mxu0 0.0
    %3373 = vmatprep.subr.mxu0 0.0
    %3374 = vmatpush1.msra.mxu0 0.0
    %3375 = vmatprep.subr.mxu0 0.0
    %3376 = vmatpush1.msra.mxu0 0.0
    %3377 = vmatprep.subr.mxu0 0.0
    %3378 = vmatpush1.msra.mxu0 0.0
    %3379 = vmatprep.mubr.f32.mxu0 0.0
    %3380 = vmatmul.mubr.f32.gmra.mrb[0].mxu0 %v3291
    %v3381 = vpop.f32.mrb[0].mxu0
    %v3382 = vadd.f32 %v3313, %v3381
    %v3383 = vpop.f32.mrb[0].mxu0
    %3384 = vdwg.mxu0
    %3385 = vst [vmem:[#allocation7] sm:$0xff] %v3382
    // Predicated region
    $region42: #{tpu_custom_call.1} parent=1 // pred_check
      _
    $region43: #{tpu_custom_call.1} parent=1 // pred_check_branch
      %3387 = sbr.rel (0) target = $region45
    $region44: #{tpu_custom_call.1} parent=1 // pred_region
      %s3389 = ssub.s32 128, 128
      %3390 = vsyncadd [#allocation4], %s3389
      %s3392 = sshll.u32 [#allocation7], 4
      %s3393 = int_to_ptr.vmem [resolvable:$true] %s3392
      %3395 = dma.vmem_to_hbm [thread:$0]  %s3393, 128, %s8, [#allocation4]
    $region45: #{tpu_custom_call.1} parent=1 // pred_fallthru
      _
    // Predicated region
    $region46: #{tpu_custom_call.1} parent=1 // pred_check
      _
    $region47: #{tpu_custom_call.1} parent=1 // pred_check_branch
      %3397 = sbr.rel (0) target = $region49
    $region48: #{tpu_custom_call.1} parent=1 // pred_region
      %3398 = dma.done [#allocation4], 128
    $region49: #{tpu_custom_call.1} parent=1 // pred_fallthru
      _
    %3399 = vsyncpa [#allocation3], 1
    %3400 = vsyncpa [#allocation6], 1
    %3401 = vsyncpa [#allocation4], 1

</llo_original>
